<compile_context>
chip_gen: v6e
topology: v6e:2x2x1
jax: 0.10.0
libtpu: 0.0.40
codegen_flags: <defaults>
</compile_context>

<pallas_src>
import functools

import jax
import jax.numpy as jnp
from jax.experimental import pallas as pl
from jax.experimental.pallas import tpu as pltpu

EPS = 1e-5  # PyTorch default eps for LayerNorm / BatchNorm1d

# Synthetic shapes consistent with the module interface:
IN_C, IMG = 4, 16
CONV_C = 8
KH = KW = 3
OH1 = OW1 = (IMG - KH) // 2 + 1          # 7   (3x3, stride 2)
OH2 = OW2 = OH1 - KH + 1                 # 5   (3x3, stride 1)
FLAT_DIM = OH2 * OW2 * CONV_C            # 200 (NHWC flatten order)
LINEAR_OUT_DIM = 32                      # encoder.linear_out_dim
PROJ_HID = 256
FEATURE_DIM = 128                        # CURL.feature_dim after projection head

HQ = WQ = IMG // 2                       # 8: spatial size of each stride-2 parity quadrant
SUBLANE = 8

# Sanity: the extended (quadrant-aligned) conv1 output must cover the real one.
assert OH1 <= HQ and OW1 <= WQ and OW2 + KW - 1 <= WQ


def _vmem():
    # Tiny arrays: bring full tensors into VMEM, no grid / tiling needed.
    return pl.BlockSpec(memory_space=pltpu.MemorySpace.VMEM)


def _round_up(n, m):
    return ((n + m - 1) // m) * m


# ---------------------------------------------------------------------------
# Fused forward kernel:
#   conv1 (in-kernel im2col) -> conv2 -> flatten/Linear -> LayerNorm -> tanh
#   (-> projection head g: Linear -> BatchNorm1d -> ReLU -> Linear)
# ---------------------------------------------------------------------------
def _curl_forward_kernel(projection, batch, batch_pad,
                         xq_ref, w1_ref, b1_ref, w2_ref, b2_ref,
                         wl_ref, bl_ref, lng_ref, lnb_ref, *rest):
    if projection:
        g1w_ref, g1b_ref, bng_ref, bnb_ref, g2w_ref, g2b_ref, o_ref = rest
    else:
        (o_ref,) = rest
    B, Bp = batch, batch_pad

    # "Extended" spatial grids: conv1 output rows ordered (y1, xq, b) with xq in
    # [0, WQ); columns xq >= OW1 (and y1 >= OH1) are garbage but are never read
    # by the valid conv2 / flatten positions.  Likewise for conv2 (xq >= OW2).
    h1_rows = HQ * WQ * Bp               # 512 when Bp = 8
    h2_rows = OH2 * WQ * Bp              # 320 when Bp = 8

    # ---- conv1 (3x3, stride 2) + ReLU --------------------------------------
    # im2col assembled in-kernel from the 4 parity quadrants; single matmul.
    quads = [xq_ref[k] for k in range(4)]                 # each [qrows, IN_C], f32
    taps = []
    for i in range(KH):
        for j in range(KW):
            q = quads[(i % 2) * 2 + (j % 2)]
            start = ((i // 2) * WQ + (j // 2)) * Bp       # multiple of 8: aligned slice
            taps.append(q[start:start + h1_rows, :])
    p1 = jnp.concatenate(taps, axis=1).astype(jnp.bfloat16)      # [h1_rows, 9*IN_C]
    h1 = jnp.dot(p1, w1_ref[...], preferred_element_type=jnp.float32)
    h1 = jnp.maximum(h1 + b1_ref[...], 0.0)                      # [h1_rows, CONV_C] f32

    # ---- conv2 (3x3, stride 1) + ReLU --------------------------------------
    # im2col from the VMEM-resident h1; single matmul.
    taps = []
    for i in range(KH):
        for j in range(KW):
            start = (i * WQ + j) * Bp                     # multiple of 8
            taps.append(h1[start:start + h2_rows, :])
    p2 = jnp.concatenate(taps, axis=1).astype(jnp.bfloat16)      # [h2_rows, 9*CONV_C]
    h2 = jnp.dot(p2, w2_ref[...], preferred_element_type=jnp.float32)
    h2 = jnp.maximum(h2 + b2_ref[...], 0.0)                      # [h2_rows, CONV_C] f32

    # ---- flatten (NHWC order) + encoder Linear: one [Bp, 200] @ [200, 32] ---
    blocks = []
    for y2 in range(OH2):
        for x2 in range(OW2):
            s = (y2 * WQ + x2) * Bp                       # multiple of 8
            blocks.append(h2[s:s + Bp, :])                # [Bp, CONV_C]
    flat = jnp.concatenate(blocks, axis=1).astype(jnp.bfloat16)  # [Bp, FLAT_DIM]
    z = jnp.dot(flat, wl_ref[...], preferred_element_type=jnp.float32) + bl_ref[...]

    # ---- LayerNorm (over features) + tanh, f32 on VPU/EUP -------------------
    mu = jnp.mean(z, axis=-1, keepdims=True)
    var = jnp.mean((z - mu) ** 2, axis=-1, keepdims=True)
    z = (z - mu) * jax.lax.rsqrt(var + EPS)
    z = jnp.tanh(z * lng_ref[...] + lnb_ref[...])                # [Bp, LINEAR_OUT_DIM]

    if projection:
        # ---- projection head g ----------------------------------------------
        h = jnp.dot(z.astype(jnp.bfloat16), g1w_ref[...],
                    preferred_element_type=jnp.float32) + g1b_ref[...]   # [Bp, PROJ_HID]
        # BatchNorm1d, training mode: biased variance over the REAL batch rows
        # only; padded rows (b >= B) are excluded from the statistics.
        row = jax.lax.broadcasted_iota(jnp.int32, (Bp, 1), 0)
        bmask = (row < B).astype(jnp.float32)
        inv_b = 1.0 / float(B)
        mu_b = jnp.sum(h * bmask, axis=0, keepdims=True) * inv_b
        var_b = jnp.sum(jnp.square((h - mu_b) * bmask), axis=0, keepdims=True) * inv_b
        h = (h - mu_b) * jax.lax.rsqrt(var_b + EPS)
        h = jnp.maximum(h * bng_ref[...] + bnb_ref[...], 0.0)
        o_ref[...] = jnp.dot(h.astype(jnp.bfloat16), g2w_ref[...],
                             preferred_element_type=jnp.float32) + g2b_ref[...]
    else:
        # Lane-dense output: pad 32 -> 128 lanes; wrapper slices back.
        pad = jnp.zeros((Bp, FEATURE_DIM - LINEAR_OUT_DIM), jnp.float32)
        o_ref[...] = jnp.concatenate([z, pad], axis=1)


def _prep_quadrants(x_nchw, batch_pad):
    """NCHW -> NHWC, pad batch to `batch_pad`, split into the 4 stride-2 parity
    quadrants, each laid out as rows (yq, xq, b) x lanes (c_in).  The kernel
    re-assembles conv1's im2col patches from these with aligned static slices,
    so the 9x im2col expansion never touches HBM."""
    B = x_nchw.shape[0]
    x = jnp.transpose(x_nchw, (0, 2, 3, 1)).astype(jnp.float32)      # [B, H, W, C]
    if batch_pad != B:
        x = jnp.pad(x, ((0, batch_pad - B), (0, 0), (0, 0), (0, 0)))
    # Tap slices reach up to row (WQ + 1 + HQ*WQ) * Bp; pad with two extra y-rows.
    qrows = (HQ + 2) * WQ * batch_pad
    quads = []
    for pi in range(2):
        for pj in range(2):
            q = x[:, pi::2, pj::2, :]                                # [Bp, HQ, WQ, C]
            q = jnp.transpose(q, (1, 2, 0, 3)).reshape(HQ * WQ * batch_pad, IN_C)
            q = jnp.pad(q, ((0, qrows - HQ * WQ * batch_pad), (0, 0)))
            quads.append(q)
    return jnp.stack(quads, axis=0)                                  # [4, qrows, C]


@functools.partial(jax.jit, static_argnames=("projection",))
def curl_forward(params, x_nchw, projection=True):
    B = x_nchw.shape[0]
    Bp = _round_up(B, SUBLANE)       # sublane-aligned batch -> all in-kernel slices aligned
    xq = _prep_quadrants(x_nchw, Bp)
    bf = jnp.bfloat16
    # Matmul weights pre-cast to bf16 at the boundary (halves their DMA bytes);
    # biases / norm parameters stay f32.
    args = [
        xq,
        params["conv1_w"].astype(bf), params["conv1_b"].reshape(1, -1),
        params["conv2_w"].astype(bf), params["conv2_b"].reshape(1, -1),
        params["enc_lin_w"].astype(bf), params["enc_lin_b"].reshape(1, -1),
        params["enc_ln_g"].reshape(1, -1), params["enc_ln_b"].reshape(1, -1),
    ]
    if projection:
        args += [
            params["g1_w"].astype(bf), params["g1_b"].reshape(1, -1),
            params["bn_g"].reshape(1, -1), params["bn_b"].reshape(1, -1),
            params["g2_w"].astype(bf), params["g2_b"].reshape(1, -1),
        ]

    # Cost estimate from the actual shapes.
    h1_rows, h2_rows = HQ * WQ * Bp, OH2 * WQ * Bp
    flops = 2 * (h1_rows * KH * KW * IN_C * CONV_C
                 + h2_rows * KH * KW * CONV_C * CONV_C
                 + Bp * FLAT_DIM * LINEAR_OUT_DIM)
    trans = Bp * (LINEAR_OUT_DIM + 1)
    if projection:
        flops += 2 * Bp * (LINEAR_OUT_DIM * PROJ_HID + PROJ_HID * FEATURE_DIM)
        trans += PROJ_HID
    nbytes = int(sum(a.size * a.dtype.itemsize for a in args)) + Bp * FEATURE_DIM * 4

    out = pl.pallas_call(
        functools.partial(_curl_forward_kernel, projection, B, Bp),
        out_shape=jax.ShapeDtypeStruct((Bp, FEATURE_DIM), jnp.float32),
        in_specs=[_vmem()] * len(args),
        out_specs=_vmem(),
        cost_estimate=pl.CostEstimate(flops=int(flops), transcendentals=int(trans),
                                      bytes_accessed=int(nbytes)),
    )(*args)
    if projection:
        return out[:B]
    return out[:B, :LINEAR_OUT_DIM]


# ---------------------------------------------------------------------------
# Logits kernels
# ---------------------------------------------------------------------------
def _bilinear_logits_kernel(inv_temp, za_ref, zpos_ref, w_ref, o_ref):
    # (z_a @ W) first: lane-dense [B, F] matmul; then contract against z_pos
    # over the feature axis via dot_general -- no in-kernel transpose.
    za = za_ref[...].astype(jnp.bfloat16)
    zpos = zpos_ref[...].astype(jnp.bfloat16)
    zaw = jnp.dot(za, w_ref[...], preferred_element_type=jnp.float32)   # [B, F]
    logits = jax.lax.dot_general(
        zaw.astype(jnp.bfloat16), zpos,
        dimension_numbers=(((1,), (1,)), ((), ())),
        preferred_element_type=jnp.float32)                             # [B, B]
    logits = logits - jnp.max(logits, axis=1, keepdims=True)
    o_ref[...] = logits * inv_temp


def compute_logits_bilinear(W, z_a, z_pos, inv_temp=1.0):
    B = z_a.shape[0]
    return pl.pallas_call(
        functools.partial(_bilinear_logits_kernel, float(inv_temp)),
        out_shape=jax.ShapeDtypeStruct((B, B), jnp.float32),
        in_specs=[_vmem()] * 3,
        out_specs=_vmem(),
    )(z_a, z_pos, W.astype(jnp.bfloat16))


def _plain_logits_kernel(za_ref, zpos_ref, o_ref):
    o_ref[...] = jax.lax.dot_general(
        za_ref[...].astype(jnp.bfloat16), zpos_ref[...].astype(jnp.bfloat16),
        dimension_numbers=(((1,), (1,)), ((), ())),
        preferred_element_type=jnp.float32)


def compute_logits(z_a, z_pos):
    B = z_a.shape[0]
    return pl.pallas_call(
        _plain_logits_kernel,
        out_shape=jax.ShapeDtypeStruct((B, B), jnp.float32),
        in_specs=[_vmem()] * 2,
        out_specs=_vmem(),
    )(z_a, z_pos)


@functools.partial(jax.jit, static_argnames=("temperature",))
def curl_loss(params, anc, pos, temperature=0.07):
    # (logits - rowmax) / T, with the 1/T scale folded into the single kernel.
    logits = compute_logits_bilinear(params["W"], anc, pos, inv_temp=1.0 / temperature)
    labels = jnp.arange(logits.shape[0], dtype=jnp.int32)
    return logits, labels


# ---------------------------------------------------------------------------
# Parameter init
# ---------------------------------------------------------------------------
def init_params(key):
    ks = jax.random.split(key, 8)
    return {
        # conv weights stored already in im2col layout [kh*kw*Cin, Cout], rows (tap, c_in)
        "conv1_w": 0.1 * jax.random.normal(ks[0], (KH * KW * IN_C, CONV_C), jnp.float32),
        "conv1_b": jnp.zeros((CONV_C,), jnp.float32),
        "conv2_w": 0.1 * jax.random.normal(ks[1], (KH * KW * CONV_C, CONV_C), jnp.float32),
        "conv2_b": jnp.zeros((CONV_C,), jnp.float32),
        # encoder linear weight rows ordered (y2, x2, c)  == NHWC flatten
        "enc_lin_w": 0.1 * jax.random.normal(ks[2], (FLAT_DIM, LINEAR_OUT_DIM), jnp.float32),
        "enc_lin_b": jnp.zeros((LINEAR_OUT_DIM,), jnp.float32),
        "enc_ln_g": jnp.ones((LINEAR_OUT_DIM,), jnp.float32),
        "enc_ln_b": jnp.zeros((LINEAR_OUT_DIM,), jnp.float32),
        # projection head g
        "g1_w": 0.1 * jax.random.normal(ks[3], (LINEAR_OUT_DIM, PROJ_HID), jnp.float32),
        "g1_b": jnp.zeros((PROJ_HID,), jnp.float32),
        "bn_g": jnp.ones((PROJ_HID,), jnp.float32),
        "bn_b": jnp.zeros((PROJ_HID,), jnp.float32),
        "g2_w": 0.1 * jax.random.normal(ks[4], (PROJ_HID, FEATURE_DIM), jnp.float32),
        "g2_b": jnp.zeros((FEATURE_DIM,), jnp.float32),
        # bilinear W = torch.rand(feature_dim, feature_dim)
        "W": jax.random.uniform(ks[5], (FEATURE_DIM, FEATURE_DIM), jnp.float32),
    }


if __name__ == "__main__":
    key = jax.random.PRNGKey(0)
    pkey, xkey, akey = jax.random.split(key, 3)
    params = init_params(pkey)

    # Small deterministic inputs, NCHW like PyTorch: [B=2, C=4, H=16, W=16]
    x_anchor = jax.random.normal(xkey, (2, IN_C, IMG, IMG), jnp.float32)
    x_pos = jax.random.normal(akey, (2, IN_C, IMG, IMG), jnp.float32)

    z_anchor = jax.block_until_ready(curl_forward(params, x_anchor, projection=True))
    z_pos = jax.block_until_ready(curl_forward(params, x_pos, projection=True))
    assert z_anchor.shape == (2, FEATURE_DIM)
    assert z_pos.shape == (2, FEATURE_DIM)
    assert bool(jnp.all(jnp.isfinite(z_anchor)))

    z_no_proj = jax.block_until_ready(curl_forward(params, x_anchor, projection=False))
    assert z_no_proj.shape == (2, LINEAR_OUT_DIM)
    assert bool(jnp.all(jnp.isfinite(z_no_proj)))

    logits, labels = curl_loss(params, z_anchor, z_pos)
    logits = jax.block_until_ready(logits)
    assert logits.shape == (2, 2) and labels.shape == (2,)
    assert bool(jnp.all(jnp.isfinite(logits)))

    plain = jax.block_until_ready(compute_logits(z_anchor, z_pos))
    assert plain.shape == (2, 2)
    assert bool(jnp.all(jnp.isfinite(plain)))

    print("KERNEL_OK")
</pallas_src>

<mosaic_0001>
module attributes {stable_mosaic.version = 11 : i64} {
  func.func @_curl_forward_kernel(%arg0: memref<4x640x4xf32, #tpu.memory_space<vmem>>, %arg1: memref<36x8xbf16, #tpu.memory_space<vmem>>, %arg2: memref<1x8xf32, #tpu.memory_space<vmem>>, %arg3: memref<72x8xbf16, #tpu.memory_space<vmem>>, %arg4: memref<1x8xf32, #tpu.memory_space<vmem>>, %arg5: memref<200x32xbf16, #tpu.memory_space<vmem>>, %arg6: memref<1x32xf32, #tpu.memory_space<vmem>>, %arg7: memref<1x32xf32, #tpu.memory_space<vmem>>, %arg8: memref<1x32xf32, #tpu.memory_space<vmem>>, %arg9: memref<32x256xbf16, #tpu.memory_space<vmem>>, %arg10: memref<1x256xf32, #tpu.memory_space<vmem>>, %arg11: memref<1x256xf32, #tpu.memory_space<vmem>>, %arg12: memref<1x256xf32, #tpu.memory_space<vmem>>, %arg13: memref<256x128xbf16, #tpu.memory_space<vmem>>, %arg14: memref<1x128xf32, #tpu.memory_space<vmem>>, %arg15: memref<8x128xf32, #tpu.memory_space<vmem>>) attributes {dimension_semantics = [], scalar_prefetch = 0 : i64, scratch_operands = 0 : i64, tpu.core_type = #tpu.core_type<tc>} {
    %c0 = arith.constant 0 : index
    %c0_0 = arith.constant 0 : index
    %c0_1 = arith.constant 0 : index
    %0 = vector.load %arg0[%c0, %c0_0, %c0_1] : memref<4x640x4xf32, #tpu.memory_space<vmem>>, vector<1x640x4xf32>
    %1 = vector.shape_cast %0 : vector<1x640x4xf32> to vector<640x4xf32>
    %c1 = arith.constant 1 : index
    %c0_2 = arith.constant 0 : index
    %c0_3 = arith.constant 0 : index
    %2 = vector.load %arg0[%c1, %c0_2, %c0_3] : memref<4x640x4xf32, #tpu.memory_space<vmem>>, vector<1x640x4xf32>
    %3 = vector.shape_cast %2 : vector<1x640x4xf32> to vector<640x4xf32>
    %c2 = arith.constant 2 : index
    %c0_4 = arith.constant 0 : index
    %c0_5 = arith.constant 0 : index
    %4 = vector.load %arg0[%c2, %c0_4, %c0_5] : memref<4x640x4xf32, #tpu.memory_space<vmem>>, vector<1x640x4xf32>
    %5 = vector.shape_cast %4 : vector<1x640x4xf32> to vector<640x4xf32>
    %c3 = arith.constant 3 : index
    %c0_6 = arith.constant 0 : index
    %c0_7 = arith.constant 0 : index
    %6 = vector.load %arg0[%c3, %c0_6, %c0_7] : memref<4x640x4xf32, #tpu.memory_space<vmem>>, vector<1x640x4xf32>
    %7 = vector.shape_cast %6 : vector<1x640x4xf32> to vector<640x4xf32>
    %8 = vector.extract_strided_slice %1 {offsets = [0, 0], sizes = [512, 4], strides = [1, 1]} : vector<640x4xf32> to vector<512x4xf32>
    %9 = vector.extract_strided_slice %3 {offsets = [0, 0], sizes = [512, 4], strides = [1, 1]} : vector<640x4xf32> to vector<512x4xf32>
    %10 = vector.extract_strided_slice %1 {offsets = [8, 0], sizes = [512, 4], strides = [1, 1]} : vector<640x4xf32> to vector<512x4xf32>
    %11 = vector.extract_strided_slice %5 {offsets = [0, 0], sizes = [512, 4], strides = [1, 1]} : vector<640x4xf32> to vector<512x4xf32>
    %12 = vector.extract_strided_slice %7 {offsets = [0, 0], sizes = [512, 4], strides = [1, 1]} : vector<640x4xf32> to vector<512x4xf32>
    %13 = vector.extract_strided_slice %5 {offsets = [8, 0], sizes = [512, 4], strides = [1, 1]} : vector<640x4xf32> to vector<512x4xf32>
    %14 = vector.extract_strided_slice %1 {offsets = [64, 0], sizes = [512, 4], strides = [1, 1]} : vector<640x4xf32> to vector<512x4xf32>
    %15 = vector.extract_strided_slice %3 {offsets = [64, 0], sizes = [512, 4], strides = [1, 1]} : vector<640x4xf32> to vector<512x4xf32>
    %16 = vector.extract_strided_slice %1 {offsets = [72, 0], sizes = [512, 4], strides = [1, 1]} : vector<640x4xf32> to vector<512x4xf32>
    %17 = tpu.concatenate %8, %9, %10, %11, %12, %13, %14, %15, %16 in 1 : vector<512x4xf32>, vector<512x4xf32>, vector<512x4xf32>, vector<512x4xf32>, vector<512x4xf32>, vector<512x4xf32>, vector<512x4xf32>, vector<512x4xf32>, vector<512x4xf32> -> vector<512x36xf32>
    %18 = arith.truncf %17 : vector<512x36xf32> to vector<512x36xbf16>
    %c0_8 = arith.constant 0 : index
    %c0_9 = arith.constant 0 : index
    %19 = vector.load %arg1[%c0_8, %c0_9] : memref<36x8xbf16, #tpu.memory_space<vmem>>, vector<36x8xbf16>
    %cst = arith.constant dense<0.000000e+00> : vector<512x8xf32>
    %20 = tpu.matmul %18, %19, %cst {dimension_numbers = #tpu.dot_dimension_numbers<[1], [0], [0], [1], [0, 0, 1, 1], [], []>} : vector<512x36xbf16>, vector<36x8xbf16>, vector<512x8xf32> -> vector<512x8xf32>
    %c0_10 = arith.constant 0 : index
    %c0_11 = arith.constant 0 : index
    %21 = vector.load %arg2[%c0_10, %c0_11] : memref<1x8xf32, #tpu.memory_space<vmem>>, vector<1x8xf32>
    %22 = vector.broadcast %21 : vector<1x8xf32> to vector<512x8xf32>
    %23 = arith.addf %20, %22 : vector<512x8xf32>
    %cst_12 = arith.constant 0.000000e+00 : f32
    %24 = vector.broadcast %cst_12 : f32 to vector<512x8xf32>
    %25 = arith.maximumf %23, %24 : vector<512x8xf32>
    %26 = vector.extract_strided_slice %25 {offsets = [0, 0], sizes = [320, 8], strides = [1, 1]} : vector<512x8xf32> to vector<320x8xf32>
    %27 = vector.extract_strided_slice %25 {offsets = [8, 0], sizes = [320, 8], strides = [1, 1]} : vector<512x8xf32> to vector<320x8xf32>
    %28 = vector.extract_strided_slice %25 {offsets = [16, 0], sizes = [320, 8], strides = [1, 1]} : vector<512x8xf32> to vector<320x8xf32>
    %29 = vector.extract_strided_slice %25 {offsets = [64, 0], sizes = [320, 8], strides = [1, 1]} : vector<512x8xf32> to vector<320x8xf32>
    %30 = vector.extract_strided_slice %25 {offsets = [72, 0], sizes = [320, 8], strides = [1, 1]} : vector<512x8xf32> to vector<320x8xf32>
    %31 = vector.extract_strided_slice %25 {offsets = [80, 0], sizes = [320, 8], strides = [1, 1]} : vector<512x8xf32> to vector<320x8xf32>
    %32 = vector.extract_strided_slice %25 {offsets = [128, 0], sizes = [320, 8], strides = [1, 1]} : vector<512x8xf32> to vector<320x8xf32>
    %33 = vector.extract_strided_slice %25 {offsets = [136, 0], sizes = [320, 8], strides = [1, 1]} : vector<512x8xf32> to vector<320x8xf32>
    %34 = vector.extract_strided_slice %25 {offsets = [144, 0], sizes = [320, 8], strides = [1, 1]} : vector<512x8xf32> to vector<320x8xf32>
    %35 = tpu.concatenate %26, %27, %28, %29, %30, %31, %32, %33, %34 in 1 : vector<320x8xf32>, vector<320x8xf32>, vector<320x8xf32>, vector<320x8xf32>, vector<320x8xf32>, vector<320x8xf32>, vector<320x8xf32>, vector<320x8xf32>, vector<320x8xf32> -> vector<320x72xf32>
    %36 = arith.truncf %35 : vector<320x72xf32> to vector<320x72xbf16>
    %c0_13 = arith.constant 0 : index
    %c0_14 = arith.constant 0 : index
    %37 = vector.load %arg3[%c0_13, %c0_14] : memref<72x8xbf16, #tpu.memory_space<vmem>>, vector<72x8xbf16>
    %cst_15 = arith.constant dense<0.000000e+00> : vector<320x8xf32>
    %38 = tpu.matmul %36, %37, %cst_15 {dimension_numbers = #tpu.dot_dimension_numbers<[1], [0], [0], [1], [0, 0, 1, 1], [], []>} : vector<320x72xbf16>, vector<72x8xbf16>, vector<320x8xf32> -> vector<320x8xf32>
    %c0_16 = arith.constant 0 : index
    %c0_17 = arith.constant 0 : index
    %39 = vector.load %arg4[%c0_16, %c0_17] : memref<1x8xf32, #tpu.memory_space<vmem>>, vector<1x8xf32>
    %40 = vector.broadcast %39 : vector<1x8xf32> to vector<320x8xf32>
    %41 = arith.addf %38, %40 : vector<320x8xf32>
    %cst_18 = arith.constant 0.000000e+00 : f32
    %42 = vector.broadcast %cst_18 : f32 to vector<320x8xf32>
    %43 = arith.maximumf %41, %42 : vector<320x8xf32>
    %44 = vector.extract_strided_slice %43 {offsets = [0, 0], sizes = [8, 8], strides = [1, 1]} : vector<320x8xf32> to vector<8x8xf32>
    %45 = vector.extract_strided_slice %43 {offsets = [8, 0], sizes = [8, 8], strides = [1, 1]} : vector<320x8xf32> to vector<8x8xf32>
    %46 = vector.extract_strided_slice %43 {offsets = [16, 0], sizes = [8, 8], strides = [1, 1]} : vector<320x8xf32> to vector<8x8xf32>
    %47 = vector.extract_strided_slice %43 {offsets = [24, 0], sizes = [8, 8], strides = [1, 1]} : vector<320x8xf32> to vector<8x8xf32>
    %48 = vector.extract_strided_slice %43 {offsets = [32, 0], sizes = [8, 8], strides = [1, 1]} : vector<320x8xf32> to vector<8x8xf32>
    %49 = vector.extract_strided_slice %43 {offsets = [64, 0], sizes = [8, 8], strides = [1, 1]} : vector<320x8xf32> to vector<8x8xf32>
    %50 = vector.extract_strided_slice %43 {offsets = [72, 0], sizes = [8, 8], strides = [1, 1]} : vector<320x8xf32> to vector<8x8xf32>
    %51 = vector.extract_strided_slice %43 {offsets = [80, 0], sizes = [8, 8], strides = [1, 1]} : vector<320x8xf32> to vector<8x8xf32>
    %52 = vector.extract_strided_slice %43 {offsets = [88, 0], sizes = [8, 8], strides = [1, 1]} : vector<320x8xf32> to vector<8x8xf32>
    %53 = vector.extract_strided_slice %43 {offsets = [96, 0], sizes = [8, 8], strides = [1, 1]} : vector<320x8xf32> to vector<8x8xf32>
    %54 = vector.extract_strided_slice %43 {offsets = [128, 0], sizes = [8, 8], strides = [1, 1]} : vector<320x8xf32> to vector<8x8xf32>
    %55 = vector.extract_strided_slice %43 {offsets = [136, 0], sizes = [8, 8], strides = [1, 1]} : vector<320x8xf32> to vector<8x8xf32>
    %56 = vector.extract_strided_slice %43 {offsets = [144, 0], sizes = [8, 8], strides = [1, 1]} : vector<320x8xf32> to vector<8x8xf32>
    %57 = vector.extract_strided_slice %43 {offsets = [152, 0], sizes = [8, 8], strides = [1, 1]} : vector<320x8xf32> to vector<8x8xf32>
    %58 = vector.extract_strided_slice %43 {offsets = [160, 0], sizes = [8, 8], strides = [1, 1]} : vector<320x8xf32> to vector<8x8xf32>
    %59 = vector.extract_strided_slice %43 {offsets = [192, 0], sizes = [8, 8], strides = [1, 1]} : vector<320x8xf32> to vector<8x8xf32>
    %60 = vector.extract_strided_slice %43 {offsets = [200, 0], sizes = [8, 8], strides = [1, 1]} : vector<320x8xf32> to vector<8x8xf32>
    %61 = vector.extract_strided_slice %43 {offsets = [208, 0], sizes = [8, 8], strides = [1, 1]} : vector<320x8xf32> to vector<8x8xf32>
    %62 = vector.extract_strided_slice %43 {offsets = [216, 0], sizes = [8, 8], strides = [1, 1]} : vector<320x8xf32> to vector<8x8xf32>
    %63 = vector.extract_strided_slice %43 {offsets = [224, 0], sizes = [8, 8], strides = [1, 1]} : vector<320x8xf32> to vector<8x8xf32>
    %64 = vector.extract_strided_slice %43 {offsets = [256, 0], sizes = [8, 8], strides = [1, 1]} : vector<320x8xf32> to vector<8x8xf32>
    %65 = vector.extract_strided_slice %43 {offsets = [264, 0], sizes = [8, 8], strides = [1, 1]} : vector<320x8xf32> to vector<8x8xf32>
    %66 = vector.extract_strided_slice %43 {offsets = [272, 0], sizes = [8, 8], strides = [1, 1]} : vector<320x8xf32> to vector<8x8xf32>
    %67 = vector.extract_strided_slice %43 {offsets = [280, 0], sizes = [8, 8], strides = [1, 1]} : vector<320x8xf32> to vector<8x8xf32>
    %68 = vector.extract_strided_slice %43 {offsets = [288, 0], sizes = [8, 8], strides = [1, 1]} : vector<320x8xf32> to vector<8x8xf32>
    %69 = tpu.concatenate %44, %45, %46, %47, %48, %49, %50, %51, %52, %53, %54, %55, %56, %57, %58, %59 in 1 : vector<8x8xf32>, vector<8x8xf32>, vector<8x8xf32>, vector<8x8xf32>, vector<8x8xf32>, vector<8x8xf32>, vector<8x8xf32>, vector<8x8xf32>, vector<8x8xf32>, vector<8x8xf32>, vector<8x8xf32>, vector<8x8xf32>, vector<8x8xf32>, vector<8x8xf32>, vector<8x8xf32>, vector<8x8xf32> -> vector<8x128xf32>
    %70 = tpu.concatenate %60, %61, %62, %63, %64, %65, %66, %67, %68 in 1 : vector<8x8xf32>, vector<8x8xf32>, vector<8x8xf32>, vector<8x8xf32>, vector<8x8xf32>, vector<8x8xf32>, vector<8x8xf32>, vector<8x8xf32>, vector<8x8xf32> -> vector<8x72xf32>
    %71 = tpu.concatenate %69, %70 in 1 : vector<8x128xf32>, vector<8x72xf32> -> vector<8x200xf32>
    %72 = arith.truncf %71 : vector<8x200xf32> to vector<8x200xbf16>
    %c0_19 = arith.constant 0 : index
    %c0_20 = arith.constant 0 : index
    %73 = vector.load %arg5[%c0_19, %c0_20] : memref<200x32xbf16, #tpu.memory_space<vmem>>, vector<200x32xbf16>
    %cst_21 = arith.constant dense<0.000000e+00> : vector<8x32xf32>
    %74 = tpu.matmul %72, %73, %cst_21 {dimension_numbers = #tpu.dot_dimension_numbers<[1], [0], [0], [1], [0, 0, 1, 1], [], []>} : vector<8x200xbf16>, vector<200x32xbf16>, vector<8x32xf32> -> vector<8x32xf32>
    %c0_22 = arith.constant 0 : index
    %c0_23 = arith.constant 0 : index
    %75 = vector.load %arg6[%c0_22, %c0_23] : memref<1x32xf32, #tpu.memory_space<vmem>>, vector<1x32xf32>
    %76 = vector.broadcast %75 : vector<1x32xf32> to vector<8x32xf32>
    %77 = arith.addf %74, %76 : vector<8x32xf32>
    %cst_24 = arith.constant dense<0.000000e+00> : vector<8xf32>
    %78 = vector.multi_reduction <add>, %77, %cst_24 [1] : vector<8x32xf32> to vector<8xf32>
    %79 = vector.shape_cast %78 : vector<8xf32> to vector<8x1xf32>
    %cst_25 = arith.constant 3.200000e+01 : f32
    %80 = vector.broadcast %cst_25 : f32 to vector<8x1xf32>
    %81 = arith.divf %79, %80 : vector<8x1xf32>
    %82 = vector.broadcast %81 : vector<8x1xf32> to vector<8x32xf32>
    %83 = arith.subf %77, %82 : vector<8x32xf32>
    %84 = arith.mulf %83, %83 : vector<8x32xf32>
    %cst_26 = arith.constant dense<0.000000e+00> : vector<8xf32>
    %85 = vector.multi_reduction <add>, %84, %cst_26 [1] : vector<8x32xf32> to vector<8xf32>
    %86 = vector.shape_cast %85 : vector<8xf32> to vector<8x1xf32>
    %cst_27 = arith.constant 3.200000e+01 : f32
    %87 = vector.broadcast %cst_27 : f32 to vector<8x1xf32>
    %88 = arith.divf %86, %87 : vector<8x1xf32>
    %89 = vector.broadcast %81 : vector<8x1xf32> to vector<8x32xf32>
    %90 = arith.subf %77, %89 : vector<8x32xf32>
    %cst_28 = arith.constant 9.99999974E-6 : f32
    %91 = vector.broadcast %cst_28 : f32 to vector<8x1xf32>
    %92 = arith.addf %88, %91 : vector<8x1xf32>
    %93 = math.rsqrt %92 : vector<8x1xf32>
    %94 = vector.broadcast %93 : vector<8x1xf32> to vector<8x32xf32>
    %95 = arith.mulf %90, %94 : vector<8x32xf32>
    %c0_29 = arith.constant 0 : index
    %c0_30 = arith.constant 0 : index
    %96 = vector.load %arg7[%c0_29, %c0_30] : memref<1x32xf32, #tpu.memory_space<vmem>>, vector<1x32xf32>
    %97 = vector.broadcast %96 : vector<1x32xf32> to vector<8x32xf32>
    %98 = arith.mulf %95, %97 : vector<8x32xf32>
    %c0_31 = arith.constant 0 : index
    %c0_32 = arith.constant 0 : index
    %99 = vector.load %arg8[%c0_31, %c0_32] : memref<1x32xf32, #tpu.memory_space<vmem>>, vector<1x32xf32>
    %100 = vector.broadcast %99 : vector<1x32xf32> to vector<8x32xf32>
    %101 = arith.addf %98, %100 : vector<8x32xf32>
    %102 = math.tanh %101 : vector<8x32xf32>
    %103 = arith.truncf %102 : vector<8x32xf32> to vector<8x32xbf16>
    %c0_33 = arith.constant 0 : index
    %c0_34 = arith.constant 0 : index
    %104 = vector.load %arg9[%c0_33, %c0_34] : memref<32x256xbf16, #tpu.memory_space<vmem>>, vector<32x256xbf16>
    %cst_35 = arith.constant dense<0.000000e+00> : vector<8x256xf32>
    %105 = tpu.matmul %103, %104, %cst_35 {dimension_numbers = #tpu.dot_dimension_numbers<[1], [0], [0], [1], [0, 0, 1, 1], [], []>} : vector<8x32xbf16>, vector<32x256xbf16>, vector<8x256xf32> -> vector<8x256xf32>
    %c0_36 = arith.constant 0 : index
    %c0_37 = arith.constant 0 : index
    %106 = vector.load %arg10[%c0_36, %c0_37] : memref<1x256xf32, #tpu.memory_space<vmem>>, vector<1x256xf32>
    %107 = vector.broadcast %106 : vector<1x256xf32> to vector<8x256xf32>
    %108 = arith.addf %105, %107 : vector<8x256xf32>
    %109 = tpu.iota {dimensions = array<i32: 0>} : vector<8x1xi32>
    %c2_i32 = arith.constant 2 : i32
    %110 = vector.broadcast %c2_i32 : i32 to vector<8x1xi32>
    %111 = arith.cmpi slt, %109, %110 : vector<8x1xi32>
    %112 = arith.extui %111 : vector<8x1xi1> to vector<8x1xi32>
    %113 = arith.sitofp %112 : vector<8x1xi32> to vector<8x1xf32>
    %114 = vector.broadcast %113 : vector<8x1xf32> to vector<8x256xf32>
    %115 = arith.mulf %108, %114 : vector<8x256xf32>
    %cst_38 = arith.constant dense<0.000000e+00> : vector<256xf32>
    %116 = vector.multi_reduction <add>, %115, %cst_38 [0] : vector<8x256xf32> to vector<256xf32>
    %117 = vector.shape_cast %116 : vector<256xf32> to vector<1x256xf32>
    %cst_39 = arith.constant 5.000000e-01 : f32
    %118 = vector.broadcast %cst_39 : f32 to vector<1x256xf32>
    %119 = arith.mulf %117, %118 : vector<1x256xf32>
    %120 = vector.broadcast %119 : vector<1x256xf32> to vector<8x256xf32>
    %121 = arith.subf %108, %120 : vector<8x256xf32>
    %122 = vector.broadcast %113 : vector<8x1xf32> to vector<8x256xf32>
    %123 = arith.mulf %121, %122 : vector<8x256xf32>
    %124 = arith.mulf %123, %123 : vector<8x256xf32>
    %cst_40 = arith.constant dense<0.000000e+00> : vector<256xf32>
    %125 = vector.multi_reduction <add>, %124, %cst_40 [0] : vector<8x256xf32> to vector<256xf32>
    %126 = vector.shape_cast %125 : vector<256xf32> to vector<1x256xf32>
    %cst_41 = arith.constant 5.000000e-01 : f32
    %127 = vector.broadcast %cst_41 : f32 to vector<1x256xf32>
    %128 = arith.mulf %126, %127 : vector<1x256xf32>
    %129 = vector.broadcast %119 : vector<1x256xf32> to vector<8x256xf32>
    %130 = arith.subf %108, %129 : vector<8x256xf32>
    %cst_42 = arith.constant 9.99999974E-6 : f32
    %131 = vector.broadcast %cst_42 : f32 to vector<1x256xf32>
    %132 = arith.addf %128, %131 : vector<1x256xf32>
    %133 = math.rsqrt %132 : vector<1x256xf32>
    %134 = vector.broadcast %133 : vector<1x256xf32> to vector<8x256xf32>
    %135 = arith.mulf %130, %134 : vector<8x256xf32>
    %c0_43 = arith.constant 0 : index
    %c0_44 = arith.constant 0 : index
    %136 = vector.load %arg11[%c0_43, %c0_44] : memref<1x256xf32, #tpu.memory_space<vmem>>, vector<1x256xf32>
    %137 = vector.broadcast %136 : vector<1x256xf32> to vector<8x256xf32>
    %138 = arith.mulf %135, %137 : vector<8x256xf32>
    %c0_45 = arith.constant 0 : index
    %c0_46 = arith.constant 0 : index
    %139 = vector.load %arg12[%c0_45, %c0_46] : memref<1x256xf32, #tpu.memory_space<vmem>>, vector<1x256xf32>
    %140 = vector.broadcast %139 : vector<1x256xf32> to vector<8x256xf32>
    %141 = arith.addf %138, %140 : vector<8x256xf32>
    %cst_47 = arith.constant 0.000000e+00 : f32
    %142 = vector.broadcast %cst_47 : f32 to vector<8x256xf32>
    %143 = arith.maximumf %141, %142 : vector<8x256xf32>
    %144 = arith.truncf %143 : vector<8x256xf32> to vector<8x256xbf16>
    %c0_48 = arith.constant 0 : index
    %c0_49 = arith.constant 0 : index
    %145 = vector.load %arg13[%c0_48, %c0_49] : memref<256x128xbf16, #tpu.memory_space<vmem>>, vector<256x128xbf16>
    %cst_50 = arith.constant dense<0.000000e+00> : vector<8x128xf32>
    %146 = tpu.matmul %144, %145, %cst_50 {dimension_numbers = #tpu.dot_dimension_numbers<[1], [0], [0], [1], [0, 0, 1, 1], [], []>} : vector<8x256xbf16>, vector<256x128xbf16>, vector<8x128xf32> -> vector<8x128xf32>
    %c0_51 = arith.constant 0 : index
    %c0_52 = arith.constant 0 : index
    %147 = vector.load %arg14[%c0_51, %c0_52] : memref<1x128xf32, #tpu.memory_space<vmem>>, vector<1x128xf32>
    %148 = vector.broadcast %147 : vector<1x128xf32> to vector<8x128xf32>
    %149 = arith.addf %146, %148 : vector<8x128xf32>
    %c0_53 = arith.constant 0 : index
    %c0_54 = arith.constant 0 : index
    %150 = vector.load %arg15[%c0_53, %c0_54] : memref<8x128xf32, #tpu.memory_space<vmem>>, vector<8x128xf32>
    tpu.vector_store %arg15[%c0_53, %c0_54], %149 {strides = array<i32>} : memref<8x128xf32, #tpu.memory_space<vmem>>, vector<8x128xf32>,
    return
  }
}

</mosaic_0001>

<llo_original>
// kernel: curl_forward.1
$region0: #{curl_forward.1}
  #allocation0 [shape = 'u32[]', space=smem, size = 0x4, offset = 0x4, fixed_abs, tag = 'smem constant byte address 0x4 - core index']
  #allocation1 [shape = 'u32[144,128]{1,0:T(1,128)}', space=vmem, size = 0x12000, scoped, tag = 'internal scratch']
  %s0 = inlined_call_operand.vmem [shape: f32[4,640,4], index: 0, kind: input, shape index: {}]
  %s1 = inlined_call_operand.vmem [shape: bf16[36,8], index: 1, kind: input, shape index: {}]
  %s2 = inlined_call_operand.vmem [shape: f32[1,8], index: 2, kind: input, shape index: {}]
  %s3 = inlined_call_operand.vmem [shape: bf16[72,8], index: 3, kind: input, shape index: {}]
  %s4 = inlined_call_operand.vmem [shape: f32[1,8], index: 4, kind: input, shape index: {}]
  %s5 = inlined_call_operand.vmem [shape: bf16[200,32], index: 5, kind: input, shape index: {}]
  %s6 = inlined_call_operand.vmem [shape: f32[1,32], index: 6, kind: input, shape index: {}]
  %s7 = inlined_call_operand.vmem [shape: f32[1,32], index: 7, kind: input, shape index: {}]
  %s8 = inlined_call_operand.vmem [shape: f32[1,32], index: 8, kind: input, shape index: {}]
  %s9 = inlined_call_operand.vmem [shape: bf16[32,256], index: 9, kind: input, shape index: {}]
  %s10 = inlined_call_operand.vmem [shape: f32[1,256], index: 10, kind: input, shape index: {}]
  %s11 = inlined_call_operand.vmem [shape: f32[1,256], index: 11, kind: input, shape index: {}]
  %s12 = inlined_call_operand.vmem [shape: f32[1,256], index: 12, kind: input, shape index: {}]
  %s13 = inlined_call_operand.vmem [shape: bf16[256,128], index: 13, kind: input, shape index: {}]
  %s14 = inlined_call_operand.vmem [shape: f32[1,128], index: 14, kind: input, shape index: {}]
  %s15 = inlined_call_operand.vmem [shape: f32[8,128], index: 15, kind: output, shape index: {}]
  %s16 = sld [smem:[#allocation0]]
  $region70: #{curl_forward.1} parent=0
    _
  %s18 = ssub.s32 1, %s16
  %s19 = scalar_select 0, %s18, %s16
  // Predicated region
  $region2: #{curl_forward.1} parent=0 // pred_check
    _
  $region3: #{curl_forward.1} parent=0 // pred_check_branch
    %21 = sbr.rel (0) target = $region5
  $region4: #{curl_forward.1} parent=0 // pred_region
    _
  $region5: #{curl_forward.1} parent=0 // pred_fallthru
    _
  // Predicated region
  $region6: #{curl_forward.1} parent=0 // pred_check
    _
  $region7: #{curl_forward.1} parent=0 // pred_check_branch
    %23 = sbr.rel (0) target = $region9
  $region8: #{curl_forward.1} parent=0 // pred_region
    _
  $region9: #{curl_forward.1} parent=0 // pred_fallthru
    _
  // Predicated region
  $region10: #{curl_forward.1} parent=0 // pred_check
    _
  $region11: #{curl_forward.1} parent=0 // pred_check_branch
    %25 = sbr.rel (0) target = $region13
  $region12: #{curl_forward.1} parent=0 // pred_region
    _
  $region13: #{curl_forward.1} parent=0 // pred_fallthru
    _
  // Predicated region
  $region14: #{curl_forward.1} parent=0 // pred_check
    _
  $region15: #{curl_forward.1} parent=0 // pred_check_branch
    %27 = sbr.rel (0) target = $region17
  $region16: #{curl_forward.1} parent=0 // pred_region
    _
  $region17: #{curl_forward.1} parent=0 // pred_fallthru
    _
  // Predicated region
  $region18: #{curl_forward.1} parent=0 // pred_check
    _
  $region19: #{curl_forward.1} parent=0 // pred_check_branch
    %29 = sbr.rel (0) target = $region21
  $region20: #{curl_forward.1} parent=0 // pred_region
    _
  $region21: #{curl_forward.1} parent=0 // pred_fallthru
    _
  // Predicated region
  $region22: #{curl_forward.1} parent=0 // pred_check
    _
  $region23: #{curl_forward.1} parent=0 // pred_check_branch
    %31 = sbr.rel (0) target = $region25
  $region24: #{curl_forward.1} parent=0 // pred_region
    _
  $region25: #{curl_forward.1} parent=0 // pred_fallthru
    _
  // Predicated region
  $region26: #{curl_forward.1} parent=0 // pred_check
    _
  $region27: #{curl_forward.1} parent=0 // pred_check_branch
    %33 = sbr.rel (0) target = $region29
  $region28: #{curl_forward.1} parent=0 // pred_region
    _
  $region29: #{curl_forward.1} parent=0 // pred_fallthru
    _
  // Predicated region
  $region30: #{curl_forward.1} parent=0 // pred_check
    _
  $region31: #{curl_forward.1} parent=0 // pred_check_branch
    %35 = sbr.rel (0) target = $region33
  $region32: #{curl_forward.1} parent=0 // pred_region
    _
  $region33: #{curl_forward.1} parent=0 // pred_fallthru
    _
  // Predicated region
  $region34: #{curl_forward.1} parent=0 // pred_check
    _
  $region35: #{curl_forward.1} parent=0 // pred_check_branch
    %37 = sbr.rel (0) target = $region37
  $region36: #{curl_forward.1} parent=0 // pred_region
    _
  $region37: #{curl_forward.1} parent=0 // pred_fallthru
    _
  // Predicated region
  $region38: #{curl_forward.1} parent=0 // pred_check
    _
  $region39: #{curl_forward.1} parent=0 // pred_check_branch
    %39 = sbr.rel (0) target = $region41
  $region40: #{curl_forward.1} parent=0 // pred_region
    _
  $region41: #{curl_forward.1} parent=0 // pred_fallthru
    _
  // Predicated region
  $region42: #{curl_forward.1} parent=0 // pred_check
    _
  $region43: #{curl_forward.1} parent=0 // pred_check_branch
    %41 = sbr.rel (0) target = $region45
  $region44: #{curl_forward.1} parent=0 // pred_region
    _
  $region45: #{curl_forward.1} parent=0 // pred_fallthru
    _
  // Predicated region
  $region46: #{curl_forward.1} parent=0 // pred_check
    _
  $region47: #{curl_forward.1} parent=0 // pred_check_branch
    %43 = sbr.rel (0) target = $region49
  $region48: #{curl_forward.1} parent=0 // pred_region
    _
  $region49: #{curl_forward.1} parent=0 // pred_fallthru
    _
  // Predicated region
  $region50: #{curl_forward.1} parent=0 // pred_check
    _
  $region51: #{curl_forward.1} parent=0 // pred_check_branch
    %45 = sbr.rel (0) target = $region53
  $region52: #{curl_forward.1} parent=0 // pred_region
    _
  $region53: #{curl_forward.1} parent=0 // pred_fallthru
    _
  // Predicated region
  $region54: #{curl_forward.1} parent=0 // pred_check
    _
  $region55: #{curl_forward.1} parent=0 // pred_check_branch
    %47 = sbr.rel (0) target = $region57
  $region56: #{curl_forward.1} parent=0 // pred_region
    _
  $region57: #{curl_forward.1} parent=0 // pred_fallthru
    _
  // Predicated region
  $region58: #{curl_forward.1} parent=0 // pred_check
    _
  $region59: #{curl_forward.1} parent=0 // pred_check_branch
    %49 = sbr.rel (0) target = $region61
  $region60: #{curl_forward.1} parent=0 // pred_region
    _
  $region61: #{curl_forward.1} parent=0 // pred_fallthru
    _
  %v51 = vld [vmem:[%s0] sm:$0xff]
  %v52 = vld [vmem:[%s0 + $0x8] sm:$0xff]
  %v53 = vld [vmem:[%s0 + $0x10] sm:$0xff]
  %v54 = vld [vmem:[%s0 + $0x18] sm:$0xff]
  %v55 = vld [vmem:[%s0 + $0x20] sm:$0xff]
  %v56 = vld [vmem:[%s0 + $0x28] sm:$0xff]
  %v57 = vld [vmem:[%s0 + $0x30] sm:$0xff]
  %v58 = vld [vmem:[%s0 + $0x38] sm:$0xff]
  %v59 = vld [vmem:[%s0 + $0x40] sm:$0xff]
  %v60 = vld [vmem:[%s0 + $0x48] sm:$0xff]
  %v61 = vld [vmem:[%s0 + $0x50] sm:$0xff]
  %v62 = vld [vmem:[%s0 + $0x58] sm:$0xff]
  %v63 = vld [vmem:[%s0 + $0x60] sm:$0xff]
  %v64 = vld [vmem:[%s0 + $0x68] sm:$0xff]
  %v65 = vld [vmem:[%s0 + $0x70] sm:$0xff]
  %v66 = vld [vmem:[%s0 + $0x78] sm:$0xff]
  %v67 = vld [vmem:[%s0 + $0x80] sm:$0xff]
  %v68 = vld [vmem:[%s0 + $0x88] sm:$0xff]
  %v69 = vld [vmem:[%s0 + $0x90] sm:$0xff]
  %v70 = vld [vmem:[%s0 + $0x98] sm:$0xff]
  %v71 = vld [vmem:[%s0 + $0xa0] sm:$0xff]
  %v72 = vld [vmem:[%s0 + $0xa8] sm:$0xff]
  %v73 = vld [vmem:[%s0 + $0xb0] sm:$0xff]
  %v74 = vld [vmem:[%s0 + $0xb8] sm:$0xff]
  %v75 = vld [vmem:[%s0 + $0xc0] sm:$0xff]
  %v76 = vld [vmem:[%s0 + $0xc8] sm:$0xff]
  %v77 = vld [vmem:[%s0 + $0xd0] sm:$0xff]
  %v78 = vld [vmem:[%s0 + $0xd8] sm:$0xff]
  %v79 = vld [vmem:[%s0 + $0xe0] sm:$0xff]
  %v80 = vld [vmem:[%s0 + $0xe8] sm:$0xff]
  %v81 = vld [vmem:[%s0 + $0xf0] sm:$0xff]
  %v82 = vld [vmem:[%s0 + $0xf8] sm:$0xff]
  %v83 = vld [vmem:[%s0 + $0x100] sm:$0xff]
  %v84 = vld [vmem:[%s0 + $0x108] sm:$0xff]
  %v85 = vld [vmem:[%s0 + $0x110] sm:$0xff]
  %v86 = vld [vmem:[%s0 + $0x118] sm:$0xff]
  %v87 = vld [vmem:[%s0 + $0x120] sm:$0xff]
  %v88 = vld [vmem:[%s0 + $0x128] sm:$0xff]
  %v89 = vld [vmem:[%s0 + $0x130] sm:$0xff]
  %v90 = vld [vmem:[%s0 + $0x138] sm:$0xff]
  %v91 = vld [vmem:[%s0 + $0x140] sm:$0xff]
  %v92 = vld [vmem:[%s0 + $0x148] sm:$0xff]
  %v93 = vld [vmem:[%s0 + $0x150] sm:$0xff]
  %v94 = vld [vmem:[%s0 + $0x158] sm:$0xff]
  %v95 = vld [vmem:[%s0 + $0x160] sm:$0xff]
  %v96 = vld [vmem:[%s0 + $0x168] sm:$0xff]
  %v97 = vld [vmem:[%s0 + $0x170] sm:$0xff]
  %v98 = vld [vmem:[%s0 + $0x178] sm:$0xff]
  %v99 = vld [vmem:[%s0 + $0x180] sm:$0xff]
  %v100 = vld [vmem:[%s0 + $0x188] sm:$0xff]
  %v101 = vld [vmem:[%s0 + $0x190] sm:$0xff]
  %v102 = vld [vmem:[%s0 + $0x198] sm:$0xff]
  %v103 = vld [vmem:[%s0 + $0x1a0] sm:$0xff]
  %v104 = vld [vmem:[%s0 + $0x1a8] sm:$0xff]
  %v105 = vld [vmem:[%s0 + $0x1b0] sm:$0xff]
  %v106 = vld [vmem:[%s0 + $0x1b8] sm:$0xff]
  %v107 = vld [vmem:[%s0 + $0x1c0] sm:$0xff]
  %v108 = vld [vmem:[%s0 + $0x1c8] sm:$0xff]
  %v109 = vld [vmem:[%s0 + $0x1d0] sm:$0xff]
  %v110 = vld [vmem:[%s0 + $0x1d8] sm:$0xff]
  %v111 = vld [vmem:[%s0 + $0x1e0] sm:$0xff]
  %v112 = vld [vmem:[%s0 + $0x1e8] sm:$0xff]
  %v113 = vld [vmem:[%s0 + $0x1f0] sm:$0xff]
  %v114 = vld [vmem:[%s0 + $0x1f8] sm:$0xff]
  %v115 = vld [vmem:[%s0 + $0x200] sm:$0xff]
  %v116 = vld [vmem:[%s0 + $0x208] sm:$0xff]
  %v117 = vld [vmem:[%s0 + $0x210] sm:$0xff]
  %v118 = vld [vmem:[%s0 + $0x218] sm:$0xff]
  %v119 = vld [vmem:[%s0 + $0x220] sm:$0xff]
  %v120 = vld [vmem:[%s0 + $0x228] sm:$0xff]
  %v121 = vld [vmem:[%s0 + $0x230] sm:$0xff]
  %v122 = vld [vmem:[%s0 + $0x238] sm:$0xff]
  %v123 = vld [vmem:[%s0 + $0x240] sm:$0xff]
  %s124 = scalar_lea.vmem %s0, 640
  %v125 = vld [vmem:[%s124] sm:$0xff]
  %v126 = vld [vmem:[%s124 + $0x8] sm:$0xff]
  %v127 = vld [vmem:[%s124 + $0x10] sm:$0xff]
  %v128 = vld [vmem:[%s124 + $0x18] sm:$0xff]
  %v129 = vld [vmem:[%s124 + $0x20] sm:$0xff]
  %v130 = vld [vmem:[%s124 + $0x28] sm:$0xff]
  %v131 = vld [vmem:[%s124 + $0x30] sm:$0xff]
  %v132 = vld [vmem:[%s124 + $0x38] sm:$0xff]
  %v133 = vld [vmem:[%s124 + $0x40] sm:$0xff]
  %v134 = vld [vmem:[%s124 + $0x48] sm:$0xff]
  %v135 = vld [vmem:[%s124 + $0x50] sm:$0xff]
  %v136 = vld [vmem:[%s124 + $0x58] sm:$0xff]
  %v137 = vld [vmem:[%s124 + $0x60] sm:$0xff]
  %v138 = vld [vmem:[%s124 + $0x68] sm:$0xff]
  %v139 = vld [vmem:[%s124 + $0x70] sm:$0xff]
  %v140 = vld [vmem:[%s124 + $0x78] sm:$0xff]
  %v141 = vld [vmem:[%s124 + $0x80] sm:$0xff]
  %v142 = vld [vmem:[%s124 + $0x88] sm:$0xff]
  %v143 = vld [vmem:[%s124 + $0x90] sm:$0xff]
  %v144 = vld [vmem:[%s124 + $0x98] sm:$0xff]
  %v145 = vld [vmem:[%s124 + $0xa0] sm:$0xff]
  %v146 = vld [vmem:[%s124 + $0xa8] sm:$0xff]
  %v147 = vld [vmem:[%s124 + $0xb0] sm:$0xff]
  %v148 = vld [vmem:[%s124 + $0xb8] sm:$0xff]
  %v149 = vld [vmem:[%s124 + $0xc0] sm:$0xff]
  %v150 = vld [vmem:[%s124 + $0xc8] sm:$0xff]
  %v151 = vld [vmem:[%s124 + $0xd0] sm:$0xff]
  %v152 = vld [vmem:[%s124 + $0xd8] sm:$0xff]
  %v153 = vld [vmem:[%s124 + $0xe0] sm:$0xff]
  %v154 = vld [vmem:[%s124 + $0xe8] sm:$0xff]
  %v155 = vld [vmem:[%s124 + $0xf0] sm:$0xff]
  %v156 = vld [vmem:[%s124 + $0xf8] sm:$0xff]
  %v157 = vld [vmem:[%s124 + $0x100] sm:$0xff]
  %v158 = vld [vmem:[%s124 + $0x108] sm:$0xff]
  %v159 = vld [vmem:[%s124 + $0x110] sm:$0xff]
  %v160 = vld [vmem:[%s124 + $0x118] sm:$0xff]
  %v161 = vld [vmem:[%s124 + $0x120] sm:$0xff]
  %v162 = vld [vmem:[%s124 + $0x128] sm:$0xff]
  %v163 = vld [vmem:[%s124 + $0x130] sm:$0xff]
  %v164 = vld [vmem:[%s124 + $0x138] sm:$0xff]
  %v165 = vld [vmem:[%s124 + $0x140] sm:$0xff]
  %v166 = vld [vmem:[%s124 + $0x148] sm:$0xff]
  %v167 = vld [vmem:[%s124 + $0x150] sm:$0xff]
  %v168 = vld [vmem:[%s124 + $0x158] sm:$0xff]
  %v169 = vld [vmem:[%s124 + $0x160] sm:$0xff]
  %v170 = vld [vmem:[%s124 + $0x168] sm:$0xff]
  %v171 = vld [vmem:[%s124 + $0x170] sm:$0xff]
  %v172 = vld [vmem:[%s124 + $0x178] sm:$0xff]
  %v173 = vld [vmem:[%s124 + $0x180] sm:$0xff]
  %v174 = vld [vmem:[%s124 + $0x188] sm:$0xff]
  %v175 = vld [vmem:[%s124 + $0x190] sm:$0xff]
  %v176 = vld [vmem:[%s124 + $0x198] sm:$0xff]
  %v177 = vld [vmem:[%s124 + $0x1a0] sm:$0xff]
  %v178 = vld [vmem:[%s124 + $0x1a8] sm:$0xff]
  %v179 = vld [vmem:[%s124 + $0x1b0] sm:$0xff]
  %v180 = vld [vmem:[%s124 + $0x1b8] sm:$0xff]
  %v181 = vld [vmem:[%s124 + $0x1c0] sm:$0xff]
  %v182 = vld [vmem:[%s124 + $0x1c8] sm:$0xff]
  %v183 = vld [vmem:[%s124 + $0x1d0] sm:$0xff]
  %v184 = vld [vmem:[%s124 + $0x1d8] sm:$0xff]
  %v185 = vld [vmem:[%s124 + $0x1e0] sm:$0xff]
  %v186 = vld [vmem:[%s124 + $0x1e8] sm:$0xff]
  %v187 = vld [vmem:[%s124 + $0x1f0] sm:$0xff]
  %v188 = vld [vmem:[%s124 + $0x1f8] sm:$0xff]
  %v189 = vld [vmem:[%s124 + $0x200] sm:$0xff]
  %v190 = vld [vmem:[%s124 + $0x208] sm:$0xff]
  %v191 = vld [vmem:[%s124 + $0x210] sm:$0xff]
  %v192 = vld [vmem:[%s124 + $0x218] sm:$0xff]
  %v193 = vld [vmem:[%s124 + $0x220] sm:$0xff]
  %v194 = vld [vmem:[%s124 + $0x228] sm:$0xff]
  %v195 = vld [vmem:[%s124 + $0x230] sm:$0xff]
  %v196 = vld [vmem:[%s124 + $0x238] sm:$0xff]
  %s197 = scalar_lea.vmem %s0, 1280
  %v198 = vld [vmem:[%s197] sm:$0xff]
  %v199 = vld [vmem:[%s197 + $0x8] sm:$0xff]
  %v200 = vld [vmem:[%s197 + $0x10] sm:$0xff]
  %v201 = vld [vmem:[%s197 + $0x18] sm:$0xff]
  %v202 = vld [vmem:[%s197 + $0x20] sm:$0xff]
  %v203 = vld [vmem:[%s197 + $0x28] sm:$0xff]
  %v204 = vld [vmem:[%s197 + $0x30] sm:$0xff]
  %v205 = vld [vmem:[%s197 + $0x38] sm:$0xff]
  %v206 = vld [vmem:[%s197 + $0x40] sm:$0xff]
  %v207 = vld [vmem:[%s197 + $0x48] sm:$0xff]
  %v208 = vld [vmem:[%s197 + $0x50] sm:$0xff]
  %v209 = vld [vmem:[%s197 + $0x58] sm:$0xff]
  %v210 = vld [vmem:[%s197 + $0x60] sm:$0xff]
  %v211 = vld [vmem:[%s197 + $0x68] sm:$0xff]
  %v212 = vld [vmem:[%s197 + $0x70] sm:$0xff]
  %v213 = vld [vmem:[%s197 + $0x78] sm:$0xff]
  %v214 = vld [vmem:[%s197 + $0x80] sm:$0xff]
  %v215 = vld [vmem:[%s197 + $0x88] sm:$0xff]
  %v216 = vld [vmem:[%s197 + $0x90] sm:$0xff]
  %v217 = vld [vmem:[%s197 + $0x98] sm:$0xff]
  %v218 = vld [vmem:[%s197 + $0xa0] sm:$0xff]
  %v219 = vld [vmem:[%s197 + $0xa8] sm:$0xff]
  %v220 = vld [vmem:[%s197 + $0xb0] sm:$0xff]
  %v221 = vld [vmem:[%s197 + $0xb8] sm:$0xff]
  %v222 = vld [vmem:[%s197 + $0xc0] sm:$0xff]
  %v223 = vld [vmem:[%s197 + $0xc8] sm:$0xff]
  %v224 = vld [vmem:[%s197 + $0xd0] sm:$0xff]
  %v225 = vld [vmem:[%s197 + $0xd8] sm:$0xff]
  %v226 = vld [vmem:[%s197 + $0xe0] sm:$0xff]
  %v227 = vld [vmem:[%s197 + $0xe8] sm:$0xff]
  %v228 = vld [vmem:[%s197 + $0xf0] sm:$0xff]
  %v229 = vld [vmem:[%s197 + $0xf8] sm:$0xff]
  %v230 = vld [vmem:[%s197 + $0x100] sm:$0xff]
  %v231 = vld [vmem:[%s197 + $0x108] sm:$0xff]
  %v232 = vld [vmem:[%s197 + $0x110] sm:$0xff]
  %v233 = vld [vmem:[%s197 + $0x118] sm:$0xff]
  %v234 = vld [vmem:[%s197 + $0x120] sm:$0xff]
  %v235 = vld [vmem:[%s197 + $0x128] sm:$0xff]
  %v236 = vld [vmem:[%s197 + $0x130] sm:$0xff]
  %v237 = vld [vmem:[%s197 + $0x138] sm:$0xff]
  %v238 = vld [vmem:[%s197 + $0x140] sm:$0xff]
  %v239 = vld [vmem:[%s197 + $0x148] sm:$0xff]
  %v240 = vld [vmem:[%s197 + $0x150] sm:$0xff]
  %v241 = vld [vmem:[%s197 + $0x158] sm:$0xff]
  %v242 = vld [vmem:[%s197 + $0x160] sm:$0xff]
  %v243 = vld [vmem:[%s197 + $0x168] sm:$0xff]
  %v244 = vld [vmem:[%s197 + $0x170] sm:$0xff]
  %v245 = vld [vmem:[%s197 + $0x178] sm:$0xff]
  %v246 = vld [vmem:[%s197 + $0x180] sm:$0xff]
  %v247 = vld [vmem:[%s197 + $0x188] sm:$0xff]
  %v248 = vld [vmem:[%s197 + $0x190] sm:$0xff]
  %v249 = vld [vmem:[%s197 + $0x198] sm:$0xff]
  %v250 = vld [vmem:[%s197 + $0x1a0] sm:$0xff]
  %v251 = vld [vmem:[%s197 + $0x1a8] sm:$0xff]
  %v252 = vld [vmem:[%s197 + $0x1b0] sm:$0xff]
  %v253 = vld [vmem:[%s197 + $0x1b8] sm:$0xff]
  %v254 = vld [vmem:[%s197 + $0x1c0] sm:$0xff]
  %v255 = vld [vmem:[%s197 + $0x1c8] sm:$0xff]
  %v256 = vld [vmem:[%s197 + $0x1d0] sm:$0xff]
  %v257 = vld [vmem:[%s197 + $0x1d8] sm:$0xff]
  %v258 = vld [vmem:[%s197 + $0x1e0] sm:$0xff]
  %v259 = vld [vmem:[%s197 + $0x1e8] sm:$0xff]
  %v260 = vld [vmem:[%s197 + $0x1f0] sm:$0xff]
  %v261 = vld [vmem:[%s197 + $0x1f8] sm:$0xff]
  %v262 = vld [vmem:[%s197 + $0x200] sm:$0xff]
  %s263 = scalar_lea.vmem %s0, 1920
  %v264 = vld [vmem:[%s263] sm:$0xff]
  %v265 = vld [vmem:[%s263 + $0x8] sm:$0xff]
  %v266 = vld [vmem:[%s263 + $0x10] sm:$0xff]
  %v267 = vld [vmem:[%s263 + $0x18] sm:$0xff]
  %v268 = vld [vmem:[%s263 + $0x20] sm:$0xff]
  %v269 = vld [vmem:[%s263 + $0x28] sm:$0xff]
  %v270 = vld [vmem:[%s263 + $0x30] sm:$0xff]
  %v271 = vld [vmem:[%s263 + $0x38] sm:$0xff]
  %v272 = vld [vmem:[%s263 + $0x40] sm:$0xff]
  %v273 = vld [vmem:[%s263 + $0x48] sm:$0xff]
  %v274 = vld [vmem:[%s263 + $0x50] sm:$0xff]
  %v275 = vld [vmem:[%s263 + $0x58] sm:$0xff]
  %v276 = vld [vmem:[%s263 + $0x60] sm:$0xff]
  %v277 = vld [vmem:[%s263 + $0x68] sm:$0xff]
  %v278 = vld [vmem:[%s263 + $0x70] sm:$0xff]
  %v279 = vld [vmem:[%s263 + $0x78] sm:$0xff]
  %v280 = vld [vmem:[%s263 + $0x80] sm:$0xff]
  %v281 = vld [vmem:[%s263 + $0x88] sm:$0xff]
  %v282 = vld [vmem:[%s263 + $0x90] sm:$0xff]
  %v283 = vld [vmem:[%s263 + $0x98] sm:$0xff]
  %v284 = vld [vmem:[%s263 + $0xa0] sm:$0xff]
  %v285 = vld [vmem:[%s263 + $0xa8] sm:$0xff]
  %v286 = vld [vmem:[%s263 + $0xb0] sm:$0xff]
  %v287 = vld [vmem:[%s263 + $0xb8] sm:$0xff]
  %v288 = vld [vmem:[%s263 + $0xc0] sm:$0xff]
  %v289 = vld [vmem:[%s263 + $0xc8] sm:$0xff]
  %v290 = vld [vmem:[%s263 + $0xd0] sm:$0xff]
  %v291 = vld [vmem:[%s263 + $0xd8] sm:$0xff]
  %v292 = vld [vmem:[%s263 + $0xe0] sm:$0xff]
  %v293 = vld [vmem:[%s263 + $0xe8] sm:$0xff]
  %v294 = vld [vmem:[%s263 + $0xf0] sm:$0xff]
  %v295 = vld [vmem:[%s263 + $0xf8] sm:$0xff]
  %v296 = vld [vmem:[%s263 + $0x100] sm:$0xff]
  %v297 = vld [vmem:[%s263 + $0x108] sm:$0xff]
  %v298 = vld [vmem:[%s263 + $0x110] sm:$0xff]
  %v299 = vld [vmem:[%s263 + $0x118] sm:$0xff]
  %v300 = vld [vmem:[%s263 + $0x120] sm:$0xff]
  %v301 = vld [vmem:[%s263 + $0x128] sm:$0xff]
  %v302 = vld [vmem:[%s263 + $0x130] sm:$0xff]
  %v303 = vld [vmem:[%s263 + $0x138] sm:$0xff]
  %v304 = vld [vmem:[%s263 + $0x140] sm:$0xff]
  %v305 = vld [vmem:[%s263 + $0x148] sm:$0xff]
  %v306 = vld [vmem:[%s263 + $0x150] sm:$0xff]
  %v307 = vld [vmem:[%s263 + $0x158] sm:$0xff]
  %v308 = vld [vmem:[%s263 + $0x160] sm:$0xff]
  %v309 = vld [vmem:[%s263 + $0x168] sm:$0xff]
  %v310 = vld [vmem:[%s263 + $0x170] sm:$0xff]
  %v311 = vld [vmem:[%s263 + $0x178] sm:$0xff]
  %v312 = vld [vmem:[%s263 + $0x180] sm:$0xff]
  %v313 = vld [vmem:[%s263 + $0x188] sm:$0xff]
  %v314 = vld [vmem:[%s263 + $0x190] sm:$0xff]
  %v315 = vld [vmem:[%s263 + $0x198] sm:$0xff]
  %v316 = vld [vmem:[%s263 + $0x1a0] sm:$0xff]
  %v317 = vld [vmem:[%s263 + $0x1a8] sm:$0xff]
  %v318 = vld [vmem:[%s263 + $0x1b0] sm:$0xff]
  %v319 = vld [vmem:[%s263 + $0x1b8] sm:$0xff]
  %v320 = vld [vmem:[%s263 + $0x1c0] sm:$0xff]
  %v321 = vld [vmem:[%s263 + $0x1c8] sm:$0xff]
  %v322 = vld [vmem:[%s263 + $0x1d0] sm:$0xff]
  %v323 = vld [vmem:[%s263 + $0x1d8] sm:$0xff]
  %v324 = vld [vmem:[%s263 + $0x1e0] sm:$0xff]
  %v325 = vld [vmem:[%s263 + $0x1e8] sm:$0xff]
  %v326 = vld [vmem:[%s263 + $0x1f0] sm:$0xff]
  %v327 = vld [vmem:[%s263 + $0x1f8] sm:$0xff]
  %392 = vrot.lane.b32.xlu0 %v125, 4
  %v393 = vpop.permute.xlu0 %392
  %394 = vrot.lane.b32.xlu0 %v126, 4
  %v395 = vpop.permute.xlu0 %394
  %396 = vrot.lane.b32.xlu0 %v127, 4
  %v397 = vpop.permute.xlu0 %396
  %398 = vrot.lane.b32.xlu0 %v128, 4
  %v399 = vpop.permute.xlu0 %398
  %400 = vrot.lane.b32.xlu0 %v129, 4
  %v401 = vpop.permute.xlu0 %400
  %402 = vrot.lane.b32.xlu0 %v130, 4
  %v403 = vpop.permute.xlu0 %402
  %404 = vrot.lane.b32.xlu0 %v131, 4
  %v405 = vpop.permute.xlu0 %404
  %406 = vrot.lane.b32.xlu0 %v132, 4
  %v407 = vpop.permute.xlu0 %406
  %408 = vrot.lane.b32.xlu0 %v133, 4
  %v409 = vpop.permute.xlu0 %408
  %410 = vrot.lane.b32.xlu0 %v134, 4
  %v411 = vpop.permute.xlu0 %410
  %412 = vrot.lane.b32.xlu0 %v135, 4
  %v413 = vpop.permute.xlu0 %412
  %414 = vrot.lane.b32.xlu0 %v136, 4
  %v415 = vpop.permute.xlu0 %414
  %416 = vrot.lane.b32.xlu0 %v137, 4
  %v417 = vpop.permute.xlu0 %416
  %418 = vrot.lane.b32.xlu0 %v138, 4
  %v419 = vpop.permute.xlu0 %418
  %420 = vrot.lane.b32.xlu0 %v139, 4
  %v421 = vpop.permute.xlu0 %420
  %422 = vrot.lane.b32.xlu0 %v140, 4
  %v423 = vpop.permute.xlu0 %422
  %424 = vrot.lane.b32.xlu0 %v141, 4
  %v425 = vpop.permute.xlu0 %424
  %426 = vrot.lane.b32.xlu0 %v142, 4
  %v427 = vpop.permute.xlu0 %426
  %428 = vrot.lane.b32.xlu0 %v143, 4
  %v429 = vpop.permute.xlu0 %428
  %430 = vrot.lane.b32.xlu0 %v144, 4
  %v431 = vpop.permute.xlu0 %430
  %432 = vrot.lane.b32.xlu0 %v145, 4
  %v433 = vpop.permute.xlu0 %432
  %434 = vrot.lane.b32.xlu0 %v146, 4
  %v435 = vpop.permute.xlu0 %434
  %436 = vrot.lane.b32.xlu0 %v147, 4
  %v437 = vpop.permute.xlu0 %436
  %438 = vrot.lane.b32.xlu0 %v148, 4
  %v439 = vpop.permute.xlu0 %438
  %440 = vrot.lane.b32.xlu0 %v149, 4
  %v441 = vpop.permute.xlu0 %440
  %442 = vrot.lane.b32.xlu0 %v150, 4
  %v443 = vpop.permute.xlu0 %442
  %444 = vrot.lane.b32.xlu0 %v151, 4
  %v445 = vpop.permute.xlu0 %444
  %446 = vrot.lane.b32.xlu0 %v152, 4
  %v447 = vpop.permute.xlu0 %446
  %448 = vrot.lane.b32.xlu0 %v153, 4
  %v449 = vpop.permute.xlu0 %448
  %450 = vrot.lane.b32.xlu0 %v154, 4
  %v451 = vpop.permute.xlu0 %450
  %452 = vrot.lane.b32.xlu0 %v155, 4
  %v453 = vpop.permute.xlu0 %452
  %454 = vrot.lane.b32.xlu0 %v156, 4
  %v455 = vpop.permute.xlu0 %454
  %456 = vrot.lane.b32.xlu0 %v157, 4
  %v457 = vpop.permute.xlu0 %456
  %458 = vrot.lane.b32.xlu0 %v158, 4
  %v459 = vpop.permute.xlu0 %458
  %460 = vrot.lane.b32.xlu0 %v159, 4
  %v461 = vpop.permute.xlu0 %460
  %462 = vrot.lane.b32.xlu0 %v160, 4
  %v463 = vpop.permute.xlu0 %462
  %464 = vrot.lane.b32.xlu0 %v161, 4
  %v465 = vpop.permute.xlu0 %464
  %466 = vrot.lane.b32.xlu0 %v162, 4
  %v467 = vpop.permute.xlu0 %466
  %468 = vrot.lane.b32.xlu0 %v163, 4
  %v469 = vpop.permute.xlu0 %468
  %470 = vrot.lane.b32.xlu0 %v164, 4
  %v471 = vpop.permute.xlu0 %470
  %472 = vrot.lane.b32.xlu0 %v165, 4
  %v473 = vpop.permute.xlu0 %472
  %474 = vrot.lane.b32.xlu0 %v166, 4
  %v475 = vpop.permute.xlu0 %474
  %476 = vrot.lane.b32.xlu0 %v167, 4
  %v477 = vpop.permute.xlu0 %476
  %478 = vrot.lane.b32.xlu0 %v168, 4
  %v479 = vpop.permute.xlu0 %478
  %480 = vrot.lane.b32.xlu0 %v169, 4
  %v481 = vpop.permute.xlu0 %480
  %482 = vrot.lane.b32.xlu0 %v170, 4
  %v483 = vpop.permute.xlu0 %482
  %484 = vrot.lane.b32.xlu0 %v171, 4
  %v485 = vpop.permute.xlu0 %484
  %486 = vrot.lane.b32.xlu0 %v172, 4
  %v487 = vpop.permute.xlu0 %486
  %488 = vrot.lane.b32.xlu0 %v173, 4
  %v489 = vpop.permute.xlu0 %488
  %490 = vrot.lane.b32.xlu0 %v174, 4
  %v491 = vpop.permute.xlu0 %490
  %492 = vrot.lane.b32.xlu0 %v175, 4
  %v493 = vpop.permute.xlu0 %492
  %494 = vrot.lane.b32.xlu0 %v176, 4
  %v495 = vpop.permute.xlu0 %494
  %496 = vrot.lane.b32.xlu0 %v177, 4
  %v497 = vpop.permute.xlu0 %496
  %498 = vrot.lane.b32.xlu0 %v178, 4
  %v499 = vpop.permute.xlu0 %498
  %500 = vrot.lane.b32.xlu0 %v179, 4
  %v501 = vpop.permute.xlu0 %500
  %502 = vrot.lane.b32.xlu0 %v180, 4
  %v503 = vpop.permute.xlu0 %502
  %504 = vrot.lane.b32.xlu0 %v181, 4
  %v505 = vpop.permute.xlu0 %504
  %506 = vrot.lane.b32.xlu0 %v182, 4
  %v507 = vpop.permute.xlu0 %506
  %508 = vrot.lane.b32.xlu0 %v183, 4
  %v509 = vpop.permute.xlu0 %508
  %510 = vrot.lane.b32.xlu0 %v184, 4
  %v511 = vpop.permute.xlu0 %510
  %512 = vrot.lane.b32.xlu0 %v185, 4
  %v513 = vpop.permute.xlu0 %512
  %514 = vrot.lane.b32.xlu0 %v186, 4
  %v515 = vpop.permute.xlu0 %514
  %516 = vrot.lane.b32.xlu0 %v187, 4
  %v517 = vpop.permute.xlu0 %516
  %518 = vrot.lane.b32.xlu0 %v188, 4
  %v519 = vpop.permute.xlu0 %518
  %648 = vrot.lane.b32.xlu0 %v52, 8
  %v649 = vpop.permute.xlu0 %648
  %650 = vrot.lane.b32.xlu0 %v53, 8
  %v651 = vpop.permute.xlu0 %650
  %652 = vrot.lane.b32.xlu0 %v54, 8
  %v653 = vpop.permute.xlu0 %652
  %654 = vrot.lane.b32.xlu0 %v55, 8
  %v655 = vpop.permute.xlu0 %654
  %656 = vrot.lane.b32.xlu0 %v56, 8
  %v657 = vpop.permute.xlu0 %656
  %658 = vrot.lane.b32.xlu0 %v57, 8
  %v659 = vpop.permute.xlu0 %658
  %660 = vrot.lane.b32.xlu0 %v58, 8
  %v661 = vpop.permute.xlu0 %660
  %662 = vrot.lane.b32.xlu0 %v59, 8
  %v663 = vpop.permute.xlu0 %662
  %664 = vrot.lane.b32.xlu0 %v60, 8
  %v665 = vpop.permute.xlu0 %664
  %666 = vrot.lane.b32.xlu0 %v61, 8
  %v667 = vpop.permute.xlu0 %666
  %668 = vrot.lane.b32.xlu0 %v62, 8
  %v669 = vpop.permute.xlu0 %668
  %670 = vrot.lane.b32.xlu0 %v63, 8
  %v671 = vpop.permute.xlu0 %670
  %672 = vrot.lane.b32.xlu0 %v64, 8
  %v673 = vpop.permute.xlu0 %672
  %674 = vrot.lane.b32.xlu0 %v65, 8
  %v675 = vpop.permute.xlu0 %674
  %676 = vrot.lane.b32.xlu0 %v66, 8
  %v677 = vpop.permute.xlu0 %676
  %678 = vrot.lane.b32.xlu0 %v67, 8
  %v679 = vpop.permute.xlu0 %678
  %680 = vrot.lane.b32.xlu0 %v68, 8
  %v681 = vpop.permute.xlu0 %680
  %682 = vrot.lane.b32.xlu0 %v69, 8
  %v683 = vpop.permute.xlu0 %682
  %684 = vrot.lane.b32.xlu0 %v70, 8
  %v685 = vpop.permute.xlu0 %684
  %686 = vrot.lane.b32.xlu0 %v71, 8
  %v687 = vpop.permute.xlu0 %686
  %688 = vrot.lane.b32.xlu0 %v72, 8
  %v689 = vpop.permute.xlu0 %688
  %690 = vrot.lane.b32.xlu0 %v73, 8
  %v691 = vpop.permute.xlu0 %690
  %692 = vrot.lane.b32.xlu0 %v74, 8
  %v693 = vpop.permute.xlu0 %692
  %694 = vrot.lane.b32.xlu0 %v75, 8
  %v695 = vpop.permute.xlu0 %694
  %696 = vrot.lane.b32.xlu0 %v76, 8
  %v697 = vpop.permute.xlu0 %696
  %698 = vrot.lane.b32.xlu0 %v77, 8
  %v699 = vpop.permute.xlu0 %698
  %700 = vrot.lane.b32.xlu0 %v78, 8
  %v701 = vpop.permute.xlu0 %700
  %702 = vrot.lane.b32.xlu0 %v79, 8
  %v703 = vpop.permute.xlu0 %702
  %704 = vrot.lane.b32.xlu0 %v80, 8
  %v705 = vpop.permute.xlu0 %704
  %706 = vrot.lane.b32.xlu0 %v81, 8
  %v707 = vpop.permute.xlu0 %706
  %708 = vrot.lane.b32.xlu0 %v82, 8
  %v709 = vpop.permute.xlu0 %708
  %710 = vrot.lane.b32.xlu0 %v83, 8
  %v711 = vpop.permute.xlu0 %710
  %712 = vrot.lane.b32.xlu0 %v84, 8
  %v713 = vpop.permute.xlu0 %712
  %714 = vrot.lane.b32.xlu0 %v85, 8
  %v715 = vpop.permute.xlu0 %714
  %716 = vrot.lane.b32.xlu0 %v86, 8
  %v717 = vpop.permute.xlu0 %716
  %718 = vrot.lane.b32.xlu0 %v87, 8
  %v719 = vpop.permute.xlu0 %718
  %720 = vrot.lane.b32.xlu0 %v88, 8
  %v721 = vpop.permute.xlu0 %720
  %722 = vrot.lane.b32.xlu0 %v89, 8
  %v723 = vpop.permute.xlu0 %722
  %724 = vrot.lane.b32.xlu0 %v90, 8
  %v725 = vpop.permute.xlu0 %724
  %726 = vrot.lane.b32.xlu0 %v91, 8
  %v727 = vpop.permute.xlu0 %726
  %728 = vrot.lane.b32.xlu0 %v92, 8
  %v729 = vpop.permute.xlu0 %728
  %730 = vrot.lane.b32.xlu0 %v93, 8
  %v731 = vpop.permute.xlu0 %730
  %732 = vrot.lane.b32.xlu0 %v94, 8
  %v733 = vpop.permute.xlu0 %732
  %734 = vrot.lane.b32.xlu0 %v95, 8
  %v735 = vpop.permute.xlu0 %734
  %736 = vrot.lane.b32.xlu0 %v96, 8
  %v737 = vpop.permute.xlu0 %736
  %738 = vrot.lane.b32.xlu0 %v97, 8
  %v739 = vpop.permute.xlu0 %738
  %740 = vrot.lane.b32.xlu0 %v98, 8
  %v741 = vpop.permute.xlu0 %740
  %742 = vrot.lane.b32.xlu0 %v99, 8
  %v743 = vpop.permute.xlu0 %742
  %744 = vrot.lane.b32.xlu0 %v100, 8
  %v745 = vpop.permute.xlu0 %744
  %746 = vrot.lane.b32.xlu0 %v101, 8
  %v747 = vpop.permute.xlu0 %746
  %748 = vrot.lane.b32.xlu0 %v102, 8
  %v749 = vpop.permute.xlu0 %748
  %750 = vrot.lane.b32.xlu0 %v103, 8
  %v751 = vpop.permute.xlu0 %750
  %752 = vrot.lane.b32.xlu0 %v104, 8
  %v753 = vpop.permute.xlu0 %752
  %754 = vrot.lane.b32.xlu0 %v105, 8
  %v755 = vpop.permute.xlu0 %754
  %756 = vrot.lane.b32.xlu0 %v106, 8
  %v757 = vpop.permute.xlu0 %756
  %758 = vrot.lane.b32.xlu0 %v107, 8
  %v759 = vpop.permute.xlu0 %758
  %760 = vrot.lane.b32.xlu0 %v108, 8
  %v761 = vpop.permute.xlu0 %760
  %762 = vrot.lane.b32.xlu0 %v109, 8
  %v763 = vpop.permute.xlu0 %762
  %764 = vrot.lane.b32.xlu0 %v110, 8
  %v765 = vpop.permute.xlu0 %764
  %766 = vrot.lane.b32.xlu0 %v111, 8
  %v767 = vpop.permute.xlu0 %766
  %768 = vrot.lane.b32.xlu0 %v112, 8
  %v769 = vpop.permute.xlu0 %768
  %770 = vrot.lane.b32.xlu0 %v113, 8
  %v771 = vpop.permute.xlu0 %770
  %772 = vrot.lane.b32.xlu0 %v114, 8
  %v773 = vpop.permute.xlu0 %772
  %774 = vrot.lane.b32.xlu0 %v115, 8
  %v775 = vpop.permute.xlu0 %774
  %904 = vrot.lane.b32.xlu0 %v198, 12
  %v905 = vpop.permute.xlu0 %904
  %906 = vrot.lane.b32.xlu0 %v199, 12
  %v907 = vpop.permute.xlu0 %906
  %908 = vrot.lane.b32.xlu0 %v200, 12
  %v909 = vpop.permute.xlu0 %908
  %910 = vrot.lane.b32.xlu0 %v201, 12
  %v911 = vpop.permute.xlu0 %910
  %912 = vrot.lane.b32.xlu0 %v202, 12
  %v913 = vpop.permute.xlu0 %912
  %914 = vrot.lane.b32.xlu0 %v203, 12
  %v915 = vpop.permute.xlu0 %914
  %916 = vrot.lane.b32.xlu0 %v204, 12
  %v917 = vpop.permute.xlu0 %916
  %918 = vrot.lane.b32.xlu0 %v205, 12
  %v919 = vpop.permute.xlu0 %918
  %920 = vrot.lane.b32.xlu0 %v206, 12
  %v921 = vpop.permute.xlu0 %920
  %922 = vrot.lane.b32.xlu0 %v207, 12
  %v923 = vpop.permute.xlu0 %922
  %924 = vrot.lane.b32.xlu0 %v208, 12
  %v925 = vpop.permute.xlu0 %924
  %926 = vrot.lane.b32.xlu0 %v209, 12
  %v927 = vpop.permute.xlu0 %926
  %928 = vrot.lane.b32.xlu0 %v210, 12
  %v929 = vpop.permute.xlu0 %928
  %930 = vrot.lane.b32.xlu0 %v211, 12
  %v931 = vpop.permute.xlu0 %930
  %932 = vrot.lane.b32.xlu0 %v212, 12
  %v933 = vpop.permute.xlu0 %932
  %934 = vrot.lane.b32.xlu0 %v213, 12
  %v935 = vpop.permute.xlu0 %934
  %936 = vrot.lane.b32.xlu0 %v214, 12
  %v937 = vpop.permute.xlu0 %936
  %938 = vrot.lane.b32.xlu0 %v215, 12
  %v939 = vpop.permute.xlu0 %938
  %940 = vrot.lane.b32.xlu0 %v216, 12
  %v941 = vpop.permute.xlu0 %940
  %942 = vrot.lane.b32.xlu0 %v217, 12
  %v943 = vpop.permute.xlu0 %942
  %944 = vrot.lane.b32.xlu0 %v218, 12
  %v945 = vpop.permute.xlu0 %944
  %946 = vrot.lane.b32.xlu0 %v219, 12
  %v947 = vpop.permute.xlu0 %946
  %948 = vrot.lane.b32.xlu0 %v220, 12
  %v949 = vpop.permute.xlu0 %948
  %950 = vrot.lane.b32.xlu0 %v221, 12
  %v951 = vpop.permute.xlu0 %950
  %952 = vrot.lane.b32.xlu0 %v222, 12
  %v953 = vpop.permute.xlu0 %952
  %954 = vrot.lane.b32.xlu0 %v223, 12
  %v955 = vpop.permute.xlu0 %954
  %956 = vrot.lane.b32.xlu0 %v224, 12
  %v957 = vpop.permute.xlu0 %956
  %958 = vrot.lane.b32.xlu0 %v225, 12
  %v959 = vpop.permute.xlu0 %958
  %960 = vrot.lane.b32.xlu0 %v226, 12
  %v961 = vpop.permute.xlu0 %960
  %962 = vrot.lane.b32.xlu0 %v227, 12
  %v963 = vpop.permute.xlu0 %962
  %964 = vrot.lane.b32.xlu0 %v228, 12
  %v965 = vpop.permute.xlu0 %964
  %966 = vrot.lane.b32.xlu0 %v229, 12
  %v967 = vpop.permute.xlu0 %966
  %968 = vrot.lane.b32.xlu0 %v230, 12
  %v969 = vpop.permute.xlu0 %968
  %970 = vrot.lane.b32.xlu0 %v231, 12
  %v971 = vpop.permute.xlu0 %970
  %972 = vrot.lane.b32.xlu0 %v232, 12
  %v973 = vpop.permute.xlu0 %972
  %974 = vrot.lane.b32.xlu0 %v233, 12
  %v975 = vpop.permute.xlu0 %974
  %976 = vrot.lane.b32.xlu0 %v234, 12
  %v977 = vpop.permute.xlu0 %976
  %978 = vrot.lane.b32.xlu0 %v235, 12
  %v979 = vpop.permute.xlu0 %978
  %980 = vrot.lane.b32.xlu0 %v236, 12
  %v981 = vpop.permute.xlu0 %980
  %982 = vrot.lane.b32.xlu0 %v237, 12
  %v983 = vpop.permute.xlu0 %982
  %984 = vrot.lane.b32.xlu0 %v238, 12
  %v985 = vpop.permute.xlu0 %984
  %986 = vrot.lane.b32.xlu0 %v239, 12
  %v987 = vpop.permute.xlu0 %986
  %988 = vrot.lane.b32.xlu0 %v240, 12
  %v989 = vpop.permute.xlu0 %988
  %990 = vrot.lane.b32.xlu0 %v241, 12
  %v991 = vpop.permute.xlu0 %990
  %992 = vrot.lane.b32.xlu0 %v242, 12
  %v993 = vpop.permute.xlu0 %992
  %994 = vrot.lane.b32.xlu0 %v243, 12
  %v995 = vpop.permute.xlu0 %994
  %996 = vrot.lane.b32.xlu0 %v244, 12
  %v997 = vpop.permute.xlu0 %996
  %998 = vrot.lane.b32.xlu0 %v245, 12
  %v999 = vpop.permute.xlu0 %998
  %1000 = vrot.lane.b32.xlu0 %v246, 12
  %v1001 = vpop.permute.xlu0 %1000
  %1002 = vrot.lane.b32.xlu0 %v247, 12
  %v1003 = vpop.permute.xlu0 %1002
  %1004 = vrot.lane.b32.xlu0 %v248, 12
  %v1005 = vpop.permute.xlu0 %1004
  %1006 = vrot.lane.b32.xlu0 %v249, 12
  %v1007 = vpop.permute.xlu0 %1006
  %1008 = vrot.lane.b32.xlu0 %v250, 12
  %v1009 = vpop.permute.xlu0 %1008
  %1010 = vrot.lane.b32.xlu0 %v251, 12
  %v1011 = vpop.permute.xlu0 %1010
  %1012 = vrot.lane.b32.xlu0 %v252, 12
  %v1013 = vpop.permute.xlu0 %1012
  %1014 = vrot.lane.b32.xlu0 %v253, 12
  %v1015 = vpop.permute.xlu0 %1014
  %1016 = vrot.lane.b32.xlu0 %v254, 12
  %v1017 = vpop.permute.xlu0 %1016
  %1018 = vrot.lane.b32.xlu0 %v255, 12
  %v1019 = vpop.permute.xlu0 %1018
  %1020 = vrot.lane.b32.xlu0 %v256, 12
  %v1021 = vpop.permute.xlu0 %1020
  %1022 = vrot.lane.b32.xlu0 %v257, 12
  %v1023 = vpop.permute.xlu0 %1022
  %1024 = vrot.lane.b32.xlu0 %v258, 12
  %v1025 = vpop.permute.xlu0 %1024
  %1026 = vrot.lane.b32.xlu0 %v259, 12
  %v1027 = vpop.permute.xlu0 %1026
  %1028 = vrot.lane.b32.xlu0 %v260, 12
  %v1029 = vpop.permute.xlu0 %1028
  %1030 = vrot.lane.b32.xlu0 %v261, 12
  %v1031 = vpop.permute.xlu0 %1030
  %1160 = vrot.lane.b32.xlu0 %v264, 16
  %v1161 = vpop.permute.xlu0 %1160
  %1162 = vrot.lane.b32.xlu0 %v265, 16
  %v1163 = vpop.permute.xlu0 %1162
  %1164 = vrot.lane.b32.xlu0 %v266, 16
  %v1165 = vpop.permute.xlu0 %1164
  %1166 = vrot.lane.b32.xlu0 %v267, 16
  %v1167 = vpop.permute.xlu0 %1166
  %1168 = vrot.lane.b32.xlu0 %v268, 16
  %v1169 = vpop.permute.xlu0 %1168
  %1170 = vrot.lane.b32.xlu0 %v269, 16
  %v1171 = vpop.permute.xlu0 %1170
  %1172 = vrot.lane.b32.xlu0 %v270, 16
  %v1173 = vpop.permute.xlu0 %1172
  %1174 = vrot.lane.b32.xlu0 %v271, 16
  %v1175 = vpop.permute.xlu0 %1174
  %1176 = vrot.lane.b32.xlu0 %v272, 16
  %v1177 = vpop.permute.xlu0 %1176
  %1178 = vrot.lane.b32.xlu0 %v273, 16
  %v1179 = vpop.permute.xlu0 %1178
  %1180 = vrot.lane.b32.xlu0 %v274, 16
  %v1181 = vpop.permute.xlu0 %1180
  %1182 = vrot.lane.b32.xlu0 %v275, 16
  %v1183 = vpop.permute.xlu0 %1182
  %1184 = vrot.lane.b32.xlu0 %v276, 16
  %v1185 = vpop.permute.xlu0 %1184
  %1186 = vrot.lane.b32.xlu0 %v277, 16
  %v1187 = vpop.permute.xlu0 %1186
  %1188 = vrot.lane.b32.xlu0 %v278, 16
  %v1189 = vpop.permute.xlu0 %1188
  %1190 = vrot.lane.b32.xlu0 %v279, 16
  %v1191 = vpop.permute.xlu0 %1190
  %1192 = vrot.lane.b32.xlu0 %v280, 16
  %v1193 = vpop.permute.xlu0 %1192
  %1194 = vrot.lane.b32.xlu0 %v281, 16
  %v1195 = vpop.permute.xlu0 %1194
  %1196 = vrot.lane.b32.xlu0 %v282, 16
  %v1197 = vpop.permute.xlu0 %1196
  %1198 = vrot.lane.b32.xlu0 %v283, 16
  %v1199 = vpop.permute.xlu0 %1198
  %1200 = vrot.lane.b32.xlu0 %v284, 16
  %v1201 = vpop.permute.xlu0 %1200
  %1202 = vrot.lane.b32.xlu0 %v285, 16
  %v1203 = vpop.permute.xlu0 %1202
  %1204 = vrot.lane.b32.xlu0 %v286, 16
  %v1205 = vpop.permute.xlu0 %1204
  %1206 = vrot.lane.b32.xlu0 %v287, 16
  %v1207 = vpop.permute.xlu0 %1206
  %1208 = vrot.lane.b32.xlu0 %v288, 16
  %v1209 = vpop.permute.xlu0 %1208
  %1210 = vrot.lane.b32.xlu0 %v289, 16
  %v1211 = vpop.permute.xlu0 %1210
  %1212 = vrot.lane.b32.xlu0 %v290, 16
  %v1213 = vpop.permute.xlu0 %1212
  %1214 = vrot.lane.b32.xlu0 %v291, 16
  %v1215 = vpop.permute.xlu0 %1214
  %1216 = vrot.lane.b32.xlu0 %v292, 16
  %v1217 = vpop.permute.xlu0 %1216
  %1218 = vrot.lane.b32.xlu0 %v293, 16
  %v1219 = vpop.permute.xlu0 %1218
  %1220 = vrot.lane.b32.xlu0 %v294, 16
  %v1221 = vpop.permute.xlu0 %1220
  %1222 = vrot.lane.b32.xlu0 %v295, 16
  %v1223 = vpop.permute.xlu0 %1222
  %1224 = vrot.lane.b32.xlu0 %v296, 16
  %v1225 = vpop.permute.xlu0 %1224
  %1226 = vrot.lane.b32.xlu0 %v297, 16
  %v1227 = vpop.permute.xlu0 %1226
  %1228 = vrot.lane.b32.xlu0 %v298, 16
  %v1229 = vpop.permute.xlu0 %1228
  %1230 = vrot.lane.b32.xlu0 %v299, 16
  %v1231 = vpop.permute.xlu0 %1230
  %1232 = vrot.lane.b32.xlu0 %v300, 16
  %v1233 = vpop.permute.xlu0 %1232
  %1234 = vrot.lane.b32.xlu0 %v301, 16
  %v1235 = vpop.permute.xlu0 %1234
  %1236 = vrot.lane.b32.xlu0 %v302, 16
  %v1237 = vpop.permute.xlu0 %1236
  %1238 = vrot.lane.b32.xlu0 %v303, 16
  %v1239 = vpop.permute.xlu0 %1238
  %1240 = vrot.lane.b32.xlu0 %v304, 16
  %v1241 = vpop.permute.xlu0 %1240
  %1242 = vrot.lane.b32.xlu0 %v305, 16
  %v1243 = vpop.permute.xlu0 %1242
  %1244 = vrot.lane.b32.xlu0 %v306, 16
  %v1245 = vpop.permute.xlu0 %1244
  %1246 = vrot.lane.b32.xlu0 %v307, 16
  %v1247 = vpop.permute.xlu0 %1246
  %1248 = vrot.lane.b32.xlu0 %v308, 16
  %v1249 = vpop.permute.xlu0 %1248
  %1250 = vrot.lane.b32.xlu0 %v309, 16
  %v1251 = vpop.permute.xlu0 %1250
  %1252 = vrot.lane.b32.xlu0 %v310, 16
  %v1253 = vpop.permute.xlu0 %1252
  %1254 = vrot.lane.b32.xlu0 %v311, 16
  %v1255 = vpop.permute.xlu0 %1254
  %1256 = vrot.lane.b32.xlu0 %v312, 16
  %v1257 = vpop.permute.xlu0 %1256
  %1258 = vrot.lane.b32.xlu0 %v313, 16
  %v1259 = vpop.permute.xlu0 %1258
  %1260 = vrot.lane.b32.xlu0 %v314, 16
  %v1261 = vpop.permute.xlu0 %1260
  %1262 = vrot.lane.b32.xlu0 %v315, 16
  %v1263 = vpop.permute.xlu0 %1262
  %1264 = vrot.lane.b32.xlu0 %v316, 16
  %v1265 = vpop.permute.xlu0 %1264
  %1266 = vrot.lane.b32.xlu0 %v317, 16
  %v1267 = vpop.permute.xlu0 %1266
  %1268 = vrot.lane.b32.xlu0 %v318, 16
  %v1269 = vpop.permute.xlu0 %1268
  %1270 = vrot.lane.b32.xlu0 %v319, 16
  %v1271 = vpop.permute.xlu0 %1270
  %1272 = vrot.lane.b32.xlu0 %v320, 16
  %v1273 = vpop.permute.xlu0 %1272
  %1274 = vrot.lane.b32.xlu0 %v321, 16
  %v1275 = vpop.permute.xlu0 %1274
  %1276 = vrot.lane.b32.xlu0 %v322, 16
  %v1277 = vpop.permute.xlu0 %1276
  %1278 = vrot.lane.b32.xlu0 %v323, 16
  %v1279 = vpop.permute.xlu0 %1278
  %1280 = vrot.lane.b32.xlu0 %v324, 16
  %v1281 = vpop.permute.xlu0 %1280
  %1282 = vrot.lane.b32.xlu0 %v325, 16
  %v1283 = vpop.permute.xlu0 %1282
  %1284 = vrot.lane.b32.xlu0 %v326, 16
  %v1285 = vpop.permute.xlu0 %1284
  %1286 = vrot.lane.b32.xlu0 %v327, 16
  %v1287 = vpop.permute.xlu0 %1286
  %1353 = vrot.lane.b32.xlu0 %v199, 20
  %v1354 = vpop.permute.xlu0 %1353
  %1355 = vrot.lane.b32.xlu0 %v200, 20
  %v1356 = vpop.permute.xlu0 %1355
  %1357 = vrot.lane.b32.xlu0 %v201, 20
  %v1358 = vpop.permute.xlu0 %1357
  %1359 = vrot.lane.b32.xlu0 %v202, 20
  %v1360 = vpop.permute.xlu0 %1359
  %1361 = vrot.lane.b32.xlu0 %v203, 20
  %v1362 = vpop.permute.xlu0 %1361
  %1363 = vrot.lane.b32.xlu0 %v204, 20
  %v1364 = vpop.permute.xlu0 %1363
  %1365 = vrot.lane.b32.xlu0 %v205, 20
  %v1366 = vpop.permute.xlu0 %1365
  %1367 = vrot.lane.b32.xlu0 %v206, 20
  %v1368 = vpop.permute.xlu0 %1367
  %1369 = vrot.lane.b32.xlu0 %v207, 20
  %v1370 = vpop.permute.xlu0 %1369
  %1371 = vrot.lane.b32.xlu0 %v208, 20
  %v1372 = vpop.permute.xlu0 %1371
  %1373 = vrot.lane.b32.xlu0 %v209, 20
  %v1374 = vpop.permute.xlu0 %1373
  %1375 = vrot.lane.b32.xlu0 %v210, 20
  %v1376 = vpop.permute.xlu0 %1375
  %1377 = vrot.lane.b32.xlu0 %v211, 20
  %v1378 = vpop.permute.xlu0 %1377
  %1379 = vrot.lane.b32.xlu0 %v212, 20
  %v1380 = vpop.permute.xlu0 %1379
  %1381 = vrot.lane.b32.xlu0 %v213, 20
  %v1382 = vpop.permute.xlu0 %1381
  %1383 = vrot.lane.b32.xlu0 %v214, 20
  %v1384 = vpop.permute.xlu0 %1383
  %1385 = vrot.lane.b32.xlu0 %v215, 20
  %v1386 = vpop.permute.xlu0 %1385
  %1387 = vrot.lane.b32.xlu0 %v216, 20
  %v1388 = vpop.permute.xlu0 %1387
  %1389 = vrot.lane.b32.xlu0 %v217, 20
  %v1390 = vpop.permute.xlu0 %1389
  %1391 = vrot.lane.b32.xlu0 %v218, 20
  %v1392 = vpop.permute.xlu0 %1391
  %1393 = vrot.lane.b32.xlu0 %v219, 20
  %v1394 = vpop.permute.xlu0 %1393
  %1395 = vrot.lane.b32.xlu0 %v220, 20
  %v1396 = vpop.permute.xlu0 %1395
  %1397 = vrot.lane.b32.xlu0 %v221, 20
  %v1398 = vpop.permute.xlu0 %1397
  %1399 = vrot.lane.b32.xlu0 %v222, 20
  %v1400 = vpop.permute.xlu0 %1399
  %1401 = vrot.lane.b32.xlu0 %v223, 20
  %v1402 = vpop.permute.xlu0 %1401
  %1403 = vrot.lane.b32.xlu0 %v224, 20
  %v1404 = vpop.permute.xlu0 %1403
  %1405 = vrot.lane.b32.xlu0 %v225, 20
  %v1406 = vpop.permute.xlu0 %1405
  %1407 = vrot.lane.b32.xlu0 %v226, 20
  %v1408 = vpop.permute.xlu0 %1407
  %1409 = vrot.lane.b32.xlu0 %v227, 20
  %v1410 = vpop.permute.xlu0 %1409
  %1411 = vrot.lane.b32.xlu0 %v228, 20
  %v1412 = vpop.permute.xlu0 %1411
  %1413 = vrot.lane.b32.xlu0 %v229, 20
  %v1414 = vpop.permute.xlu0 %1413
  %1415 = vrot.lane.b32.xlu0 %v230, 20
  %v1416 = vpop.permute.xlu0 %1415
  %1417 = vrot.lane.b32.xlu0 %v231, 20
  %v1418 = vpop.permute.xlu0 %1417
  %1419 = vrot.lane.b32.xlu0 %v232, 20
  %v1420 = vpop.permute.xlu0 %1419
  %1421 = vrot.lane.b32.xlu0 %v233, 20
  %v1422 = vpop.permute.xlu0 %1421
  %1423 = vrot.lane.b32.xlu0 %v234, 20
  %v1424 = vpop.permute.xlu0 %1423
  %1425 = vrot.lane.b32.xlu0 %v235, 20
  %v1426 = vpop.permute.xlu0 %1425
  %1427 = vrot.lane.b32.xlu0 %v236, 20
  %v1428 = vpop.permute.xlu0 %1427
  %1429 = vrot.lane.b32.xlu0 %v237, 20
  %v1430 = vpop.permute.xlu0 %1429
  %1431 = vrot.lane.b32.xlu0 %v238, 20
  %v1432 = vpop.permute.xlu0 %1431
  %1433 = vrot.lane.b32.xlu0 %v239, 20
  %v1434 = vpop.permute.xlu0 %1433
  %1435 = vrot.lane.b32.xlu0 %v240, 20
  %v1436 = vpop.permute.xlu0 %1435
  %1437 = vrot.lane.b32.xlu0 %v241, 20
  %v1438 = vpop.permute.xlu0 %1437
  %1439 = vrot.lane.b32.xlu0 %v242, 20
  %v1440 = vpop.permute.xlu0 %1439
  %1441 = vrot.lane.b32.xlu0 %v243, 20
  %v1442 = vpop.permute.xlu0 %1441
  %1443 = vrot.lane.b32.xlu0 %v244, 20
  %v1444 = vpop.permute.xlu0 %1443
  %1445 = vrot.lane.b32.xlu0 %v245, 20
  %v1446 = vpop.permute.xlu0 %1445
  %1447 = vrot.lane.b32.xlu0 %v246, 20
  %v1448 = vpop.permute.xlu0 %1447
  %1449 = vrot.lane.b32.xlu0 %v247, 20
  %v1450 = vpop.permute.xlu0 %1449
  %1451 = vrot.lane.b32.xlu0 %v248, 20
  %v1452 = vpop.permute.xlu0 %1451
  %1453 = vrot.lane.b32.xlu0 %v249, 20
  %v1454 = vpop.permute.xlu0 %1453
  %1455 = vrot.lane.b32.xlu0 %v250, 20
  %v1456 = vpop.permute.xlu0 %1455
  %1457 = vrot.lane.b32.xlu0 %v251, 20
  %v1458 = vpop.permute.xlu0 %1457
  %1459 = vrot.lane.b32.xlu0 %v252, 20
  %v1460 = vpop.permute.xlu0 %1459
  %1461 = vrot.lane.b32.xlu0 %v253, 20
  %v1462 = vpop.permute.xlu0 %1461
  %1463 = vrot.lane.b32.xlu0 %v254, 20
  %v1464 = vpop.permute.xlu0 %1463
  %1465 = vrot.lane.b32.xlu0 %v255, 20
  %v1466 = vpop.permute.xlu0 %1465
  %1467 = vrot.lane.b32.xlu0 %v256, 20
  %v1468 = vpop.permute.xlu0 %1467
  %1469 = vrot.lane.b32.xlu0 %v257, 20
  %v1470 = vpop.permute.xlu0 %1469
  %1471 = vrot.lane.b32.xlu0 %v258, 20
  %v1472 = vpop.permute.xlu0 %1471
  %1473 = vrot.lane.b32.xlu0 %v259, 20
  %v1474 = vpop.permute.xlu0 %1473
  %1475 = vrot.lane.b32.xlu0 %v260, 20
  %v1476 = vpop.permute.xlu0 %1475
  %1477 = vrot.lane.b32.xlu0 %v261, 20
  %v1478 = vpop.permute.xlu0 %1477
  %1479 = vrot.lane.b32.xlu0 %v262, 20
  %v1480 = vpop.permute.xlu0 %1479
  %1552 = vrot.lane.b32.xlu0 %v59, 24
  %v1553 = vpop.permute.xlu0 %1552
  %1554 = vrot.lane.b32.xlu0 %v60, 24
  %v1555 = vpop.permute.xlu0 %1554
  %1556 = vrot.lane.b32.xlu0 %v61, 24
  %v1557 = vpop.permute.xlu0 %1556
  %1558 = vrot.lane.b32.xlu0 %v62, 24
  %v1559 = vpop.permute.xlu0 %1558
  %1560 = vrot.lane.b32.xlu0 %v63, 24
  %v1561 = vpop.permute.xlu0 %1560
  %1562 = vrot.lane.b32.xlu0 %v64, 24
  %v1563 = vpop.permute.xlu0 %1562
  %1564 = vrot.lane.b32.xlu0 %v65, 24
  %v1565 = vpop.permute.xlu0 %1564
  %1566 = vrot.lane.b32.xlu0 %v66, 24
  %v1567 = vpop.permute.xlu0 %1566
  %1568 = vrot.lane.b32.xlu0 %v67, 24
  %v1569 = vpop.permute.xlu0 %1568
  %1570 = vrot.lane.b32.xlu0 %v68, 24
  %v1571 = vpop.permute.xlu0 %1570
  %1572 = vrot.lane.b32.xlu0 %v69, 24
  %v1573 = vpop.permute.xlu0 %1572
  %1574 = vrot.lane.b32.xlu0 %v70, 24
  %v1575 = vpop.permute.xlu0 %1574
  %1576 = vrot.lane.b32.xlu0 %v71, 24
  %v1577 = vpop.permute.xlu0 %1576
  %1578 = vrot.lane.b32.xlu0 %v72, 24
  %v1579 = vpop.permute.xlu0 %1578
  %1580 = vrot.lane.b32.xlu0 %v73, 24
  %v1581 = vpop.permute.xlu0 %1580
  %1582 = vrot.lane.b32.xlu0 %v74, 24
  %v1583 = vpop.permute.xlu0 %1582
  %1584 = vrot.lane.b32.xlu0 %v75, 24
  %v1585 = vpop.permute.xlu0 %1584
  %1586 = vrot.lane.b32.xlu0 %v76, 24
  %v1587 = vpop.permute.xlu0 %1586
  %1588 = vrot.lane.b32.xlu0 %v77, 24
  %v1589 = vpop.permute.xlu0 %1588
  %1590 = vrot.lane.b32.xlu0 %v78, 24
  %v1591 = vpop.permute.xlu0 %1590
  %1592 = vrot.lane.b32.xlu0 %v79, 24
  %v1593 = vpop.permute.xlu0 %1592
  %1594 = vrot.lane.b32.xlu0 %v80, 24
  %v1595 = vpop.permute.xlu0 %1594
  %1596 = vrot.lane.b32.xlu0 %v81, 24
  %v1597 = vpop.permute.xlu0 %1596
  %1598 = vrot.lane.b32.xlu0 %v82, 24
  %v1599 = vpop.permute.xlu0 %1598
  %1600 = vrot.lane.b32.xlu0 %v83, 24
  %v1601 = vpop.permute.xlu0 %1600
  %1602 = vrot.lane.b32.xlu0 %v84, 24
  %v1603 = vpop.permute.xlu0 %1602
  %1604 = vrot.lane.b32.xlu0 %v85, 24
  %v1605 = vpop.permute.xlu0 %1604
  %1606 = vrot.lane.b32.xlu0 %v86, 24
  %v1607 = vpop.permute.xlu0 %1606
  %1608 = vrot.lane.b32.xlu0 %v87, 24
  %v1609 = vpop.permute.xlu0 %1608
  %1610 = vrot.lane.b32.xlu0 %v88, 24
  %v1611 = vpop.permute.xlu0 %1610
  %1612 = vrot.lane.b32.xlu0 %v89, 24
  %v1613 = vpop.permute.xlu0 %1612
  %1614 = vrot.lane.b32.xlu0 %v90, 24
  %v1615 = vpop.permute.xlu0 %1614
  %1616 = vrot.lane.b32.xlu0 %v91, 24
  %v1617 = vpop.permute.xlu0 %1616
  %1618 = vrot.lane.b32.xlu0 %v92, 24
  %v1619 = vpop.permute.xlu0 %1618
  %1620 = vrot.lane.b32.xlu0 %v93, 24
  %v1621 = vpop.permute.xlu0 %1620
  %1622 = vrot.lane.b32.xlu0 %v94, 24
  %v1623 = vpop.permute.xlu0 %1622
  %1624 = vrot.lane.b32.xlu0 %v95, 24
  %v1625 = vpop.permute.xlu0 %1624
  %1626 = vrot.lane.b32.xlu0 %v96, 24
  %v1627 = vpop.permute.xlu0 %1626
  %1628 = vrot.lane.b32.xlu0 %v97, 24
  %v1629 = vpop.permute.xlu0 %1628
  %1630 = vrot.lane.b32.xlu0 %v98, 24
  %v1631 = vpop.permute.xlu0 %1630
  %1632 = vrot.lane.b32.xlu0 %v99, 24
  %v1633 = vpop.permute.xlu0 %1632
  %1634 = vrot.lane.b32.xlu0 %v100, 24
  %v1635 = vpop.permute.xlu0 %1634
  %1636 = vrot.lane.b32.xlu0 %v101, 24
  %v1637 = vpop.permute.xlu0 %1636
  %1638 = vrot.lane.b32.xlu0 %v102, 24
  %v1639 = vpop.permute.xlu0 %1638
  %1640 = vrot.lane.b32.xlu0 %v103, 24
  %v1641 = vpop.permute.xlu0 %1640
  %1642 = vrot.lane.b32.xlu0 %v104, 24
  %v1643 = vpop.permute.xlu0 %1642
  %1644 = vrot.lane.b32.xlu0 %v105, 24
  %v1645 = vpop.permute.xlu0 %1644
  %1646 = vrot.lane.b32.xlu0 %v106, 24
  %v1647 = vpop.permute.xlu0 %1646
  %1648 = vrot.lane.b32.xlu0 %v107, 24
  %v1649 = vpop.permute.xlu0 %1648
  %1650 = vrot.lane.b32.xlu0 %v108, 24
  %v1651 = vpop.permute.xlu0 %1650
  %1652 = vrot.lane.b32.xlu0 %v109, 24
  %v1653 = vpop.permute.xlu0 %1652
  %1654 = vrot.lane.b32.xlu0 %v110, 24
  %v1655 = vpop.permute.xlu0 %1654
  %1656 = vrot.lane.b32.xlu0 %v111, 24
  %v1657 = vpop.permute.xlu0 %1656
  %1658 = vrot.lane.b32.xlu0 %v112, 24
  %v1659 = vpop.permute.xlu0 %1658
  %1660 = vrot.lane.b32.xlu0 %v113, 24
  %v1661 = vpop.permute.xlu0 %1660
  %1662 = vrot.lane.b32.xlu0 %v114, 24
  %v1663 = vpop.permute.xlu0 %1662
  %1664 = vrot.lane.b32.xlu0 %v115, 24
  %v1665 = vpop.permute.xlu0 %1664
  %1666 = vrot.lane.b32.xlu0 %v116, 24
  %v1667 = vpop.permute.xlu0 %1666
  %1668 = vrot.lane.b32.xlu0 %v117, 24
  %v1669 = vpop.permute.xlu0 %1668
  %1670 = vrot.lane.b32.xlu0 %v118, 24
  %v1671 = vpop.permute.xlu0 %1670
  %1672 = vrot.lane.b32.xlu0 %v119, 24
  %v1673 = vpop.permute.xlu0 %1672
  %1674 = vrot.lane.b32.xlu0 %v120, 24
  %v1675 = vpop.permute.xlu0 %1674
  %1676 = vrot.lane.b32.xlu0 %v121, 24
  %v1677 = vpop.permute.xlu0 %1676
  %1678 = vrot.lane.b32.xlu0 %v122, 24
  %v1679 = vpop.permute.xlu0 %1678
  %1752 = vrot.lane.b32.xlu0 %v133, 28
  %v1753 = vpop.permute.xlu0 %1752
  %1754 = vrot.lane.b32.xlu0 %v134, 28
  %v1755 = vpop.permute.xlu0 %1754
  %1756 = vrot.lane.b32.xlu0 %v135, 28
  %v1757 = vpop.permute.xlu0 %1756
  %1758 = vrot.lane.b32.xlu0 %v136, 28
  %v1759 = vpop.permute.xlu0 %1758
  %1760 = vrot.lane.b32.xlu0 %v137, 28
  %v1761 = vpop.permute.xlu0 %1760
  %1762 = vrot.lane.b32.xlu0 %v138, 28
  %v1763 = vpop.permute.xlu0 %1762
  %1764 = vrot.lane.b32.xlu0 %v139, 28
  %v1765 = vpop.permute.xlu0 %1764
  %1766 = vrot.lane.b32.xlu0 %v140, 28
  %v1767 = vpop.permute.xlu0 %1766
  %1768 = vrot.lane.b32.xlu0 %v141, 28
  %v1769 = vpop.permute.xlu0 %1768
  %1770 = vrot.lane.b32.xlu0 %v142, 28
  %v1771 = vpop.permute.xlu0 %1770
  %1772 = vrot.lane.b32.xlu0 %v143, 28
  %v1773 = vpop.permute.xlu0 %1772
  %1774 = vrot.lane.b32.xlu0 %v144, 28
  %v1775 = vpop.permute.xlu0 %1774
  %1776 = vrot.lane.b32.xlu0 %v145, 28
  %v1777 = vpop.permute.xlu0 %1776
  %1778 = vrot.lane.b32.xlu0 %v146, 28
  %v1779 = vpop.permute.xlu0 %1778
  %1780 = vrot.lane.b32.xlu0 %v147, 28
  %v1781 = vpop.permute.xlu0 %1780
  %1782 = vrot.lane.b32.xlu0 %v148, 28
  %v1783 = vpop.permute.xlu0 %1782
  %1784 = vrot.lane.b32.xlu0 %v149, 28
  %v1785 = vpop.permute.xlu0 %1784
  %1786 = vrot.lane.b32.xlu0 %v150, 28
  %v1787 = vpop.permute.xlu0 %1786
  %1788 = vrot.lane.b32.xlu0 %v151, 28
  %v1789 = vpop.permute.xlu0 %1788
  %1790 = vrot.lane.b32.xlu0 %v152, 28
  %v1791 = vpop.permute.xlu0 %1790
  %1792 = vrot.lane.b32.xlu0 %v153, 28
  %v1793 = vpop.permute.xlu0 %1792
  %1794 = vrot.lane.b32.xlu0 %v154, 28
  %v1795 = vpop.permute.xlu0 %1794
  %1796 = vrot.lane.b32.xlu0 %v155, 28
  %v1797 = vpop.permute.xlu0 %1796
  %1798 = vrot.lane.b32.xlu0 %v156, 28
  %v1799 = vpop.permute.xlu0 %1798
  %1800 = vrot.lane.b32.xlu0 %v157, 28
  %v1801 = vpop.permute.xlu0 %1800
  %1802 = vrot.lane.b32.xlu0 %v158, 28
  %v1803 = vpop.permute.xlu0 %1802
  %1804 = vrot.lane.b32.xlu0 %v159, 28
  %v1805 = vpop.permute.xlu0 %1804
  %1806 = vrot.lane.b32.xlu0 %v160, 28
  %v1807 = vpop.permute.xlu0 %1806
  %1808 = vrot.lane.b32.xlu0 %v161, 28
  %v1809 = vpop.permute.xlu0 %1808
  %1810 = vrot.lane.b32.xlu0 %v162, 28
  %v1811 = vpop.permute.xlu0 %1810
  %1812 = vrot.lane.b32.xlu0 %v163, 28
  %v1813 = vpop.permute.xlu0 %1812
  %1814 = vrot.lane.b32.xlu0 %v164, 28
  %v1815 = vpop.permute.xlu0 %1814
  %1816 = vrot.lane.b32.xlu0 %v165, 28
  %v1817 = vpop.permute.xlu0 %1816
  %1818 = vrot.lane.b32.xlu0 %v166, 28
  %v1819 = vpop.permute.xlu0 %1818
  %1820 = vrot.lane.b32.xlu0 %v167, 28
  %v1821 = vpop.permute.xlu0 %1820
  %1822 = vrot.lane.b32.xlu0 %v168, 28
  %v1823 = vpop.permute.xlu0 %1822
  %1824 = vrot.lane.b32.xlu0 %v169, 28
  %v1825 = vpop.permute.xlu0 %1824
  %1826 = vrot.lane.b32.xlu0 %v170, 28
  %v1827 = vpop.permute.xlu0 %1826
  %1828 = vrot.lane.b32.xlu0 %v171, 28
  %v1829 = vpop.permute.xlu0 %1828
  %1830 = vrot.lane.b32.xlu0 %v172, 28
  %v1831 = vpop.permute.xlu0 %1830
  %1832 = vrot.lane.b32.xlu0 %v173, 28
  %v1833 = vpop.permute.xlu0 %1832
  %1834 = vrot.lane.b32.xlu0 %v174, 28
  %v1835 = vpop.permute.xlu0 %1834
  %1836 = vrot.lane.b32.xlu0 %v175, 28
  %v1837 = vpop.permute.xlu0 %1836
  %1838 = vrot.lane.b32.xlu0 %v176, 28
  %v1839 = vpop.permute.xlu0 %1838
  %1840 = vrot.lane.b32.xlu0 %v177, 28
  %v1841 = vpop.permute.xlu0 %1840
  %1842 = vrot.lane.b32.xlu0 %v178, 28
  %v1843 = vpop.permute.xlu0 %1842
  %1844 = vrot.lane.b32.xlu0 %v179, 28
  %v1845 = vpop.permute.xlu0 %1844
  %1846 = vrot.lane.b32.xlu0 %v180, 28
  %v1847 = vpop.permute.xlu0 %1846
  %1848 = vrot.lane.b32.xlu0 %v181, 28
  %v1849 = vpop.permute.xlu0 %1848
  %1850 = vrot.lane.b32.xlu0 %v182, 28
  %v1851 = vpop.permute.xlu0 %1850
  %1852 = vrot.lane.b32.xlu0 %v183, 28
  %v1853 = vpop.permute.xlu0 %1852
  %1854 = vrot.lane.b32.xlu0 %v184, 28
  %v1855 = vpop.permute.xlu0 %1854
  %1856 = vrot.lane.b32.xlu0 %v185, 28
  %v1857 = vpop.permute.xlu0 %1856
  %1858 = vrot.lane.b32.xlu0 %v186, 28
  %v1859 = vpop.permute.xlu0 %1858
  %1860 = vrot.lane.b32.xlu0 %v187, 28
  %v1861 = vpop.permute.xlu0 %1860
  %1862 = vrot.lane.b32.xlu0 %v188, 28
  %v1863 = vpop.permute.xlu0 %1862
  %1864 = vrot.lane.b32.xlu0 %v189, 28
  %v1865 = vpop.permute.xlu0 %1864
  %1866 = vrot.lane.b32.xlu0 %v190, 28
  %v1867 = vpop.permute.xlu0 %1866
  %1868 = vrot.lane.b32.xlu0 %v191, 28
  %v1869 = vpop.permute.xlu0 %1868
  %1870 = vrot.lane.b32.xlu0 %v192, 28
  %v1871 = vpop.permute.xlu0 %1870
  %1872 = vrot.lane.b32.xlu0 %v193, 28
  %v1873 = vpop.permute.xlu0 %1872
  %1874 = vrot.lane.b32.xlu0 %v194, 28
  %v1875 = vpop.permute.xlu0 %1874
  %1876 = vrot.lane.b32.xlu0 %v195, 28
  %v1877 = vpop.permute.xlu0 %1876
  %1878 = vrot.lane.b32.xlu0 %v196, 28
  %v1879 = vpop.permute.xlu0 %1878
  %1945 = vrot.lane.b32.xlu0 %v60, 32
  %v1946 = vpop.permute.xlu0 %1945
  %1947 = vrot.lane.b32.xlu0 %v61, 32
  %v1948 = vpop.permute.xlu0 %1947
  %1949 = vrot.lane.b32.xlu0 %v62, 32
  %v1950 = vpop.permute.xlu0 %1949
  %1951 = vrot.lane.b32.xlu0 %v63, 32
  %v1952 = vpop.permute.xlu0 %1951
  %1953 = vrot.lane.b32.xlu0 %v64, 32
  %v1954 = vpop.permute.xlu0 %1953
  %1955 = vrot.lane.b32.xlu0 %v65, 32
  %v1956 = vpop.permute.xlu0 %1955
  %1957 = vrot.lane.b32.xlu0 %v66, 32
  %v1958 = vpop.permute.xlu0 %1957
  %1959 = vrot.lane.b32.xlu0 %v67, 32
  %v1960 = vpop.permute.xlu0 %1959
  %1961 = vrot.lane.b32.xlu0 %v68, 32
  %v1962 = vpop.permute.xlu0 %1961
  %1963 = vrot.lane.b32.xlu0 %v69, 32
  %v1964 = vpop.permute.xlu0 %1963
  %1965 = vrot.lane.b32.xlu0 %v70, 32
  %v1966 = vpop.permute.xlu0 %1965
  %1967 = vrot.lane.b32.xlu0 %v71, 32
  %v1968 = vpop.permute.xlu0 %1967
  %1969 = vrot.lane.b32.xlu0 %v72, 32
  %v1970 = vpop.permute.xlu0 %1969
  %1971 = vrot.lane.b32.xlu0 %v73, 32
  %v1972 = vpop.permute.xlu0 %1971
  %1973 = vrot.lane.b32.xlu0 %v74, 32
  %v1974 = vpop.permute.xlu0 %1973
  %1975 = vrot.lane.b32.xlu0 %v75, 32
  %v1976 = vpop.permute.xlu0 %1975
  %1977 = vrot.lane.b32.xlu0 %v76, 32
  %v1978 = vpop.permute.xlu0 %1977
  %1979 = vrot.lane.b32.xlu0 %v77, 32
  %v1980 = vpop.permute.xlu0 %1979
  %1981 = vrot.lane.b32.xlu0 %v78, 32
  %v1982 = vpop.permute.xlu0 %1981
  %1983 = vrot.lane.b32.xlu0 %v79, 32
  %v1984 = vpop.permute.xlu0 %1983
  %1985 = vrot.lane.b32.xlu0 %v80, 32
  %v1986 = vpop.permute.xlu0 %1985
  %1987 = vrot.lane.b32.xlu0 %v81, 32
  %v1988 = vpop.permute.xlu0 %1987
  %1989 = vrot.lane.b32.xlu0 %v82, 32
  %v1990 = vpop.permute.xlu0 %1989
  %1991 = vrot.lane.b32.xlu0 %v83, 32
  %v1992 = vpop.permute.xlu0 %1991
  %1993 = vrot.lane.b32.xlu0 %v84, 32
  %v1994 = vpop.permute.xlu0 %1993
  %1995 = vrot.lane.b32.xlu0 %v85, 32
  %v1996 = vpop.permute.xlu0 %1995
  %1997 = vrot.lane.b32.xlu0 %v86, 32
  %v1998 = vpop.permute.xlu0 %1997
  %1999 = vrot.lane.b32.xlu0 %v87, 32
  %v2000 = vpop.permute.xlu0 %1999
  %2001 = vrot.lane.b32.xlu0 %v88, 32
  %v2002 = vpop.permute.xlu0 %2001
  %2003 = vrot.lane.b32.xlu0 %v89, 32
  %v2004 = vpop.permute.xlu0 %2003
  %2005 = vrot.lane.b32.xlu0 %v90, 32
  %v2006 = vpop.permute.xlu0 %2005
  %2007 = vrot.lane.b32.xlu0 %v91, 32
  %v2008 = vpop.permute.xlu0 %2007
  %2009 = vrot.lane.b32.xlu0 %v92, 32
  %v2010 = vpop.permute.xlu0 %2009
  %2011 = vrot.lane.b32.xlu0 %v93, 32
  %v2012 = vpop.permute.xlu0 %2011
  %2013 = vrot.lane.b32.xlu0 %v94, 32
  %v2014 = vpop.permute.xlu0 %2013
  %2015 = vrot.lane.b32.xlu0 %v95, 32
  %v2016 = vpop.permute.xlu0 %2015
  %2017 = vrot.lane.b32.xlu0 %v96, 32
  %v2018 = vpop.permute.xlu0 %2017
  %2019 = vrot.lane.b32.xlu0 %v97, 32
  %v2020 = vpop.permute.xlu0 %2019
  %2021 = vrot.lane.b32.xlu0 %v98, 32
  %v2022 = vpop.permute.xlu0 %2021
  %2023 = vrot.lane.b32.xlu0 %v99, 32
  %v2024 = vpop.permute.xlu0 %2023
  %2025 = vrot.lane.b32.xlu0 %v100, 32
  %v2026 = vpop.permute.xlu0 %2025
  %2027 = vrot.lane.b32.xlu0 %v101, 32
  %v2028 = vpop.permute.xlu0 %2027
  %2029 = vrot.lane.b32.xlu0 %v102, 32
  %v2030 = vpop.permute.xlu0 %2029
  %2031 = vrot.lane.b32.xlu0 %v103, 32
  %v2032 = vpop.permute.xlu0 %2031
  %2033 = vrot.lane.b32.xlu0 %v104, 32
  %v2034 = vpop.permute.xlu0 %2033
  %2035 = vrot.lane.b32.xlu0 %v105, 32
  %v2036 = vpop.permute.xlu0 %2035
  %2037 = vrot.lane.b32.xlu0 %v106, 32
  %v2038 = vpop.permute.xlu0 %2037
  %2039 = vrot.lane.b32.xlu0 %v107, 32
  %v2040 = vpop.permute.xlu0 %2039
  %2041 = vrot.lane.b32.xlu0 %v108, 32
  %v2042 = vpop.permute.xlu0 %2041
  %2043 = vrot.lane.b32.xlu0 %v109, 32
  %v2044 = vpop.permute.xlu0 %2043
  %2045 = vrot.lane.b32.xlu0 %v110, 32
  %v2046 = vpop.permute.xlu0 %2045
  %2047 = vrot.lane.b32.xlu0 %v111, 32
  %v2048 = vpop.permute.xlu0 %2047
  %2049 = vrot.lane.b32.xlu0 %v112, 32
  %v2050 = vpop.permute.xlu0 %2049
  %2051 = vrot.lane.b32.xlu0 %v113, 32
  %v2052 = vpop.permute.xlu0 %2051
  %2053 = vrot.lane.b32.xlu0 %v114, 32
  %v2054 = vpop.permute.xlu0 %2053
  %2055 = vrot.lane.b32.xlu0 %v115, 32
  %v2056 = vpop.permute.xlu0 %2055
  %2057 = vrot.lane.b32.xlu0 %v116, 32
  %v2058 = vpop.permute.xlu0 %2057
  %2059 = vrot.lane.b32.xlu0 %v117, 32
  %v2060 = vpop.permute.xlu0 %2059
  %2061 = vrot.lane.b32.xlu0 %v118, 32
  %v2062 = vpop.permute.xlu0 %2061
  %2063 = vrot.lane.b32.xlu0 %v119, 32
  %v2064 = vpop.permute.xlu0 %2063
  %2065 = vrot.lane.b32.xlu0 %v120, 32
  %v2066 = vpop.permute.xlu0 %2065
  %2067 = vrot.lane.b32.xlu0 %v121, 32
  %v2068 = vpop.permute.xlu0 %2067
  %2069 = vrot.lane.b32.xlu0 %v122, 32
  %v2070 = vpop.permute.xlu0 %2069
  %2071 = vrot.lane.b32.xlu0 %v123, 32
  %v2072 = vpop.permute.xlu0 %2071
  %vm2137 = vcmask 31744
  %v2138 = vsel %vm2137, %v51, %v393
  %v2139 = vsel %vm2137, %v52, %v395
  %v2140 = vsel %vm2137, %v53, %v397
  %v2141 = vsel %vm2137, %v54, %v399
  %v2142 = vsel %vm2137, %v55, %v401
  %v2143 = vsel %vm2137, %v56, %v403
  %v2144 = vsel %vm2137, %v57, %v405
  %v2145 = vsel %vm2137, %v58, %v407
  %v2146 = vsel %vm2137, %v59, %v409
  %v2147 = vsel %vm2137, %v60, %v411
  %v2148 = vsel %vm2137, %v61, %v413
  %v2149 = vsel %vm2137, %v62, %v415
  %v2150 = vsel %vm2137, %v63, %v417
  %v2151 = vsel %vm2137, %v64, %v419
  %v2152 = vsel %vm2137, %v65, %v421
  %v2153 = vsel %vm2137, %v66, %v423
  %v2154 = vsel %vm2137, %v67, %v425
  %v2155 = vsel %vm2137, %v68, %v427
  %v2156 = vsel %vm2137, %v69, %v429
  %v2157 = vsel %vm2137, %v70, %v431
  %v2158 = vsel %vm2137, %v71, %v433
  %v2159 = vsel %vm2137, %v72, %v435
  %v2160 = vsel %vm2137, %v73, %v437
  %v2161 = vsel %vm2137, %v74, %v439
  %v2162 = vsel %vm2137, %v75, %v441
  %v2163 = vsel %vm2137, %v76, %v443
  %v2164 = vsel %vm2137, %v77, %v445
  %v2165 = vsel %vm2137, %v78, %v447
  %v2166 = vsel %vm2137, %v79, %v449
  %v2167 = vsel %vm2137, %v80, %v451
  %v2168 = vsel %vm2137, %v81, %v453
  %v2169 = vsel %vm2137, %v82, %v455
  %v2170 = vsel %vm2137, %v83, %v457
  %v2171 = vsel %vm2137, %v84, %v459
  %v2172 = vsel %vm2137, %v85, %v461
  %v2173 = vsel %vm2137, %v86, %v463
  %v2174 = vsel %vm2137, %v87, %v465
  %v2175 = vsel %vm2137, %v88, %v467
  %v2176 = vsel %vm2137, %v89, %v469
  %v2177 = vsel %vm2137, %v90, %v471
  %v2178 = vsel %vm2137, %v91, %v473
  %v2179 = vsel %vm2137, %v92, %v475
  %v2180 = vsel %vm2137, %v93, %v477
  %v2181 = vsel %vm2137, %v94, %v479
  %v2182 = vsel %vm2137, %v95, %v481
  %v2183 = vsel %vm2137, %v96, %v483
  %v2184 = vsel %vm2137, %v97, %v485
  %v2185 = vsel %vm2137, %v98, %v487
  %v2186 = vsel %vm2137, %v99, %v489
  %v2187 = vsel %vm2137, %v100, %v491
  %v2188 = vsel %vm2137, %v101, %v493
  %v2189 = vsel %vm2137, %v102, %v495
  %v2190 = vsel %vm2137, %v103, %v497
  %v2191 = vsel %vm2137, %v104, %v499
  %v2192 = vsel %vm2137, %v105, %v501
  %v2193 = vsel %vm2137, %v106, %v503
  %v2194 = vsel %vm2137, %v107, %v505
  %v2195 = vsel %vm2137, %v108, %v507
  %v2196 = vsel %vm2137, %v109, %v509
  %v2197 = vsel %vm2137, %v110, %v511
  %v2198 = vsel %vm2137, %v111, %v513
  %v2199 = vsel %vm2137, %v112, %v515
  %v2200 = vsel %vm2137, %v113, %v517
  %v2201 = vsel %vm2137, %v114, %v519
  %vm2202 = vcmask 64512
  %v2203 = vsel %vm2202, %v2138, %v649
  %v2204 = vsel %vm2202, %v2139, %v651
  %v2205 = vsel %vm2202, %v2140, %v653
  %v2206 = vsel %vm2202, %v2141, %v655
  %v2207 = vsel %vm2202, %v2142, %v657
  %v2208 = vsel %vm2202, %v2143, %v659
  %v2209 = vsel %vm2202, %v2144, %v661
  %v2210 = vsel %vm2202, %v2145, %v663
  %v2211 = vsel %vm2202, %v2146, %v665
  %v2212 = vsel %vm2202, %v2147, %v667
  %v2213 = vsel %vm2202, %v2148, %v669
  %v2214 = vsel %vm2202, %v2149, %v671
  %v2215 = vsel %vm2202, %v2150, %v673
  %v2216 = vsel %vm2202, %v2151, %v675
  %v2217 = vsel %vm2202, %v2152, %v677
  %v2218 = vsel %vm2202, %v2153, %v679
  %v2219 = vsel %vm2202, %v2154, %v681
  %v2220 = vsel %vm2202, %v2155, %v683
  %v2221 = vsel %vm2202, %v2156, %v685
  %v2222 = vsel %vm2202, %v2157, %v687
  %v2223 = vsel %vm2202, %v2158, %v689
  %v2224 = vsel %vm2202, %v2159, %v691
  %v2225 = vsel %vm2202, %v2160, %v693
  %v2226 = vsel %vm2202, %v2161, %v695
  %v2227 = vsel %vm2202, %v2162, %v697
  %v2228 = vsel %vm2202, %v2163, %v699
  %v2229 = vsel %vm2202, %v2164, %v701
  %v2230 = vsel %vm2202, %v2165, %v703
  %v2231 = vsel %vm2202, %v2166, %v705
  %v2232 = vsel %vm2202, %v2167, %v707
  %v2233 = vsel %vm2202, %v2168, %v709
  %v2234 = vsel %vm2202, %v2169, %v711
  %v2235 = vsel %vm2202, %v2170, %v713
  %v2236 = vsel %vm2202, %v2171, %v715
  %v2237 = vsel %vm2202, %v2172, %v717
  %v2238 = vsel %vm2202, %v2173, %v719
  %v2239 = vsel %vm2202, %v2174, %v721
  %v2240 = vsel %vm2202, %v2175, %v723
  %v2241 = vsel %vm2202, %v2176, %v725
  %v2242 = vsel %vm2202, %v2177, %v727
  %v2243 = vsel %vm2202, %v2178, %v729
  %v2244 = vsel %vm2202, %v2179, %v731
  %v2245 = vsel %vm2202, %v2180, %v733
  %v2246 = vsel %vm2202, %v2181, %v735
  %v2247 = vsel %vm2202, %v2182, %v737
  %v2248 = vsel %vm2202, %v2183, %v739
  %v2249 = vsel %vm2202, %v2184, %v741
  %v2250 = vsel %vm2202, %v2185, %v743
  %v2251 = vsel %vm2202, %v2186, %v745
  %v2252 = vsel %vm2202, %v2187, %v747
  %v2253 = vsel %vm2202, %v2188, %v749
  %v2254 = vsel %vm2202, %v2189, %v751
  %v2255 = vsel %vm2202, %v2190, %v753
  %v2256 = vsel %vm2202, %v2191, %v755
  %v2257 = vsel %vm2202, %v2192, %v757
  %v2258 = vsel %vm2202, %v2193, %v759
  %v2259 = vsel %vm2202, %v2194, %v761
  %v2260 = vsel %vm2202, %v2195, %v763
  %v2261 = vsel %vm2202, %v2196, %v765
  %v2262 = vsel %vm2202, %v2197, %v767
  %v2263 = vsel %vm2202, %v2198, %v769
  %v2264 = vsel %vm2202, %v2199, %v771
  %v2265 = vsel %vm2202, %v2200, %v773
  %v2266 = vsel %vm2202, %v2201, %v775
  %vm2267 = vcmask 97280
  %v2268 = vsel %vm2267, %v2203, %v905
  %v2269 = vsel %vm2267, %v2204, %v907
  %v2270 = vsel %vm2267, %v2205, %v909
  %v2271 = vsel %vm2267, %v2206, %v911
  %v2272 = vsel %vm2267, %v2207, %v913
  %v2273 = vsel %vm2267, %v2208, %v915
  %v2274 = vsel %vm2267, %v2209, %v917
  %v2275 = vsel %vm2267, %v2210, %v919
  %v2276 = vsel %vm2267, %v2211, %v921
  %v2277 = vsel %vm2267, %v2212, %v923
  %v2278 = vsel %vm2267, %v2213, %v925
  %v2279 = vsel %vm2267, %v2214, %v927
  %v2280 = vsel %vm2267, %v2215, %v929
  %v2281 = vsel %vm2267, %v2216, %v931
  %v2282 = vsel %vm2267, %v2217, %v933
  %v2283 = vsel %vm2267, %v2218, %v935
  %v2284 = vsel %vm2267, %v2219, %v937
  %v2285 = vsel %vm2267, %v2220, %v939
  %v2286 = vsel %vm2267, %v2221, %v941
  %v2287 = vsel %vm2267, %v2222, %v943
  %v2288 = vsel %vm2267, %v2223, %v945
  %v2289 = vsel %vm2267, %v2224, %v947
  %v2290 = vsel %vm2267, %v2225, %v949
  %v2291 = vsel %vm2267, %v2226, %v951
  %v2292 = vsel %vm2267, %v2227, %v953
  %v2293 = vsel %vm2267, %v2228, %v955
  %v2294 = vsel %vm2267, %v2229, %v957
  %v2295 = vsel %vm2267, %v2230, %v959
  %v2296 = vsel %vm2267, %v2231, %v961
  %v2297 = vsel %vm2267, %v2232, %v963
  %v2298 = vsel %vm2267, %v2233, %v965
  %v2299 = vsel %vm2267, %v2234, %v967
  %v2300 = vsel %vm2267, %v2235, %v969
  %v2301 = vsel %vm2267, %v2236, %v971
  %v2302 = vsel %vm2267, %v2237, %v973
  %v2303 = vsel %vm2267, %v2238, %v975
  %v2304 = vsel %vm2267, %v2239, %v977
  %v2305 = vsel %vm2267, %v2240, %v979
  %v2306 = vsel %vm2267, %v2241, %v981
  %v2307 = vsel %vm2267, %v2242, %v983
  %v2308 = vsel %vm2267, %v2243, %v985
  %v2309 = vsel %vm2267, %v2244, %v987
  %v2310 = vsel %vm2267, %v2245, %v989
  %v2311 = vsel %vm2267, %v2246, %v991
  %v2312 = vsel %vm2267, %v2247, %v993
  %v2313 = vsel %vm2267, %v2248, %v995
  %v2314 = vsel %vm2267, %v2249, %v997
  %v2315 = vsel %vm2267, %v2250, %v999
  %v2316 = vsel %vm2267, %v2251, %v1001
  %v2317 = vsel %vm2267, %v2252, %v1003
  %v2318 = vsel %vm2267, %v2253, %v1005
  %v2319 = vsel %vm2267, %v2254, %v1007
  %v2320 = vsel %vm2267, %v2255, %v1009
  %v2321 = vsel %vm2267, %v2256, %v1011
  %v2322 = vsel %vm2267, %v2257, %v1013
  %v2323 = vsel %vm2267, %v2258, %v1015
  %v2324 = vsel %vm2267, %v2259, %v1017
  %v2325 = vsel %vm2267, %v2260, %v1019
  %v2326 = vsel %vm2267, %v2261, %v1021
  %v2327 = vsel %vm2267, %v2262, %v1023
  %v2328 = vsel %vm2267, %v2263, %v1025
  %v2329 = vsel %vm2267, %v2264, %v1027
  %v2330 = vsel %vm2267, %v2265, %v1029
  %v2331 = vsel %vm2267, %v2266, %v1031
  %vm2332 = vcmask 130048
  %v2333 = vsel %vm2332, %v2268, %v1161
  %v2334 = vsel %vm2332, %v2269, %v1163
  %v2335 = vsel %vm2332, %v2270, %v1165
  %v2336 = vsel %vm2332, %v2271, %v1167
  %v2337 = vsel %vm2332, %v2272, %v1169
  %v2338 = vsel %vm2332, %v2273, %v1171
  %v2339 = vsel %vm2332, %v2274, %v1173
  %v2340 = vsel %vm2332, %v2275, %v1175
  %v2341 = vsel %vm2332, %v2276, %v1177
  %v2342 = vsel %vm2332, %v2277, %v1179
  %v2343 = vsel %vm2332, %v2278, %v1181
  %v2344 = vsel %vm2332, %v2279, %v1183
  %v2345 = vsel %vm2332, %v2280, %v1185
  %v2346 = vsel %vm2332, %v2281, %v1187
  %v2347 = vsel %vm2332, %v2282, %v1189
  %v2348 = vsel %vm2332, %v2283, %v1191
  %v2349 = vsel %vm2332, %v2284, %v1193
  %v2350 = vsel %vm2332, %v2285, %v1195
  %v2351 = vsel %vm2332, %v2286, %v1197
  %v2352 = vsel %vm2332, %v2287, %v1199
  %v2353 = vsel %vm2332, %v2288, %v1201
  %v2354 = vsel %vm2332, %v2289, %v1203
  %v2355 = vsel %vm2332, %v2290, %v1205
  %v2356 = vsel %vm2332, %v2291, %v1207
  %v2357 = vsel %vm2332, %v2292, %v1209
  %v2358 = vsel %vm2332, %v2293, %v1211
  %v2359 = vsel %vm2332, %v2294, %v1213
  %v2360 = vsel %vm2332, %v2295, %v1215
  %v2361 = vsel %vm2332, %v2296, %v1217
  %v2362 = vsel %vm2332, %v2297, %v1219
  %v2363 = vsel %vm2332, %v2298, %v1221
  %v2364 = vsel %vm2332, %v2299, %v1223
  %v2365 = vsel %vm2332, %v2300, %v1225
  %v2366 = vsel %vm2332, %v2301, %v1227
  %v2367 = vsel %vm2332, %v2302, %v1229
  %v2368 = vsel %vm2332, %v2303, %v1231
  %v2369 = vsel %vm2332, %v2304, %v1233
  %v2370 = vsel %vm2332, %v2305, %v1235
  %v2371 = vsel %vm2332, %v2306, %v1237
  %v2372 = vsel %vm2332, %v2307, %v1239
  %v2373 = vsel %vm2332, %v2308, %v1241
  %v2374 = vsel %vm2332, %v2309, %v1243
  %v2375 = vsel %vm2332, %v2310, %v1245
  %v2376 = vsel %vm2332, %v2311, %v1247
  %v2377 = vsel %vm2332, %v2312, %v1249
  %v2378 = vsel %vm2332, %v2313, %v1251
  %v2379 = vsel %vm2332, %v2314, %v1253
  %v2380 = vsel %vm2332, %v2315, %v1255
  %v2381 = vsel %vm2332, %v2316, %v1257
  %v2382 = vsel %vm2332, %v2317, %v1259
  %v2383 = vsel %vm2332, %v2318, %v1261
  %v2384 = vsel %vm2332, %v2319, %v1263
  %v2385 = vsel %vm2332, %v2320, %v1265
  %v2386 = vsel %vm2332, %v2321, %v1267
  %v2387 = vsel %vm2332, %v2322, %v1269
  %v2388 = vsel %vm2332, %v2323, %v1271
  %v2389 = vsel %vm2332, %v2324, %v1273
  %v2390 = vsel %vm2332, %v2325, %v1275
  %v2391 = vsel %vm2332, %v2326, %v1277
  %v2392 = vsel %vm2332, %v2327, %v1279
  %v2393 = vsel %vm2332, %v2328, %v1281
  %v2394 = vsel %vm2332, %v2329, %v1283
  %v2395 = vsel %vm2332, %v2330, %v1285
  %v2396 = vsel %vm2332, %v2331, %v1287
  %vm2397 = vcmask 162816
  %v2398 = vsel %vm2397, %v2333, %v1354
  %v2399 = vsel %vm2397, %v2334, %v1356
  %v2400 = vsel %vm2397, %v2335, %v1358
  %v2401 = vsel %vm2397, %v2336, %v1360
  %v2402 = vsel %vm2397, %v2337, %v1362
  %v2403 = vsel %vm2397, %v2338, %v1364
  %v2404 = vsel %vm2397, %v2339, %v1366
  %v2405 = vsel %vm2397, %v2340, %v1368
  %v2406 = vsel %vm2397, %v2341, %v1370
  %v2407 = vsel %vm2397, %v2342, %v1372
  %v2408 = vsel %vm2397, %v2343, %v1374
  %v2409 = vsel %vm2397, %v2344, %v1376
  %v2410 = vsel %vm2397, %v2345, %v1378
  %v2411 = vsel %vm2397, %v2346, %v1380
  %v2412 = vsel %vm2397, %v2347, %v1382
  %v2413 = vsel %vm2397, %v2348, %v1384
  %v2414 = vsel %vm2397, %v2349, %v1386
  %v2415 = vsel %vm2397, %v2350, %v1388
  %v2416 = vsel %vm2397, %v2351, %v1390
  %v2417 = vsel %vm2397, %v2352, %v1392
  %v2418 = vsel %vm2397, %v2353, %v1394
  %v2419 = vsel %vm2397, %v2354, %v1396
  %v2420 = vsel %vm2397, %v2355, %v1398
  %v2421 = vsel %vm2397, %v2356, %v1400
  %v2422 = vsel %vm2397, %v2357, %v1402
  %v2423 = vsel %vm2397, %v2358, %v1404
  %v2424 = vsel %vm2397, %v2359, %v1406
  %v2425 = vsel %vm2397, %v2360, %v1408
  %v2426 = vsel %vm2397, %v2361, %v1410
  %v2427 = vsel %vm2397, %v2362, %v1412
  %v2428 = vsel %vm2397, %v2363, %v1414
  %v2429 = vsel %vm2397, %v2364, %v1416
  %v2430 = vsel %vm2397, %v2365, %v1418
  %v2431 = vsel %vm2397, %v2366, %v1420
  %v2432 = vsel %vm2397, %v2367, %v1422
  %v2433 = vsel %vm2397, %v2368, %v1424
  %v2434 = vsel %vm2397, %v2369, %v1426
  %v2435 = vsel %vm2397, %v2370, %v1428
  %v2436 = vsel %vm2397, %v2371, %v1430
  %v2437 = vsel %vm2397, %v2372, %v1432
  %v2438 = vsel %vm2397, %v2373, %v1434
  %v2439 = vsel %vm2397, %v2374, %v1436
  %v2440 = vsel %vm2397, %v2375, %v1438
  %v2441 = vsel %vm2397, %v2376, %v1440
  %v2442 = vsel %vm2397, %v2377, %v1442
  %v2443 = vsel %vm2397, %v2378, %v1444
  %v2444 = vsel %vm2397, %v2379, %v1446
  %v2445 = vsel %vm2397, %v2380, %v1448
  %v2446 = vsel %vm2397, %v2381, %v1450
  %v2447 = vsel %vm2397, %v2382, %v1452
  %v2448 = vsel %vm2397, %v2383, %v1454
  %v2449 = vsel %vm2397, %v2384, %v1456
  %v2450 = vsel %vm2397, %v2385, %v1458
  %v2451 = vsel %vm2397, %v2386, %v1460
  %v2452 = vsel %vm2397, %v2387, %v1462
  %v2453 = vsel %vm2397, %v2388, %v1464
  %v2454 = vsel %vm2397, %v2389, %v1466
  %v2455 = vsel %vm2397, %v2390, %v1468
  %v2456 = vsel %vm2397, %v2391, %v1470
  %v2457 = vsel %vm2397, %v2392, %v1472
  %v2458 = vsel %vm2397, %v2393, %v1474
  %v2459 = vsel %vm2397, %v2394, %v1476
  %v2460 = vsel %vm2397, %v2395, %v1478
  %v2461 = vsel %vm2397, %v2396, %v1480
  %vm2462 = vcmask 195584
  %v2463 = vsel %vm2462, %v2398, %v1553
  %v2464 = vsel %vm2462, %v2399, %v1555
  %v2465 = vsel %vm2462, %v2400, %v1557
  %v2466 = vsel %vm2462, %v2401, %v1559
  %v2467 = vsel %vm2462, %v2402, %v1561
  %v2468 = vsel %vm2462, %v2403, %v1563
  %v2469 = vsel %vm2462, %v2404, %v1565
  %v2470 = vsel %vm2462, %v2405, %v1567
  %v2471 = vsel %vm2462, %v2406, %v1569
  %v2472 = vsel %vm2462, %v2407, %v1571
  %v2473 = vsel %vm2462, %v2408, %v1573
  %v2474 = vsel %vm2462, %v2409, %v1575
  %v2475 = vsel %vm2462, %v2410, %v1577
  %v2476 = vsel %vm2462, %v2411, %v1579
  %v2477 = vsel %vm2462, %v2412, %v1581
  %v2478 = vsel %vm2462, %v2413, %v1583
  %v2479 = vsel %vm2462, %v2414, %v1585
  %v2480 = vsel %vm2462, %v2415, %v1587
  %v2481 = vsel %vm2462, %v2416, %v1589
  %v2482 = vsel %vm2462, %v2417, %v1591
  %v2483 = vsel %vm2462, %v2418, %v1593
  %v2484 = vsel %vm2462, %v2419, %v1595
  %v2485 = vsel %vm2462, %v2420, %v1597
  %v2486 = vsel %vm2462, %v2421, %v1599
  %v2487 = vsel %vm2462, %v2422, %v1601
  %v2488 = vsel %vm2462, %v2423, %v1603
  %v2489 = vsel %vm2462, %v2424, %v1605
  %v2490 = vsel %vm2462, %v2425, %v1607
  %v2491 = vsel %vm2462, %v2426, %v1609
  %v2492 = vsel %vm2462, %v2427, %v1611
  %v2493 = vsel %vm2462, %v2428, %v1613
  %v2494 = vsel %vm2462, %v2429, %v1615
  %v2495 = vsel %vm2462, %v2430, %v1617
  %v2496 = vsel %vm2462, %v2431, %v1619
  %v2497 = vsel %vm2462, %v2432, %v1621
  %v2498 = vsel %vm2462, %v2433, %v1623
  %v2499 = vsel %vm2462, %v2434, %v1625
  %v2500 = vsel %vm2462, %v2435, %v1627
  %v2501 = vsel %vm2462, %v2436, %v1629
  %v2502 = vsel %vm2462, %v2437, %v1631
  %v2503 = vsel %vm2462, %v2438, %v1633
  %v2504 = vsel %vm2462, %v2439, %v1635
  %v2505 = vsel %vm2462, %v2440, %v1637
  %v2506 = vsel %vm2462, %v2441, %v1639
  %v2507 = vsel %vm2462, %v2442, %v1641
  %v2508 = vsel %vm2462, %v2443, %v1643
  %v2509 = vsel %vm2462, %v2444, %v1645
  %v2510 = vsel %vm2462, %v2445, %v1647
  %v2511 = vsel %vm2462, %v2446, %v1649
  %v2512 = vsel %vm2462, %v2447, %v1651
  %v2513 = vsel %vm2462, %v2448, %v1653
  %v2514 = vsel %vm2462, %v2449, %v1655
  %v2515 = vsel %vm2462, %v2450, %v1657
  %v2516 = vsel %vm2462, %v2451, %v1659
  %v2517 = vsel %vm2462, %v2452, %v1661
  %v2518 = vsel %vm2462, %v2453, %v1663
  %v2519 = vsel %vm2462, %v2454, %v1665
  %v2520 = vsel %vm2462, %v2455, %v1667
  %v2521 = vsel %vm2462, %v2456, %v1669
  %v2522 = vsel %vm2462, %v2457, %v1671
  %v2523 = vsel %vm2462, %v2458, %v1673
  %v2524 = vsel %vm2462, %v2459, %v1675
  %v2525 = vsel %vm2462, %v2460, %v1677
  %v2526 = vsel %vm2462, %v2461, %v1679
  %vm2527 = vcmask 228352
  %v2528 = vsel %vm2527, %v2463, %v1753
  %v2529 = vsel %vm2527, %v2464, %v1755
  %v2530 = vsel %vm2527, %v2465, %v1757
  %v2531 = vsel %vm2527, %v2466, %v1759
  %v2532 = vsel %vm2527, %v2467, %v1761
  %v2533 = vsel %vm2527, %v2468, %v1763
  %v2534 = vsel %vm2527, %v2469, %v1765
  %v2535 = vsel %vm2527, %v2470, %v1767
  %v2536 = vsel %vm2527, %v2471, %v1769
  %v2537 = vsel %vm2527, %v2472, %v1771
  %v2538 = vsel %vm2527, %v2473, %v1773
  %v2539 = vsel %vm2527, %v2474, %v1775
  %v2540 = vsel %vm2527, %v2475, %v1777
  %v2541 = vsel %vm2527, %v2476, %v1779
  %v2542 = vsel %vm2527, %v2477, %v1781
  %v2543 = vsel %vm2527, %v2478, %v1783
  %v2544 = vsel %vm2527, %v2479, %v1785
  %v2545 = vsel %vm2527, %v2480, %v1787
  %v2546 = vsel %vm2527, %v2481, %v1789
  %v2547 = vsel %vm2527, %v2482, %v1791
  %v2548 = vsel %vm2527, %v2483, %v1793
  %v2549 = vsel %vm2527, %v2484, %v1795
  %v2550 = vsel %vm2527, %v2485, %v1797
  %v2551 = vsel %vm2527, %v2486, %v1799
  %v2552 = vsel %vm2527, %v2487, %v1801
  %v2553 = vsel %vm2527, %v2488, %v1803
  %v2554 = vsel %vm2527, %v2489, %v1805
  %v2555 = vsel %vm2527, %v2490, %v1807
  %v2556 = vsel %vm2527, %v2491, %v1809
  %v2557 = vsel %vm2527, %v2492, %v1811
  %v2558 = vsel %vm2527, %v2493, %v1813
  %v2559 = vsel %vm2527, %v2494, %v1815
  %v2560 = vsel %vm2527, %v2495, %v1817
  %v2561 = vsel %vm2527, %v2496, %v1819
  %v2562 = vsel %vm2527, %v2497, %v1821
  %v2563 = vsel %vm2527, %v2498, %v1823
  %v2564 = vsel %vm2527, %v2499, %v1825
  %v2565 = vsel %vm2527, %v2500, %v1827
  %v2566 = vsel %vm2527, %v2501, %v1829
  %v2567 = vsel %vm2527, %v2502, %v1831
  %v2568 = vsel %vm2527, %v2503, %v1833
  %v2569 = vsel %vm2527, %v2504, %v1835
  %v2570 = vsel %vm2527, %v2505, %v1837
  %v2571 = vsel %vm2527, %v2506, %v1839
  %v2572 = vsel %vm2527, %v2507, %v1841
  %v2573 = vsel %vm2527, %v2508, %v1843
  %v2574 = vsel %vm2527, %v2509, %v1845
  %v2575 = vsel %vm2527, %v2510, %v1847
  %v2576 = vsel %vm2527, %v2511, %v1849
  %v2577 = vsel %vm2527, %v2512, %v1851
  %v2578 = vsel %vm2527, %v2513, %v1853
  %v2579 = vsel %vm2527, %v2514, %v1855
  %v2580 = vsel %vm2527, %v2515, %v1857
  %v2581 = vsel %vm2527, %v2516, %v1859
  %v2582 = vsel %vm2527, %v2517, %v1861
  %v2583 = vsel %vm2527, %v2518, %v1863
  %v2584 = vsel %vm2527, %v2519, %v1865
  %v2585 = vsel %vm2527, %v2520, %v1867
  %v2586 = vsel %vm2527, %v2521, %v1869
  %v2587 = vsel %vm2527, %v2522, %v1871
  %v2588 = vsel %vm2527, %v2523, %v1873
  %v2589 = vsel %vm2527, %v2524, %v1875
  %v2590 = vsel %vm2527, %v2525, %v1877
  %v2591 = vsel %vm2527, %v2526, %v1879
  %vm2592 = vcmask 261120
  %v2593 = vsel %vm2592, %v2528, %v1946
  %v2594 = vsel %vm2592, %v2529, %v1948
  %v2595 = vsel %vm2592, %v2530, %v1950
  %v2596 = vsel %vm2592, %v2531, %v1952
  %v2597 = vsel %vm2592, %v2532, %v1954
  %v2598 = vsel %vm2592, %v2533, %v1956
  %v2599 = vsel %vm2592, %v2534, %v1958
  %v2600 = vsel %vm2592, %v2535, %v1960
  %v2601 = vsel %vm2592, %v2536, %v1962
  %v2602 = vsel %vm2592, %v2537, %v1964
  %v2603 = vsel %vm2592, %v2538, %v1966
  %v2604 = vsel %vm2592, %v2539, %v1968
  %v2605 = vsel %vm2592, %v2540, %v1970
  %v2606 = vsel %vm2592, %v2541, %v1972
  %v2607 = vsel %vm2592, %v2542, %v1974
  %v2608 = vsel %vm2592, %v2543, %v1976
  %v2609 = vsel %vm2592, %v2544, %v1978
  %v2610 = vsel %vm2592, %v2545, %v1980
  %v2611 = vsel %vm2592, %v2546, %v1982
  %v2612 = vsel %vm2592, %v2547, %v1984
  %v2613 = vsel %vm2592, %v2548, %v1986
  %v2614 = vsel %vm2592, %v2549, %v1988
  %v2615 = vsel %vm2592, %v2550, %v1990
  %v2616 = vsel %vm2592, %v2551, %v1992
  %v2617 = vsel %vm2592, %v2552, %v1994
  %v2618 = vsel %vm2592, %v2553, %v1996
  %v2619 = vsel %vm2592, %v2554, %v1998
  %v2620 = vsel %vm2592, %v2555, %v2000
  %v2621 = vsel %vm2592, %v2556, %v2002
  %v2622 = vsel %vm2592, %v2557, %v2004
  %v2623 = vsel %vm2592, %v2558, %v2006
  %v2624 = vsel %vm2592, %v2559, %v2008
  %v2625 = vsel %vm2592, %v2560, %v2010
  %v2626 = vsel %vm2592, %v2561, %v2012
  %v2627 = vsel %vm2592, %v2562, %v2014
  %v2628 = vsel %vm2592, %v2563, %v2016
  %v2629 = vsel %vm2592, %v2564, %v2018
  %v2630 = vsel %vm2592, %v2565, %v2020
  %v2631 = vsel %vm2592, %v2566, %v2022
  %v2632 = vsel %vm2592, %v2567, %v2024
  %v2633 = vsel %vm2592, %v2568, %v2026
  %v2634 = vsel %vm2592, %v2569, %v2028
  %v2635 = vsel %vm2592, %v2570, %v2030
  %v2636 = vsel %vm2592, %v2571, %v2032
  %v2637 = vsel %vm2592, %v2572, %v2034
  %v2638 = vsel %vm2592, %v2573, %v2036
  %v2639 = vsel %vm2592, %v2574, %v2038
  %v2640 = vsel %vm2592, %v2575, %v2040
  %v2641 = vsel %vm2592, %v2576, %v2042
  %v2642 = vsel %vm2592, %v2577, %v2044
  %v2643 = vsel %vm2592, %v2578, %v2046
  %v2644 = vsel %vm2592, %v2579, %v2048
  %v2645 = vsel %vm2592, %v2580, %v2050
  %v2646 = vsel %vm2592, %v2581, %v2052
  %v2647 = vsel %vm2592, %v2582, %v2054
  %v2648 = vsel %vm2592, %v2583, %v2056
  %v2649 = vsel %vm2592, %v2584, %v2058
  %v2650 = vsel %vm2592, %v2585, %v2060
  %v2651 = vsel %vm2592, %v2586, %v2062
  %v2652 = vsel %vm2592, %v2587, %v2064
  %v2653 = vsel %vm2592, %v2588, %v2066
  %v2654 = vsel %vm2592, %v2589, %v2068
  %v2655 = vsel %vm2592, %v2590, %v2070
  %v2656 = vsel %vm2592, %v2591, %v2072
  %v2657 = vpack.c.bf16 %v2594, %v2593
  %v2658 = vpack.c.bf16 %v2596, %v2595
  %v2659 = vpack.c.bf16 %v2598, %v2597
  %v2660 = vpack.c.bf16 %v2600, %v2599
  %v2661 = vpack.c.bf16 %v2602, %v2601
  %v2662 = vpack.c.bf16 %v2604, %v2603
  %v2663 = vpack.c.bf16 %v2606, %v2605
  %v2664 = vpack.c.bf16 %v2608, %v2607
  %v2665 = vpack.c.bf16 %v2610, %v2609
  %v2666 = vpack.c.bf16 %v2612, %v2611
  %v2667 = vpack.c.bf16 %v2614, %v2613
  %v2668 = vpack.c.bf16 %v2616, %v2615
  %v2669 = vpack.c.bf16 %v2618, %v2617
  %v2670 = vpack.c.bf16 %v2620, %v2619
  %v2671 = vpack.c.bf16 %v2622, %v2621
  %v2672 = vpack.c.bf16 %v2624, %v2623
  %v2673 = vpack.c.bf16 %v2626, %v2625
  %v2674 = vpack.c.bf16 %v2628, %v2627
  %v2675 = vpack.c.bf16 %v2630, %v2629
  %v2676 = vpack.c.bf16 %v2632, %v2631
  %v2677 = vpack.c.bf16 %v2634, %v2633
  %v2678 = vpack.c.bf16 %v2636, %v2635
  %v2679 = vpack.c.bf16 %v2638, %v2637
  %v2680 = vpack.c.bf16 %v2640, %v2639
  %v2681 = vpack.c.bf16 %v2642, %v2641
  %v2682 = vpack.c.bf16 %v2644, %v2643
  %v2683 = vpack.c.bf16 %v2646, %v2645
  %v2684 = vpack.c.bf16 %v2648, %v2647
  %v2685 = vpack.c.bf16 %v2650, %v2649
  %v2686 = vpack.c.bf16 %v2652, %v2651
  %v2687 = vpack.c.bf16 %v2654, %v2653
  %v2688 = vpack.c.bf16 %v2656, %v2655
  %v2689 = vld [vmem:[%s1] sm:$0xf]
  %v2690 = vld [vmem:[%s1 + $0x4] sm:$0xf]
  %v2691 = vld [vmem:[%s1 + $0x8] sm:$0xf]
  %v2692 = vld [vmem:[%s1 + $0xc] sm:$0xf]
  %v2693 = vld [vmem:[%s1 + $0x10] sm:$0x3]
  %v2694 = vld [vmem:[%s2] sm:$0x1]
  %v2696 = vlaneseq
  %v2697 = vshrl.u32 %v2696, 7
  %v2698 = vsub.s32 0, %v2697
  %v2699 = vrot.slane %v2694, %v2698
  %v2706 = vunpack.c.l.b16 %v2689
  %v2707 = vunpack.c.l.b16 %v2690
  %v2708 = vunpack.c.l.b16 %v2691
  %v2709 = vunpack.c.l.b16 %v2692
  %v2710 = vunpack.c.l.b16 %v2693
  %v2711 = vpack.c.b16 %v2707, %v2706
  %v2712 = vpack.c.b16 %v2709, %v2708
  %v2713 = vpack.c.b16 %v2710, %v2710
  %vm2716 = vcmask 293888
  %v2718 = vsel %vm2716, %v2657, 0
  %v2721 = vsel %vm2716, %v2658, 0
  %v2724 = vsel %vm2716, %v2659, 0
  %v2727 = vsel %vm2716, %v2660, 0
  %v2730 = vsel %vm2716, %v2661, 0
  %v2733 = vsel %vm2716, %v2662, 0
  %v2736 = vsel %vm2716, %v2663, 0
  %v2739 = vsel %vm2716, %v2664, 0
  %v2742 = vsel %vm2716, %v2665, 0
  %v2745 = vsel %vm2716, %v2666, 0
  %v2748 = vsel %vm2716, %v2667, 0
  %v2751 = vsel %vm2716, %v2668, 0
  %v2754 = vsel %vm2716, %v2669, 0
  %v2757 = vsel %vm2716, %v2670, 0
  %v2760 = vsel %vm2716, %v2671, 0
  %v2763 = vsel %vm2716, %v2672, 0
  %v2766 = vsel %vm2716, %v2673, 0
  %v2769 = vsel %vm2716, %v2674, 0
  %v2772 = vsel %vm2716, %v2675, 0
  %v2775 = vsel %vm2716, %v2676, 0
  %v2778 = vsel %vm2716, %v2677, 0
  %v2781 = vsel %vm2716, %v2678, 0
  %v2784 = vsel %vm2716, %v2679, 0
  %v2787 = vsel %vm2716, %v2680, 0
  %v2790 = vsel %vm2716, %v2681, 0
  %v2793 = vsel %vm2716, %v2682, 0
  %v2796 = vsel %vm2716, %v2683, 0
  %v2799 = vsel %vm2716, %v2684, 0
  %v2802 = vsel %vm2716, %v2685, 0
  %v2805 = vsel %vm2716, %v2686, 0
  %v2808 = vsel %vm2716, %v2687, 0
  %v2811 = vsel %vm2716, %v2688, 0
  %vm2813 = vcmask 1041408
  %v2815 = vsel %vm2813, %v2713, 0
  %2817 = vmatprep.subr.bf16.mxu0 0
  %2818 = vmatpush1.bf16.msra.mxu0 0
  %2819 = vmatprep.subr.bf16.mxu0 0
  %2820 = vmatpush1.bf16.msra.mxu0 0
  %2821 = vmatprep.subr.bf16.mxu0 0
  %2822 = vmatpush1.bf16.msra.mxu0 0
  %2823 = vmatprep.subr.bf16.mxu0 0
  %2824 = vmatpush1.bf16.msra.mxu0 0
  %2825 = vmatprep.subr.bf16.mxu0 0
  %2826 = vmatpush1.bf16.msra.mxu0 0
  %2827 = vmatprep.subr.bf16.mxu0 0
  %2828 = vmatpush1.bf16.msra.mxu0 %v2815
  %2829 = vmatprep.subr.bf16.mxu0 0
  %2830 = vmatpush1.bf16.msra.mxu0 %v2712
  %2831 = vmatprep.subr.bf16.mxu0 0
  %2832 = vmatpush1.bf16.msra.mxu0 %v2711
  %2833 = vmatprep.subr.bf16.mxu0 0
  %2834 = vmatpush2.bf16.msra.mxu0 0
  %2835 = vmatprep.subr.bf16.mxu0 0
  %2836 = vmatpush2.bf16.msra.mxu0 0
  %2837 = vmatprep.subr.bf16.mxu0 0
  %2838 = vmatpush2.bf16.msra.mxu0 0
  %2839 = vmatprep.subr.bf16.mxu0 0
  %2840 = vmatpush2.bf16.msra.mxu0 0
  %2841 = vmatprep.subr.bf16.mxu0 0
  %2842 = vmatpush2.bf16.msra.mxu0 0
  %2843 = vmatprep.subr.bf16.mxu0 0
  %2844 = vmatpush2.bf16.msra.mxu0 0
  %2845 = vmatprep.subr.bf16.mxu0 0
  %2846 = vmatpush2.bf16.msra.mxu0 0
  %2847 = vmatprep.subr.bf16.mxu0 0
  %2848 = vmatpush2.bf16.msra.mxu0 0
  %2849 = vmatprep.mubr.bf16.mxu0 0
  %2850 = vmatmul.mubr.bf16.gmra.mxu0 %v2718
  %v2851 = vpop.f32.mrf.mxu0
  %v2852 = vadd.f32 %v2699, %v2851
  %v2853 = vpop.f32.mrf.mxu0
  %v2854 = vpop.f32.mrf.mxu0
  %v2855 = vadd.f32 %v2699, %v2854
  %v2856 = vpop.f32.mrf.mxu0
  %2857 = vmatprep.mubr.bf16.mxu0 0
  %2858 = vmatmul.mubr.bf16.gmra.mxu0 %v2721
  %v2859 = vpop.f32.mrf.mxu0
  %v2860 = vadd.f32 %v2699, %v2859
  %v2861 = vpop.f32.mrf.mxu0
  %v2862 = vpop.f32.mrf.mxu0
  %v2863 = vadd.f32 %v2699, %v2862
  %v2864 = vpop.f32.mrf.mxu0
  %2865 = vmatprep.mubr.bf16.mxu0 0
  %2866 = vmatmul.mubr.bf16.gmra.mxu0 %v2724
  %v2867 = vpop.f32.mrf.mxu0
  %v2868 = vadd.f32 %v2699, %v2867
  %v2869 = vpop.f32.mrf.mxu0
  %v2870 = vpop.f32.mrf.mxu0
  %v2871 = vadd.f32 %v2699, %v2870
  %v2872 = vpop.f32.mrf.mxu0
  %2873 = vmatprep.mubr.bf16.mxu0 0
  %2874 = vmatmul.mubr.bf16.gmra.mxu0 %v2727
  %v2875 = vpop.f32.mrf.mxu0
  %v2876 = vadd.f32 %v2699, %v2875
  %v2877 = vpop.f32.mrf.mxu0
  %v2878 = vpop.f32.mrf.mxu0
  %v2879 = vadd.f32 %v2699, %v2878
  %v2880 = vpop.f32.mrf.mxu0
  %2881 = vmatprep.mubr.bf16.mxu0 0
  %2882 = vmatmul.mubr.bf16.gmra.mxu0 %v2730
  %v2883 = vpop.f32.mrf.mxu0
  %v2884 = vadd.f32 %v2699, %v2883
  %v2885 = vpop.f32.mrf.mxu0
  %v2886 = vpop.f32.mrf.mxu0
  %v2887 = vadd.f32 %v2699, %v2886
  %v2888 = vpop.f32.mrf.mxu0
  %2889 = vmatprep.mubr.bf16.mxu0 0
  %2890 = vmatmul.mubr.bf16.gmra.mxu0 %v2733
  %v2891 = vpop.f32.mrf.mxu0
  %v2892 = vadd.f32 %v2699, %v2891
  %v2893 = vpop.f32.mrf.mxu0
  %v2894 = vpop.f32.mrf.mxu0
  %v2895 = vadd.f32 %v2699, %v2894
  %v2896 = vpop.f32.mrf.mxu0
  %2897 = vmatprep.mubr.bf16.mxu0 0
  %2898 = vmatmul.mubr.bf16.gmra.mxu0 %v2736
  %v2899 = vpop.f32.mrf.mxu0
  %v2900 = vadd.f32 %v2699, %v2899
  %v2901 = vpop.f32.mrf.mxu0
  %v2902 = vpop.f32.mrf.mxu0
  %v2903 = vadd.f32 %v2699, %v2902
  %v2904 = vpop.f32.mrf.mxu0
  %2905 = vmatprep.mubr.bf16.mxu0 0
  %2906 = vmatmul.mubr.bf16.gmra.mxu0 %v2739
  %v2907 = vpop.f32.mrf.mxu0
  %v2908 = vadd.f32 %v2699, %v2907
  %v2909 = vpop.f32.mrf.mxu0
  %v2910 = vpop.f32.mrf.mxu0
  %v2911 = vadd.f32 %v2699, %v2910
  %v2912 = vpop.f32.mrf.mxu0
  %2913 = vmatprep.mubr.bf16.mxu0 0
  %2914 = vmatmul.mubr.bf16.gmra.mxu0 %v2742
  %v2915 = vpop.f32.mrf.mxu0
  %v2916 = vadd.f32 %v2699, %v2915
  %v2917 = vpop.f32.mrf.mxu0
  %v2918 = vpop.f32.mrf.mxu0
  %v2919 = vadd.f32 %v2699, %v2918
  %v2920 = vpop.f32.mrf.mxu0
  %2921 = vmatprep.mubr.bf16.mxu0 0
  %2922 = vmatmul.mubr.bf16.gmra.mxu0 %v2745
  %v2923 = vpop.f32.mrf.mxu0
  %v2924 = vadd.f32 %v2699, %v2923
  %v2925 = vpop.f32.mrf.mxu0
  %v2926 = vpop.f32.mrf.mxu0
  %v2927 = vadd.f32 %v2699, %v2926
  %v2928 = vpop.f32.mrf.mxu0
  %2929 = vmatprep.mubr.bf16.mxu0 0
  %2930 = vmatmul.mubr.bf16.gmra.mxu0 %v2748
  %v2931 = vpop.f32.mrf.mxu0
  %v2932 = vadd.f32 %v2699, %v2931
  %v2933 = vpop.f32.mrf.mxu0
  %v2934 = vpop.f32.mrf.mxu0
  %v2935 = vadd.f32 %v2699, %v2934
  %v2936 = vpop.f32.mrf.mxu0
  %2937 = vmatprep.mubr.bf16.mxu0 0
  %2938 = vmatmul.mubr.bf16.gmra.mxu0 %v2751
  %v2939 = vpop.f32.mrf.mxu0
  %v2940 = vadd.f32 %v2699, %v2939
  %v2941 = vpop.f32.mrf.mxu0
  %v2942 = vpop.f32.mrf.mxu0
  %v2943 = vadd.f32 %v2699, %v2942
  %v2944 = vpop.f32.mrf.mxu0
  %2945 = vmatprep.mubr.bf16.mxu0 0
  %2946 = vmatmul.mubr.bf16.gmra.mxu0 %v2754
  %v2947 = vpop.f32.mrf.mxu0
  %v2948 = vadd.f32 %v2699, %v2947
  %v2949 = vpop.f32.mrf.mxu0
  %v2950 = vpop.f32.mrf.mxu0
  %v2951 = vadd.f32 %v2699, %v2950
  %v2952 = vpop.f32.mrf.mxu0
  %2953 = vmatprep.mubr.bf16.mxu0 0
  %2954 = vmatmul.mubr.bf16.gmra.mxu0 %v2757
  %v2955 = vpop.f32.mrf.mxu0
  %v2956 = vadd.f32 %v2699, %v2955
  %v2957 = vpop.f32.mrf.mxu0
  %v2958 = vpop.f32.mrf.mxu0
  %v2959 = vadd.f32 %v2699, %v2958
  %v2960 = vpop.f32.mrf.mxu0
  %2961 = vmatprep.mubr.bf16.mxu0 0
  %2962 = vmatmul.mubr.bf16.gmra.mxu0 %v2760
  %v2963 = vpop.f32.mrf.mxu0
  %v2964 = vadd.f32 %v2699, %v2963
  %v2965 = vpop.f32.mrf.mxu0
  %v2966 = vpop.f32.mrf.mxu0
  %v2967 = vadd.f32 %v2699, %v2966
  %v2968 = vpop.f32.mrf.mxu0
  %2969 = vmatprep.mubr.bf16.mxu0 0
  %2970 = vmatmul.mubr.bf16.gmra.mxu0 %v2763
  %v2971 = vpop.f32.mrf.mxu0
  %v2972 = vadd.f32 %v2699, %v2971
  %v2973 = vpop.f32.mrf.mxu0
  %v2974 = vpop.f32.mrf.mxu0
  %v2975 = vadd.f32 %v2699, %v2974
  %v2976 = vpop.f32.mrf.mxu0
  %2977 = vmatprep.mubr.bf16.mxu0 0
  %2978 = vmatmul.mubr.bf16.gmra.mxu0 %v2766
  %v2979 = vpop.f32.mrf.mxu0
  %v2980 = vadd.f32 %v2699, %v2979
  %v2981 = vpop.f32.mrf.mxu0
  %v2982 = vpop.f32.mrf.mxu0
  %v2983 = vadd.f32 %v2699, %v2982
  %v2984 = vpop.f32.mrf.mxu0
  %2985 = vmatprep.mubr.bf16.mxu0 0
  %2986 = vmatmul.mubr.bf16.gmra.mxu0 %v2769
  %v2987 = vpop.f32.mrf.mxu0
  %v2988 = vadd.f32 %v2699, %v2987
  %v2989 = vpop.f32.mrf.mxu0
  %v2990 = vpop.f32.mrf.mxu0
  %v2991 = vadd.f32 %v2699, %v2990
  %v2992 = vpop.f32.mrf.mxu0
  %2993 = vmatprep.mubr.bf16.mxu0 0
  %2994 = vmatmul.mubr.bf16.gmra.mxu0 %v2772
  %v2995 = vpop.f32.mrf.mxu0
  %v2996 = vadd.f32 %v2699, %v2995
  %v2997 = vpop.f32.mrf.mxu0
  %v2998 = vpop.f32.mrf.mxu0
  %v2999 = vadd.f32 %v2699, %v2998
  %v3000 = vpop.f32.mrf.mxu0
  %3001 = vmatprep.mubr.bf16.mxu0 0
  %3002 = vmatmul.mubr.bf16.gmra.mxu0 %v2775
  %v3003 = vpop.f32.mrf.mxu0
  %v3004 = vadd.f32 %v2699, %v3003
  %v3005 = vpop.f32.mrf.mxu0
  %v3006 = vpop.f32.mrf.mxu0
  %v3007 = vadd.f32 %v2699, %v3006
  %v3008 = vpop.f32.mrf.mxu0
  %3009 = vmatprep.mubr.bf16.mxu0 0
  %3010 = vmatmul.mubr.bf16.gmra.mxu0 %v2778
  %v3011 = vpop.f32.mrf.mxu0
  %v3012 = vadd.f32 %v2699, %v3011
  %v3013 = vpop.f32.mrf.mxu0
  %v3014 = vpop.f32.mrf.mxu0
  %v3015 = vadd.f32 %v2699, %v3014
  %v3016 = vpop.f32.mrf.mxu0
  %3017 = vmatprep.mubr.bf16.mxu0 0
  %3018 = vmatmul.mubr.bf16.gmra.mxu0 %v2781
  %v3019 = vpop.f32.mrf.mxu0
  %v3020 = vadd.f32 %v2699, %v3019
  %v3021 = vpop.f32.mrf.mxu0
  %v3022 = vpop.f32.mrf.mxu0
  %v3023 = vadd.f32 %v2699, %v3022
  %v3024 = vpop.f32.mrf.mxu0
  %3025 = vmatprep.mubr.bf16.mxu0 0
  %3026 = vmatmul.mubr.bf16.gmra.mxu0 %v2784
  %v3027 = vpop.f32.mrf.mxu0
  %v3028 = vadd.f32 %v2699, %v3027
  %v3029 = vpop.f32.mrf.mxu0
  %v3030 = vpop.f32.mrf.mxu0
  %v3031 = vadd.f32 %v2699, %v3030
  %v3032 = vpop.f32.mrf.mxu0
  %3033 = vmatprep.mubr.bf16.mxu0 0
  %3034 = vmatmul.mubr.bf16.gmra.mxu0 %v2787
  %v3035 = vpop.f32.mrf.mxu0
  %v3036 = vadd.f32 %v2699, %v3035
  %v3037 = vpop.f32.mrf.mxu0
  %v3038 = vpop.f32.mrf.mxu0
  %v3039 = vadd.f32 %v2699, %v3038
  %v3040 = vpop.f32.mrf.mxu0
  %3041 = vmatprep.mubr.bf16.mxu0 0
  %3042 = vmatmul.mubr.bf16.gmra.mxu0 %v2790
  %v3043 = vpop.f32.mrf.mxu0
  %v3044 = vadd.f32 %v2699, %v3043
  %v3045 = vpop.f32.mrf.mxu0
  %v3046 = vpop.f32.mrf.mxu0
  %v3047 = vadd.f32 %v2699, %v3046
  %v3048 = vpop.f32.mrf.mxu0
  %3049 = vmatprep.mubr.bf16.mxu0 0
  %3050 = vmatmul.mubr.bf16.gmra.mxu0 %v2793
  %v3051 = vpop.f32.mrf.mxu0
  %v3052 = vadd.f32 %v2699, %v3051
  %v3053 = vpop.f32.mrf.mxu0
  %v3054 = vpop.f32.mrf.mxu0
  %v3055 = vadd.f32 %v2699, %v3054
  %v3056 = vpop.f32.mrf.mxu0
  %3057 = vmatprep.mubr.bf16.mxu0 0
  %3058 = vmatmul.mubr.bf16.gmra.mxu0 %v2796
  %v3059 = vpop.f32.mrf.mxu0
  %v3060 = vadd.f32 %v2699, %v3059
  %v3061 = vpop.f32.mrf.mxu0
  %v3062 = vpop.f32.mrf.mxu0
  %v3063 = vadd.f32 %v2699, %v3062
  %v3064 = vpop.f32.mrf.mxu0
  %3065 = vmatprep.mubr.bf16.mxu0 0
  %3066 = vmatmul.mubr.bf16.gmra.mxu0 %v2799
  %v3067 = vpop.f32.mrf.mxu0
  %v3068 = vadd.f32 %v2699, %v3067
  %v3069 = vpop.f32.mrf.mxu0
  %v3070 = vpop.f32.mrf.mxu0
  %v3071 = vadd.f32 %v2699, %v3070
  %v3072 = vpop.f32.mrf.mxu0
  %3073 = vmatprep.mubr.bf16.mxu0 0
  %3074 = vmatmul.mubr.bf16.gmra.mxu0 %v2802
  %v3075 = vpop.f32.mrf.mxu0
  %v3076 = vadd.f32 %v2699, %v3075
  %v3077 = vpop.f32.mrf.mxu0
  %v3078 = vpop.f32.mrf.mxu0
  %v3079 = vadd.f32 %v2699, %v3078
  %v3080 = vpop.f32.mrf.mxu0
  %3081 = vmatprep.mubr.bf16.mxu0 0
  %3082 = vmatmul.mubr.bf16.gmra.mxu0 %v2805
  %v3083 = vpop.f32.mrf.mxu0
  %v3084 = vpop.f32.mrf.mxu0
  %v3085 = vpop.f32.mrf.mxu0
  %v3086 = vpop.f32.mrf.mxu0
  %3087 = vmatprep.mubr.bf16.mxu0 0
  %3088 = vmatmul.mubr.bf16.gmra.mxu0 %v2808
  %v3089 = vpop.f32.mrf.mxu0
  %v3090 = vpop.f32.mrf.mxu0
  %v3091 = vpop.f32.mrf.mxu0
  %v3092 = vpop.f32.mrf.mxu0
  %3093 = vmatprep.mubr.bf16.mxu0 0
  %3094 = vmatmul.mubr.bf16.gmra.mxu0 %v2811
  %v3095 = vpop.f32.mrf.mxu0
  %v3096 = vpop.f32.mrf.mxu0
  %v3097 = vpop.f32.mrf.mxu0
  %v3098 = vpop.f32.mrf.mxu0
  %3099 = vdwg.mxu0
  %v3100 = vmax.f32 %v2852, 0.0
  %v3101 = vmax.f32 %v2855, 0.0
  %v3102 = vmax.f32 %v2860, 0.0
  %v3103 = vmax.f32 %v2863, 0.0
  %v3104 = vmax.f32 %v2868, 0.0
  %v3105 = vmax.f32 %v2871, 0.0
  %v3106 = vmax.f32 %v2876, 0.0
  %v3107 = vmax.f32 %v2879, 0.0
  %v3108 = vmax.f32 %v2884, 0.0
  %v3109 = vmax.f32 %v2887, 0.0
  %v3110 = vmax.f32 %v2892, 0.0
  %v3111 = vmax.f32 %v2895, 0.0
  %v3112 = vmax.f32 %v2900, 0.0
  %v3113 = vmax.f32 %v2903, 0.0
  %v3114 = vmax.f32 %v2908, 0.0
  %v3115 = vmax.f32 %v2911, 0.0
  %v3116 = vmax.f32 %v2916, 0.0
  %v3117 = vmax.f32 %v2919, 0.0
  %v3118 = vmax.f32 %v2924, 0.0
  %v3119 = vmax.f32 %v2927, 0.0
  %v3120 = vmax.f32 %v2932, 0.0
  %v3121 = vmax.f32 %v2935, 0.0
  %v3122 = vmax.f32 %v2940, 0.0
  %v3123 = vmax.f32 %v2943, 0.0
  %v3124 = vmax.f32 %v2948, 0.0
  %v3125 = vmax.f32 %v2951, 0.0
  %v3126 = vmax.f32 %v2956, 0.0
  %v3127 = vmax.f32 %v2959, 0.0
  %v3128 = vmax.f32 %v2964, 0.0
  %v3129 = vmax.f32 %v2967, 0.0
  %v3130 = vmax.f32 %v2972, 0.0
  %v3131 = vmax.f32 %v2975, 0.0
  %v3132 = vmax.f32 %v2980, 0.0
  %v3133 = vmax.f32 %v2983, 0.0
  %v3134 = vmax.f32 %v2988, 0.0
  %v3135 = vmax.f32 %v2991, 0.0
  %v3136 = vmax.f32 %v2996, 0.0
  %v3137 = vmax.f32 %v2999, 0.0
  %v3138 = vmax.f32 %v3004, 0.0
  %v3139 = vmax.f32 %v3007, 0.0
  %v3140 = vmax.f32 %v3012, 0.0
  %v3141 = vmax.f32 %v3015, 0.0
  %v3142 = vmax.f32 %v3020, 0.0
  %v3143 = vmax.f32 %v3023, 0.0
  %v3144 = vmax.f32 %v3028, 0.0
  %v3145 = vmax.f32 %v3031, 0.0
  %v3146 = vmax.f32 %v3036, 0.0
  %v3147 = vmax.f32 %v3039, 0.0
  %v3148 = vmax.f32 %v3044, 0.0
  %v3149 = vmax.f32 %v3047, 0.0
  %v3150 = vmax.f32 %v3052, 0.0
  %v3151 = vmax.f32 %v3055, 0.0
  %v3152 = vmax.f32 %v3060, 0.0
  %v3153 = vmax.f32 %v3063, 0.0
  %v3154 = vmax.f32 %v3068, 0.0
  %v3155 = vmax.f32 %v3071, 0.0
  %v3156 = vmax.f32 %v3076, 0.0
  %v3157 = vmax.f32 %v3079, 0.0
  %3198 = vrot.lane.b32.xlu0 %v3101, 8
  %v3199 = vpop.permute.xlu0 %3198
  %3200 = vrot.lane.b32.xlu0 %v3102, 8
  %v3201 = vpop.permute.xlu0 %3200
  %3202 = vrot.lane.b32.xlu0 %v3103, 8
  %v3203 = vpop.permute.xlu0 %3202
  %3204 = vrot.lane.b32.xlu0 %v3104, 8
  %v3205 = vpop.permute.xlu0 %3204
  %3206 = vrot.lane.b32.xlu0 %v3105, 8
  %v3207 = vpop.permute.xlu0 %3206
  %3208 = vrot.lane.b32.xlu0 %v3106, 8
  %v3209 = vpop.permute.xlu0 %3208
  %3210 = vrot.lane.b32.xlu0 %v3107, 8
  %v3211 = vpop.permute.xlu0 %3210
  %3212 = vrot.lane.b32.xlu0 %v3108, 8
  %v3213 = vpop.permute.xlu0 %3212
  %3214 = vrot.lane.b32.xlu0 %v3109, 8
  %v3215 = vpop.permute.xlu0 %3214
  %3216 = vrot.lane.b32.xlu0 %v3110, 8
  %v3217 = vpop.permute.xlu0 %3216
  %3218 = vrot.lane.b32.xlu0 %v3111, 8
  %v3219 = vpop.permute.xlu0 %3218
  %3220 = vrot.lane.b32.xlu0 %v3112, 8
  %v3221 = vpop.permute.xlu0 %3220
  %3222 = vrot.lane.b32.xlu0 %v3113, 8
  %v3223 = vpop.permute.xlu0 %3222
  %3224 = vrot.lane.b32.xlu0 %v3114, 8
  %v3225 = vpop.permute.xlu0 %3224
  %3226 = vrot.lane.b32.xlu0 %v3115, 8
  %v3227 = vpop.permute.xlu0 %3226
  %3228 = vrot.lane.b32.xlu0 %v3116, 8
  %v3229 = vpop.permute.xlu0 %3228
  %3230 = vrot.lane.b32.xlu0 %v3117, 8
  %v3231 = vpop.permute.xlu0 %3230
  %3232 = vrot.lane.b32.xlu0 %v3118, 8
  %v3233 = vpop.permute.xlu0 %3232
  %3234 = vrot.lane.b32.xlu0 %v3119, 8
  %v3235 = vpop.permute.xlu0 %3234
  %3236 = vrot.lane.b32.xlu0 %v3120, 8
  %v3237 = vpop.permute.xlu0 %3236
  %3238 = vrot.lane.b32.xlu0 %v3121, 8
  %v3239 = vpop.permute.xlu0 %3238
  %3240 = vrot.lane.b32.xlu0 %v3122, 8
  %v3241 = vpop.permute.xlu0 %3240
  %3242 = vrot.lane.b32.xlu0 %v3123, 8
  %v3243 = vpop.permute.xlu0 %3242
  %3244 = vrot.lane.b32.xlu0 %v3124, 8
  %v3245 = vpop.permute.xlu0 %3244
  %3246 = vrot.lane.b32.xlu0 %v3125, 8
  %v3247 = vpop.permute.xlu0 %3246
  %3248 = vrot.lane.b32.xlu0 %v3126, 8
  %v3249 = vpop.permute.xlu0 %3248
  %3250 = vrot.lane.b32.xlu0 %v3127, 8
  %v3251 = vpop.permute.xlu0 %3250
  %3252 = vrot.lane.b32.xlu0 %v3128, 8
  %v3253 = vpop.permute.xlu0 %3252
  %3254 = vrot.lane.b32.xlu0 %v3129, 8
  %v3255 = vpop.permute.xlu0 %3254
  %3256 = vrot.lane.b32.xlu0 %v3130, 8
  %v3257 = vpop.permute.xlu0 %3256
  %3258 = vrot.lane.b32.xlu0 %v3131, 8
  %v3259 = vpop.permute.xlu0 %3258
  %3260 = vrot.lane.b32.xlu0 %v3132, 8
  %v3261 = vpop.permute.xlu0 %3260
  %3262 = vrot.lane.b32.xlu0 %v3133, 8
  %v3263 = vpop.permute.xlu0 %3262
  %3264 = vrot.lane.b32.xlu0 %v3134, 8
  %v3265 = vpop.permute.xlu0 %3264
  %3266 = vrot.lane.b32.xlu0 %v3135, 8
  %v3267 = vpop.permute.xlu0 %3266
  %3268 = vrot.lane.b32.xlu0 %v3136, 8
  %v3269 = vpop.permute.xlu0 %3268
  %3270 = vrot.lane.b32.xlu0 %v3137, 8
  %v3271 = vpop.permute.xlu0 %3270
  %3272 = vrot.lane.b32.xlu0 %v3138, 8
  %v3273 = vpop.permute.xlu0 %3272
  %3274 = vrot.lane.b32.xlu0 %v3139, 8
  %v3275 = vpop.permute.xlu0 %3274
  %3276 = vrot.lane.b32.xlu0 %v3140, 8
  %v3277 = vpop.permute.xlu0 %3276
  %3319 = vrot.lane.b32.xlu0 %v3102, 16
  %v3320 = vpop.permute.xlu0 %3319
  %3321 = vrot.lane.b32.xlu0 %v3103, 16
  %v3322 = vpop.permute.xlu0 %3321
  %3323 = vrot.lane.b32.xlu0 %v3104, 16
  %v3324 = vpop.permute.xlu0 %3323
  %3325 = vrot.lane.b32.xlu0 %v3105, 16
  %v3326 = vpop.permute.xlu0 %3325
  %3327 = vrot.lane.b32.xlu0 %v3106, 16
  %v3328 = vpop.permute.xlu0 %3327
  %3329 = vrot.lane.b32.xlu0 %v3107, 16
  %v3330 = vpop.permute.xlu0 %3329
  %3331 = vrot.lane.b32.xlu0 %v3108, 16
  %v3332 = vpop.permute.xlu0 %3331
  %3333 = vrot.lane.b32.xlu0 %v3109, 16
  %v3334 = vpop.permute.xlu0 %3333
  %3335 = vrot.lane.b32.xlu0 %v3110, 16
  %v3336 = vpop.permute.xlu0 %3335
  %3337 = vrot.lane.b32.xlu0 %v3111, 16
  %v3338 = vpop.permute.xlu0 %3337
  %3339 = vrot.lane.b32.xlu0 %v3112, 16
  %v3340 = vpop.permute.xlu0 %3339
  %3341 = vrot.lane.b32.xlu0 %v3113, 16
  %v3342 = vpop.permute.xlu0 %3341
  %3343 = vrot.lane.b32.xlu0 %v3114, 16
  %v3344 = vpop.permute.xlu0 %3343
  %3345 = vrot.lane.b32.xlu0 %v3115, 16
  %v3346 = vpop.permute.xlu0 %3345
  %3347 = vrot.lane.b32.xlu0 %v3116, 16
  %v3348 = vpop.permute.xlu0 %3347
  %3349 = vrot.lane.b32.xlu0 %v3117, 16
  %v3350 = vpop.permute.xlu0 %3349
  %3351 = vrot.lane.b32.xlu0 %v3118, 16
  %v3352 = vpop.permute.xlu0 %3351
  %3353 = vrot.lane.b32.xlu0 %v3119, 16
  %v3354 = vpop.permute.xlu0 %3353
  %3355 = vrot.lane.b32.xlu0 %v3120, 16
  %v3356 = vpop.permute.xlu0 %3355
  %3357 = vrot.lane.b32.xlu0 %v3121, 16
  %v3358 = vpop.permute.xlu0 %3357
  %3359 = vrot.lane.b32.xlu0 %v3122, 16
  %v3360 = vpop.permute.xlu0 %3359
  %3361 = vrot.lane.b32.xlu0 %v3123, 16
  %v3362 = vpop.permute.xlu0 %3361
  %3363 = vrot.lane.b32.xlu0 %v3124, 16
  %v3364 = vpop.permute.xlu0 %3363
  %3365 = vrot.lane.b32.xlu0 %v3125, 16
  %v3366 = vpop.permute.xlu0 %3365
  %3367 = vrot.lane.b32.xlu0 %v3126, 16
  %v3368 = vpop.permute.xlu0 %3367
  %3369 = vrot.lane.b32.xlu0 %v3127, 16
  %v3370 = vpop.permute.xlu0 %3369
  %3371 = vrot.lane.b32.xlu0 %v3128, 16
  %v3372 = vpop.permute.xlu0 %3371
  %3373 = vrot.lane.b32.xlu0 %v3129, 16
  %v3374 = vpop.permute.xlu0 %3373
  %3375 = vrot.lane.b32.xlu0 %v3130, 16
  %v3376 = vpop.permute.xlu0 %3375
  %3377 = vrot.lane.b32.xlu0 %v3131, 16
  %v3378 = vpop.permute.xlu0 %3377
  %3379 = vrot.lane.b32.xlu0 %v3132, 16
  %v3380 = vpop.permute.xlu0 %3379
  %3381 = vrot.lane.b32.xlu0 %v3133, 16
  %v3382 = vpop.permute.xlu0 %3381
  %3383 = vrot.lane.b32.xlu0 %v3134, 16
  %v3384 = vpop.permute.xlu0 %3383
  %3385 = vrot.lane.b32.xlu0 %v3135, 16
  %v3386 = vpop.permute.xlu0 %3385
  %3387 = vrot.lane.b32.xlu0 %v3136, 16
  %v3388 = vpop.permute.xlu0 %3387
  %3389 = vrot.lane.b32.xlu0 %v3137, 16
  %v3390 = vpop.permute.xlu0 %3389
  %3391 = vrot.lane.b32.xlu0 %v3138, 16
  %v3392 = vpop.permute.xlu0 %3391
  %3393 = vrot.lane.b32.xlu0 %v3139, 16
  %v3394 = vpop.permute.xlu0 %3393
  %3395 = vrot.lane.b32.xlu0 %v3140, 16
  %v3396 = vpop.permute.xlu0 %3395
  %3397 = vrot.lane.b32.xlu0 %v3141, 16
  %v3398 = vpop.permute.xlu0 %3397
  %3445 = vrot.lane.b32.xlu0 %v3108, 24
  %v3446 = vpop.permute.xlu0 %3445
  %3447 = vrot.lane.b32.xlu0 %v3109, 24
  %v3448 = vpop.permute.xlu0 %3447
  %3449 = vrot.lane.b32.xlu0 %v3110, 24
  %v3450 = vpop.permute.xlu0 %3449
  %3451 = vrot.lane.b32.xlu0 %v3111, 24
  %v3452 = vpop.permute.xlu0 %3451
  %3453 = vrot.lane.b32.xlu0 %v3112, 24
  %v3454 = vpop.permute.xlu0 %3453
  %3455 = vrot.lane.b32.xlu0 %v3113, 24
  %v3456 = vpop.permute.xlu0 %3455
  %3457 = vrot.lane.b32.xlu0 %v3114, 24
  %v3458 = vpop.permute.xlu0 %3457
  %3459 = vrot.lane.b32.xlu0 %v3115, 24
  %v3460 = vpop.permute.xlu0 %3459
  %3461 = vrot.lane.b32.xlu0 %v3116, 24
  %v3462 = vpop.permute.xlu0 %3461
  %3463 = vrot.lane.b32.xlu0 %v3117, 24
  %v3464 = vpop.permute.xlu0 %3463
  %3465 = vrot.lane.b32.xlu0 %v3118, 24
  %v3466 = vpop.permute.xlu0 %3465
  %3467 = vrot.lane.b32.xlu0 %v3119, 24
  %v3468 = vpop.permute.xlu0 %3467
  %3469 = vrot.lane.b32.xlu0 %v3120, 24
  %v3470 = vpop.permute.xlu0 %3469
  %3471 = vrot.lane.b32.xlu0 %v3121, 24
  %v3472 = vpop.permute.xlu0 %3471
  %3473 = vrot.lane.b32.xlu0 %v3122, 24
  %v3474 = vpop.permute.xlu0 %3473
  %3475 = vrot.lane.b32.xlu0 %v3123, 24
  %v3476 = vpop.permute.xlu0 %3475
  %3477 = vrot.lane.b32.xlu0 %v3124, 24
  %v3478 = vpop.permute.xlu0 %3477
  %3479 = vrot.lane.b32.xlu0 %v3125, 24
  %v3480 = vpop.permute.xlu0 %3479
  %3481 = vrot.lane.b32.xlu0 %v3126, 24
  %v3482 = vpop.permute.xlu0 %3481
  %3483 = vrot.lane.b32.xlu0 %v3127, 24
  %v3484 = vpop.permute.xlu0 %3483
  %3485 = vrot.lane.b32.xlu0 %v3128, 24
  %v3486 = vpop.permute.xlu0 %3485
  %3487 = vrot.lane.b32.xlu0 %v3129, 24
  %v3488 = vpop.permute.xlu0 %3487
  %3489 = vrot.lane.b32.xlu0 %v3130, 24
  %v3490 = vpop.permute.xlu0 %3489
  %3491 = vrot.lane.b32.xlu0 %v3131, 24
  %v3492 = vpop.permute.xlu0 %3491
  %3493 = vrot.lane.b32.xlu0 %v3132, 24
  %v3494 = vpop.permute.xlu0 %3493
  %3495 = vrot.lane.b32.xlu0 %v3133, 24
  %v3496 = vpop.permute.xlu0 %3495
  %3497 = vrot.lane.b32.xlu0 %v3134, 24
  %v3498 = vpop.permute.xlu0 %3497
  %3499 = vrot.lane.b32.xlu0 %v3135, 24
  %v3500 = vpop.permute.xlu0 %3499
  %3501 = vrot.lane.b32.xlu0 %v3136, 24
  %v3502 = vpop.permute.xlu0 %3501
  %3503 = vrot.lane.b32.xlu0 %v3137, 24
  %v3504 = vpop.permute.xlu0 %3503
  %3505 = vrot.lane.b32.xlu0 %v3138, 24
  %v3506 = vpop.permute.xlu0 %3505
  %3507 = vrot.lane.b32.xlu0 %v3139, 24
  %v3508 = vpop.permute.xlu0 %3507
  %3509 = vrot.lane.b32.xlu0 %v3140, 24
  %v3510 = vpop.permute.xlu0 %3509
  %3511 = vrot.lane.b32.xlu0 %v3141, 24
  %v3512 = vpop.permute.xlu0 %3511
  %3513 = vrot.lane.b32.xlu0 %v3142, 24
  %v3514 = vpop.permute.xlu0 %3513
  %3515 = vrot.lane.b32.xlu0 %v3143, 24
  %v3516 = vpop.permute.xlu0 %3515
  %3517 = vrot.lane.b32.xlu0 %v3144, 24
  %v3518 = vpop.permute.xlu0 %3517
  %3519 = vrot.lane.b32.xlu0 %v3145, 24
  %v3520 = vpop.permute.xlu0 %3519
  %3521 = vrot.lane.b32.xlu0 %v3146, 24
  %v3522 = vpop.permute.xlu0 %3521
  %3523 = vrot.lane.b32.xlu0 %v3147, 24
  %v3524 = vpop.permute.xlu0 %3523
  %3566 = vrot.lane.b32.xlu0 %v3109, 32
  %v3567 = vpop.permute.xlu0 %3566
  %3568 = vrot.lane.b32.xlu0 %v3110, 32
  %v3569 = vpop.permute.xlu0 %3568
  %3570 = vrot.lane.b32.xlu0 %v3111, 32
  %v3571 = vpop.permute.xlu0 %3570
  %3572 = vrot.lane.b32.xlu0 %v3112, 32
  %v3573 = vpop.permute.xlu0 %3572
  %3574 = vrot.lane.b32.xlu0 %v3113, 32
  %v3575 = vpop.permute.xlu0 %3574
  %3576 = vrot.lane.b32.xlu0 %v3114, 32
  %v3577 = vpop.permute.xlu0 %3576
  %3578 = vrot.lane.b32.xlu0 %v3115, 32
  %v3579 = vpop.permute.xlu0 %3578
  %3580 = vrot.lane.b32.xlu0 %v3116, 32
  %v3581 = vpop.permute.xlu0 %3580
  %3582 = vrot.lane.b32.xlu0 %v3117, 32
  %v3583 = vpop.permute.xlu0 %3582
  %3584 = vrot.lane.b32.xlu0 %v3118, 32
  %v3585 = vpop.permute.xlu0 %3584
  %3586 = vrot.lane.b32.xlu0 %v3119, 32
  %v3587 = vpop.permute.xlu0 %3586
  %3588 = vrot.lane.b32.xlu0 %v3120, 32
  %v3589 = vpop.permute.xlu0 %3588
  %3590 = vrot.lane.b32.xlu0 %v3121, 32
  %v3591 = vpop.permute.xlu0 %3590
  %3592 = vrot.lane.b32.xlu0 %v3122, 32
  %v3593 = vpop.permute.xlu0 %3592
  %3594 = vrot.lane.b32.xlu0 %v3123, 32
  %v3595 = vpop.permute.xlu0 %3594
  %3596 = vrot.lane.b32.xlu0 %v3124, 32
  %v3597 = vpop.permute.xlu0 %3596
  %3598 = vrot.lane.b32.xlu0 %v3125, 32
  %v3599 = vpop.permute.xlu0 %3598
  %3600 = vrot.lane.b32.xlu0 %v3126, 32
  %v3601 = vpop.permute.xlu0 %3600
  %3602 = vrot.lane.b32.xlu0 %v3127, 32
  %v3603 = vpop.permute.xlu0 %3602
  %3604 = vrot.lane.b32.xlu0 %v3128, 32
  %v3605 = vpop.permute.xlu0 %3604
  %3606 = vrot.lane.b32.xlu0 %v3129, 32
  %v3607 = vpop.permute.xlu0 %3606
  %3608 = vrot.lane.b32.xlu0 %v3130, 32
  %v3609 = vpop.permute.xlu0 %3608
  %3610 = vrot.lane.b32.xlu0 %v3131, 32
  %v3611 = vpop.permute.xlu0 %3610
  %3612 = vrot.lane.b32.xlu0 %v3132, 32
  %v3613 = vpop.permute.xlu0 %3612
  %3614 = vrot.lane.b32.xlu0 %v3133, 32
  %v3615 = vpop.permute.xlu0 %3614
  %3616 = vrot.lane.b32.xlu0 %v3134, 32
  %v3617 = vpop.permute.xlu0 %3616
  %3618 = vrot.lane.b32.xlu0 %v3135, 32
  %v3619 = vpop.permute.xlu0 %3618
  %3620 = vrot.lane.b32.xlu0 %v3136, 32
  %v3621 = vpop.permute.xlu0 %3620
  %3622 = vrot.lane.b32.xlu0 %v3137, 32
  %v3623 = vpop.permute.xlu0 %3622
  %3624 = vrot.lane.b32.xlu0 %v3138, 32
  %v3625 = vpop.permute.xlu0 %3624
  %3626 = vrot.lane.b32.xlu0 %v3139, 32
  %v3627 = vpop.permute.xlu0 %3626
  %3628 = vrot.lane.b32.xlu0 %v3140, 32
  %v3629 = vpop.permute.xlu0 %3628
  %3630 = vrot.lane.b32.xlu0 %v3141, 32
  %v3631 = vpop.permute.xlu0 %3630
  %3632 = vrot.lane.b32.xlu0 %v3142, 32
  %v3633 = vpop.permute.xlu0 %3632
  %3634 = vrot.lane.b32.xlu0 %v3143, 32
  %v3635 = vpop.permute.xlu0 %3634
  %3636 = vrot.lane.b32.xlu0 %v3144, 32
  %v3637 = vpop.permute.xlu0 %3636
  %3638 = vrot.lane.b32.xlu0 %v3145, 32
  %v3639 = vpop.permute.xlu0 %3638
  %3640 = vrot.lane.b32.xlu0 %v3146, 32
  %v3641 = vpop.permute.xlu0 %3640
  %3642 = vrot.lane.b32.xlu0 %v3147, 32
  %v3643 = vpop.permute.xlu0 %3642
  %3644 = vrot.lane.b32.xlu0 %v3148, 32
  %v3645 = vpop.permute.xlu0 %3644
  %3687 = vrot.lane.b32.xlu0 %v3110, 40
  %v3688 = vpop.permute.xlu0 %3687
  %3689 = vrot.lane.b32.xlu0 %v3111, 40
  %v3690 = vpop.permute.xlu0 %3689
  %3691 = vrot.lane.b32.xlu0 %v3112, 40
  %v3692 = vpop.permute.xlu0 %3691
  %3693 = vrot.lane.b32.xlu0 %v3113, 40
  %v3694 = vpop.permute.xlu0 %3693
  %3695 = vrot.lane.b32.xlu0 %v3114, 40
  %v3696 = vpop.permute.xlu0 %3695
  %3697 = vrot.lane.b32.xlu0 %v3115, 40
  %v3698 = vpop.permute.xlu0 %3697
  %3699 = vrot.lane.b32.xlu0 %v3116, 40
  %v3700 = vpop.permute.xlu0 %3699
  %3701 = vrot.lane.b32.xlu0 %v3117, 40
  %v3702 = vpop.permute.xlu0 %3701
  %3703 = vrot.lane.b32.xlu0 %v3118, 40
  %v3704 = vpop.permute.xlu0 %3703
  %3705 = vrot.lane.b32.xlu0 %v3119, 40
  %v3706 = vpop.permute.xlu0 %3705
  %3707 = vrot.lane.b32.xlu0 %v3120, 40
  %v3708 = vpop.permute.xlu0 %3707
  %3709 = vrot.lane.b32.xlu0 %v3121, 40
  %v3710 = vpop.permute.xlu0 %3709
  %3711 = vrot.lane.b32.xlu0 %v3122, 40
  %v3712 = vpop.permute.xlu0 %3711
  %3713 = vrot.lane.b32.xlu0 %v3123, 40
  %v3714 = vpop.permute.xlu0 %3713
  %3715 = vrot.lane.b32.xlu0 %v3124, 40
  %v3716 = vpop.permute.xlu0 %3715
  %3717 = vrot.lane.b32.xlu0 %v3125, 40
  %v3718 = vpop.permute.xlu0 %3717
  %3719 = vrot.lane.b32.xlu0 %v3126, 40
  %v3720 = vpop.permute.xlu0 %3719
  %3721 = vrot.lane.b32.xlu0 %v3127, 40
  %v3722 = vpop.permute.xlu0 %3721
  %3723 = vrot.lane.b32.xlu0 %v3128, 40
  %v3724 = vpop.permute.xlu0 %3723
  %3725 = vrot.lane.b32.xlu0 %v3129, 40
  %v3726 = vpop.permute.xlu0 %3725
  %3727 = vrot.lane.b32.xlu0 %v3130, 40
  %v3728 = vpop.permute.xlu0 %3727
  %3729 = vrot.lane.b32.xlu0 %v3131, 40
  %v3730 = vpop.permute.xlu0 %3729
  %3731 = vrot.lane.b32.xlu0 %v3132, 40
  %v3732 = vpop.permute.xlu0 %3731
  %3733 = vrot.lane.b32.xlu0 %v3133, 40
  %v3734 = vpop.permute.xlu0 %3733
  %3735 = vrot.lane.b32.xlu0 %v3134, 40
  %v3736 = vpop.permute.xlu0 %3735
  %3737 = vrot.lane.b32.xlu0 %v3135, 40
  %v3738 = vpop.permute.xlu0 %3737
  %3739 = vrot.lane.b32.xlu0 %v3136, 40
  %v3740 = vpop.permute.xlu0 %3739
  %3741 = vrot.lane.b32.xlu0 %v3137, 40
  %v3742 = vpop.permute.xlu0 %3741
  %3743 = vrot.lane.b32.xlu0 %v3138, 40
  %v3744 = vpop.permute.xlu0 %3743
  %3745 = vrot.lane.b32.xlu0 %v3139, 40
  %v3746 = vpop.permute.xlu0 %3745
  %3747 = vrot.lane.b32.xlu0 %v3140, 40
  %v3748 = vpop.permute.xlu0 %3747
  %3749 = vrot.lane.b32.xlu0 %v3141, 40
  %v3750 = vpop.permute.xlu0 %3749
  %3751 = vrot.lane.b32.xlu0 %v3142, 40
  %v3752 = vpop.permute.xlu0 %3751
  %3753 = vrot.lane.b32.xlu0 %v3143, 40
  %v3754 = vpop.permute.xlu0 %3753
  %3755 = vrot.lane.b32.xlu0 %v3144, 40
  %v3756 = vpop.permute.xlu0 %3755
  %3757 = vrot.lane.b32.xlu0 %v3145, 40
  %v3758 = vpop.permute.xlu0 %3757
  %3759 = vrot.lane.b32.xlu0 %v3146, 40
  %v3760 = vpop.permute.xlu0 %3759
  %3761 = vrot.lane.b32.xlu0 %v3147, 40
  %v3762 = vpop.permute.xlu0 %3761
  %3763 = vrot.lane.b32.xlu0 %v3148, 40
  %v3764 = vpop.permute.xlu0 %3763
  %3765 = vrot.lane.b32.xlu0 %v3149, 40
  %v3766 = vpop.permute.xlu0 %3765
  %3813 = vrot.lane.b32.xlu0 %v3116, 48
  %v3814 = vpop.permute.xlu0 %3813
  %3815 = vrot.lane.b32.xlu0 %v3117, 48
  %v3816 = vpop.permute.xlu0 %3815
  %3817 = vrot.lane.b32.xlu0 %v3118, 48
  %v3818 = vpop.permute.xlu0 %3817
  %3819 = vrot.lane.b32.xlu0 %v3119, 48
  %v3820 = vpop.permute.xlu0 %3819
  %3821 = vrot.lane.b32.xlu0 %v3120, 48
  %v3822 = vpop.permute.xlu0 %3821
  %3823 = vrot.lane.b32.xlu0 %v3121, 48
  %v3824 = vpop.permute.xlu0 %3823
  %3825 = vrot.lane.b32.xlu0 %v3122, 48
  %v3826 = vpop.permute.xlu0 %3825
  %3827 = vrot.lane.b32.xlu0 %v3123, 48
  %v3828 = vpop.permute.xlu0 %3827
  %3829 = vrot.lane.b32.xlu0 %v3124, 48
  %v3830 = vpop.permute.xlu0 %3829
  %3831 = vrot.lane.b32.xlu0 %v3125, 48
  %v3832 = vpop.permute.xlu0 %3831
  %3833 = vrot.lane.b32.xlu0 %v3126, 48
  %v3834 = vpop.permute.xlu0 %3833
  %3835 = vrot.lane.b32.xlu0 %v3127, 48
  %v3836 = vpop.permute.xlu0 %3835
  %3837 = vrot.lane.b32.xlu0 %v3128, 48
  %v3838 = vpop.permute.xlu0 %3837
  %3839 = vrot.lane.b32.xlu0 %v3129, 48
  %v3840 = vpop.permute.xlu0 %3839
  %3841 = vrot.lane.b32.xlu0 %v3130, 48
  %v3842 = vpop.permute.xlu0 %3841
  %3843 = vrot.lane.b32.xlu0 %v3131, 48
  %v3844 = vpop.permute.xlu0 %3843
  %3845 = vrot.lane.b32.xlu0 %v3132, 48
  %v3846 = vpop.permute.xlu0 %3845
  %3847 = vrot.lane.b32.xlu0 %v3133, 48
  %v3848 = vpop.permute.xlu0 %3847
  %3849 = vrot.lane.b32.xlu0 %v3134, 48
  %v3850 = vpop.permute.xlu0 %3849
  %3851 = vrot.lane.b32.xlu0 %v3135, 48
  %v3852 = vpop.permute.xlu0 %3851
  %3853 = vrot.lane.b32.xlu0 %v3136, 48
  %v3854 = vpop.permute.xlu0 %3853
  %3855 = vrot.lane.b32.xlu0 %v3137, 48
  %v3856 = vpop.permute.xlu0 %3855
  %3857 = vrot.lane.b32.xlu0 %v3138, 48
  %v3858 = vpop.permute.xlu0 %3857
  %3859 = vrot.lane.b32.xlu0 %v3139, 48
  %v3860 = vpop.permute.xlu0 %3859
  %3861 = vrot.lane.b32.xlu0 %v3140, 48
  %v3862 = vpop.permute.xlu0 %3861
  %3863 = vrot.lane.b32.xlu0 %v3141, 48
  %v3864 = vpop.permute.xlu0 %3863
  %3865 = vrot.lane.b32.xlu0 %v3142, 48
  %v3866 = vpop.permute.xlu0 %3865
  %3867 = vrot.lane.b32.xlu0 %v3143, 48
  %v3868 = vpop.permute.xlu0 %3867
  %3869 = vrot.lane.b32.xlu0 %v3144, 48
  %v3870 = vpop.permute.xlu0 %3869
  %3871 = vrot.lane.b32.xlu0 %v3145, 48
  %v3872 = vpop.permute.xlu0 %3871
  %3873 = vrot.lane.b32.xlu0 %v3146, 48
  %v3874 = vpop.permute.xlu0 %3873
  %3875 = vrot.lane.b32.xlu0 %v3147, 48
  %v3876 = vpop.permute.xlu0 %3875
  %3877 = vrot.lane.b32.xlu0 %v3148, 48
  %v3878 = vpop.permute.xlu0 %3877
  %3879 = vrot.lane.b32.xlu0 %v3149, 48
  %v3880 = vpop.permute.xlu0 %3879
  %3881 = vrot.lane.b32.xlu0 %v3150, 48
  %v3882 = vpop.permute.xlu0 %3881
  %3883 = vrot.lane.b32.xlu0 %v3151, 48
  %v3884 = vpop.permute.xlu0 %3883
  %3885 = vrot.lane.b32.xlu0 %v3152, 48
  %v3886 = vpop.permute.xlu0 %3885
  %3887 = vrot.lane.b32.xlu0 %v3153, 48
  %v3888 = vpop.permute.xlu0 %3887
  %3889 = vrot.lane.b32.xlu0 %v3154, 48
  %v3890 = vpop.permute.xlu0 %3889
  %3891 = vrot.lane.b32.xlu0 %v3155, 48
  %v3892 = vpop.permute.xlu0 %3891
  %3934 = vrot.lane.b32.xlu0 %v3117, 56
  %v3935 = vpop.permute.xlu0 %3934
  %3936 = vrot.lane.b32.xlu0 %v3118, 56
  %v3937 = vpop.permute.xlu0 %3936
  %3938 = vrot.lane.b32.xlu0 %v3119, 56
  %v3939 = vpop.permute.xlu0 %3938
  %3940 = vrot.lane.b32.xlu0 %v3120, 56
  %v3941 = vpop.permute.xlu0 %3940
  %3942 = vrot.lane.b32.xlu0 %v3121, 56
  %v3943 = vpop.permute.xlu0 %3942
  %3944 = vrot.lane.b32.xlu0 %v3122, 56
  %v3945 = vpop.permute.xlu0 %3944
  %3946 = vrot.lane.b32.xlu0 %v3123, 56
  %v3947 = vpop.permute.xlu0 %3946
  %3948 = vrot.lane.b32.xlu0 %v3124, 56
  %v3949 = vpop.permute.xlu0 %3948
  %3950 = vrot.lane.b32.xlu0 %v3125, 56
  %v3951 = vpop.permute.xlu0 %3950
  %3952 = vrot.lane.b32.xlu0 %v3126, 56
  %v3953 = vpop.permute.xlu0 %3952
  %3954 = vrot.lane.b32.xlu0 %v3127, 56
  %v3955 = vpop.permute.xlu0 %3954
  %3956 = vrot.lane.b32.xlu0 %v3128, 56
  %v3957 = vpop.permute.xlu0 %3956
  %3958 = vrot.lane.b32.xlu0 %v3129, 56
  %v3959 = vpop.permute.xlu0 %3958
  %3960 = vrot.lane.b32.xlu0 %v3130, 56
  %v3961 = vpop.permute.xlu0 %3960
  %3962 = vrot.lane.b32.xlu0 %v3131, 56
  %v3963 = vpop.permute.xlu0 %3962
  %3964 = vrot.lane.b32.xlu0 %v3132, 56
  %v3965 = vpop.permute.xlu0 %3964
  %3966 = vrot.lane.b32.xlu0 %v3133, 56
  %v3967 = vpop.permute.xlu0 %3966
  %3968 = vrot.lane.b32.xlu0 %v3134, 56
  %v3969 = vpop.permute.xlu0 %3968
  %3970 = vrot.lane.b32.xlu0 %v3135, 56
  %v3971 = vpop.permute.xlu0 %3970
  %3972 = vrot.lane.b32.xlu0 %v3136, 56
  %v3973 = vpop.permute.xlu0 %3972
  %3974 = vrot.lane.b32.xlu0 %v3137, 56
  %v3975 = vpop.permute.xlu0 %3974
  %3976 = vrot.lane.b32.xlu0 %v3138, 56
  %v3977 = vpop.permute.xlu0 %3976
  %3978 = vrot.lane.b32.xlu0 %v3139, 56
  %v3979 = vpop.permute.xlu0 %3978
  %3980 = vrot.lane.b32.xlu0 %v3140, 56
  %v3981 = vpop.permute.xlu0 %3980
  %3982 = vrot.lane.b32.xlu0 %v3141, 56
  %v3983 = vpop.permute.xlu0 %3982
  %3984 = vrot.lane.b32.xlu0 %v3142, 56
  %v3985 = vpop.permute.xlu0 %3984
  %3986 = vrot.lane.b32.xlu0 %v3143, 56
  %v3987 = vpop.permute.xlu0 %3986
  %3988 = vrot.lane.b32.xlu0 %v3144, 56
  %v3989 = vpop.permute.xlu0 %3988
  %3990 = vrot.lane.b32.xlu0 %v3145, 56
  %v3991 = vpop.permute.xlu0 %3990
  %3992 = vrot.lane.b32.xlu0 %v3146, 56
  %v3993 = vpop.permute.xlu0 %3992
  %3994 = vrot.lane.b32.xlu0 %v3147, 56
  %v3995 = vpop.permute.xlu0 %3994
  %3996 = vrot.lane.b32.xlu0 %v3148, 56
  %v3997 = vpop.permute.xlu0 %3996
  %3998 = vrot.lane.b32.xlu0 %v3149, 56
  %v3999 = vpop.permute.xlu0 %3998
  %4000 = vrot.lane.b32.xlu0 %v3150, 56
  %v4001 = vpop.permute.xlu0 %4000
  %4002 = vrot.lane.b32.xlu0 %v3151, 56
  %v4003 = vpop.permute.xlu0 %4002
  %4004 = vrot.lane.b32.xlu0 %v3152, 56
  %v4005 = vpop.permute.xlu0 %4004
  %4006 = vrot.lane.b32.xlu0 %v3153, 56
  %v4007 = vpop.permute.xlu0 %4006
  %4008 = vrot.lane.b32.xlu0 %v3154, 56
  %v4009 = vpop.permute.xlu0 %4008
  %4010 = vrot.lane.b32.xlu0 %v3155, 56
  %v4011 = vpop.permute.xlu0 %4010
  %4012 = vrot.lane.b32.xlu0 %v3156, 56
  %v4013 = vpop.permute.xlu0 %4012
  %4055 = vrot.lane.b32.xlu0 %v3118, 64
  %v4056 = vpop.permute.xlu0 %4055
  %4057 = vrot.lane.b32.xlu0 %v3119, 64
  %v4058 = vpop.permute.xlu0 %4057
  %4059 = vrot.lane.b32.xlu0 %v3120, 64
  %v4060 = vpop.permute.xlu0 %4059
  %4061 = vrot.lane.b32.xlu0 %v3121, 64
  %v4062 = vpop.permute.xlu0 %4061
  %4063 = vrot.lane.b32.xlu0 %v3122, 64
  %v4064 = vpop.permute.xlu0 %4063
  %4065 = vrot.lane.b32.xlu0 %v3123, 64
  %v4066 = vpop.permute.xlu0 %4065
  %4067 = vrot.lane.b32.xlu0 %v3124, 64
  %v4068 = vpop.permute.xlu0 %4067
  %4069 = vrot.lane.b32.xlu0 %v3125, 64
  %v4070 = vpop.permute.xlu0 %4069
  %4071 = vrot.lane.b32.xlu0 %v3126, 64
  %v4072 = vpop.permute.xlu0 %4071
  %4073 = vrot.lane.b32.xlu0 %v3127, 64
  %v4074 = vpop.permute.xlu0 %4073
  %4075 = vrot.lane.b32.xlu0 %v3128, 64
  %v4076 = vpop.permute.xlu0 %4075
  %4077 = vrot.lane.b32.xlu0 %v3129, 64
  %v4078 = vpop.permute.xlu0 %4077
  %4079 = vrot.lane.b32.xlu0 %v3130, 64
  %v4080 = vpop.permute.xlu0 %4079
  %4081 = vrot.lane.b32.xlu0 %v3131, 64
  %v4082 = vpop.permute.xlu0 %4081
  %4083 = vrot.lane.b32.xlu0 %v3132, 64
  %v4084 = vpop.permute.xlu0 %4083
  %4085 = vrot.lane.b32.xlu0 %v3133, 64
  %v4086 = vpop.permute.xlu0 %4085
  %4087 = vrot.lane.b32.xlu0 %v3134, 64
  %v4088 = vpop.permute.xlu0 %4087
  %4089 = vrot.lane.b32.xlu0 %v3135, 64
  %v4090 = vpop.permute.xlu0 %4089
  %4091 = vrot.lane.b32.xlu0 %v3136, 64
  %v4092 = vpop.permute.xlu0 %4091
  %4093 = vrot.lane.b32.xlu0 %v3137, 64
  %v4094 = vpop.permute.xlu0 %4093
  %4095 = vrot.lane.b32.xlu0 %v3138, 64
  %v4096 = vpop.permute.xlu0 %4095
  %4097 = vrot.lane.b32.xlu0 %v3139, 64
  %v4098 = vpop.permute.xlu0 %4097
  %4099 = vrot.lane.b32.xlu0 %v3140, 64
  %v4100 = vpop.permute.xlu0 %4099
  %4101 = vrot.lane.b32.xlu0 %v3141, 64
  %v4102 = vpop.permute.xlu0 %4101
  %4103 = vrot.lane.b32.xlu0 %v3142, 64
  %v4104 = vpop.permute.xlu0 %4103
  %4105 = vrot.lane.b32.xlu0 %v3143, 64
  %v4106 = vpop.permute.xlu0 %4105
  %4107 = vrot.lane.b32.xlu0 %v3144, 64
  %v4108 = vpop.permute.xlu0 %4107
  %4109 = vrot.lane.b32.xlu0 %v3145, 64
  %v4110 = vpop.permute.xlu0 %4109
  %4111 = vrot.lane.b32.xlu0 %v3146, 64
  %v4112 = vpop.permute.xlu0 %4111
  %4113 = vrot.lane.b32.xlu0 %v3147, 64
  %v4114 = vpop.permute.xlu0 %4113
  %4115 = vrot.lane.b32.xlu0 %v3148, 64
  %v4116 = vpop.permute.xlu0 %4115
  %4117 = vrot.lane.b32.xlu0 %v3149, 64
  %v4118 = vpop.permute.xlu0 %4117
  %4119 = vrot.lane.b32.xlu0 %v3150, 64
  %v4120 = vpop.permute.xlu0 %4119
  %4121 = vrot.lane.b32.xlu0 %v3151, 64
  %v4122 = vpop.permute.xlu0 %4121
  %4123 = vrot.lane.b32.xlu0 %v3152, 64
  %v4124 = vpop.permute.xlu0 %4123
  %4125 = vrot.lane.b32.xlu0 %v3153, 64
  %v4126 = vpop.permute.xlu0 %4125
  %4127 = vrot.lane.b32.xlu0 %v3154, 64
  %v4128 = vpop.permute.xlu0 %4127
  %4129 = vrot.lane.b32.xlu0 %v3155, 64
  %v4130 = vpop.permute.xlu0 %4129
  %4131 = vrot.lane.b32.xlu0 %v3156, 64
  %v4132 = vpop.permute.xlu0 %4131
  %4133 = vrot.lane.b32.xlu0 %v3157, 64
  %v4134 = vpop.permute.xlu0 %4133
  %v4175 = vsel %vm2202, %v3100, %v3199
  %v4176 = vsel %vm2202, %v3101, %v3201
  %v4177 = vsel %vm2202, %v3102, %v3203
  %v4178 = vsel %vm2202, %v3103, %v3205
  %v4179 = vsel %vm2202, %v3104, %v3207
  %v4180 = vsel %vm2202, %v3105, %v3209
  %v4181 = vsel %vm2202, %v3106, %v3211
  %v4182 = vsel %vm2202, %v3107, %v3213
  %v4183 = vsel %vm2202, %v3108, %v3215
  %v4184 = vsel %vm2202, %v3109, %v3217
  %v4185 = vsel %vm2202, %v3110, %v3219
  %v4186 = vsel %vm2202, %v3111, %v3221
  %v4187 = vsel %vm2202, %v3112, %v3223
  %v4188 = vsel %vm2202, %v3113, %v3225
  %v4189 = vsel %vm2202, %v3114, %v3227
  %v4190 = vsel %vm2202, %v3115, %v3229
  %v4191 = vsel %vm2202, %v3116, %v3231
  %v4192 = vsel %vm2202, %v3117, %v3233
  %v4193 = vsel %vm2202, %v3118, %v3235
  %v4194 = vsel %vm2202, %v3119, %v3237
  %v4195 = vsel %vm2202, %v3120, %v3239
  %v4196 = vsel %vm2202, %v3121, %v3241
  %v4197 = vsel %vm2202, %v3122, %v3243
  %v4198 = vsel %vm2202, %v3123, %v3245
  %v4199 = vsel %vm2202, %v3124, %v3247
  %v4200 = vsel %vm2202, %v3125, %v3249
  %v4201 = vsel %vm2202, %v3126, %v3251
  %v4202 = vsel %vm2202, %v3127, %v3253
  %v4203 = vsel %vm2202, %v3128, %v3255
  %v4204 = vsel %vm2202, %v3129, %v3257
  %v4205 = vsel %vm2202, %v3130, %v3259
  %v4206 = vsel %vm2202, %v3131, %v3261
  %v4207 = vsel %vm2202, %v3132, %v3263
  %v4208 = vsel %vm2202, %v3133, %v3265
  %v4209 = vsel %vm2202, %v3134, %v3267
  %v4210 = vsel %vm2202, %v3135, %v3269
  %v4211 = vsel %vm2202, %v3136, %v3271
  %v4212 = vsel %vm2202, %v3137, %v3273
  %v4213 = vsel %vm2202, %v3138, %v3275
  %v4214 = vsel %vm2202, %v3139, %v3277
  %v4215 = vsel %vm2332, %v4175, %v3320
  %v4216 = vsel %vm2332, %v4176, %v3322
  %v4217 = vsel %vm2332, %v4177, %v3324
  %v4218 = vsel %vm2332, %v4178, %v3326
  %v4219 = vsel %vm2332, %v4179, %v3328
  %v4220 = vsel %vm2332, %v4180, %v3330
  %v4221 = vsel %vm2332, %v4181, %v3332
  %v4222 = vsel %vm2332, %v4182, %v3334
  %v4223 = vsel %vm2332, %v4183, %v3336
  %v4224 = vsel %vm2332, %v4184, %v3338
  %v4225 = vsel %vm2332, %v4185, %v3340
  %v4226 = vsel %vm2332, %v4186, %v3342
  %v4227 = vsel %vm2332, %v4187, %v3344
  %v4228 = vsel %vm2332, %v4188, %v3346
  %v4229 = vsel %vm2332, %v4189, %v3348
  %v4230 = vsel %vm2332, %v4190, %v3350
  %v4231 = vsel %vm2332, %v4191, %v3352
  %v4232 = vsel %vm2332, %v4192, %v3354
  %v4233 = vsel %vm2332, %v4193, %v3356
  %v4234 = vsel %vm2332, %v4194, %v3358
  %v4235 = vsel %vm2332, %v4195, %v3360
  %v4236 = vsel %vm2332, %v4196, %v3362
  %v4237 = vsel %vm2332, %v4197, %v3364
  %v4238 = vsel %vm2332, %v4198, %v3366
  %v4239 = vsel %vm2332, %v4199, %v3368
  %v4240 = vsel %vm2332, %v4200, %v3370
  %v4241 = vsel %vm2332, %v4201, %v3372
  %v4242 = vsel %vm2332, %v4202, %v3374
  %v4243 = vsel %vm2332, %v4203, %v3376
  %v4244 = vsel %vm2332, %v4204, %v3378
  %v4245 = vsel %vm2332, %v4205, %v3380
  %v4246 = vsel %vm2332, %v4206, %v3382
  %v4247 = vsel %vm2332, %v4207, %v3384
  %v4248 = vsel %vm2332, %v4208, %v3386
  %v4249 = vsel %vm2332, %v4209, %v3388
  %v4250 = vsel %vm2332, %v4210, %v3390
  %v4251 = vsel %vm2332, %v4211, %v3392
  %v4252 = vsel %vm2332, %v4212, %v3394
  %v4253 = vsel %vm2332, %v4213, %v3396
  %v4254 = vsel %vm2332, %v4214, %v3398
  %v4255 = vsel %vm2462, %v4215, %v3446
  %v4256 = vsel %vm2462, %v4216, %v3448
  %v4257 = vsel %vm2462, %v4217, %v3450
  %v4258 = vsel %vm2462, %v4218, %v3452
  %v4259 = vsel %vm2462, %v4219, %v3454
  %v4260 = vsel %vm2462, %v4220, %v3456
  %v4261 = vsel %vm2462, %v4221, %v3458
  %v4262 = vsel %vm2462, %v4222, %v3460
  %v4263 = vsel %vm2462, %v4223, %v3462
  %v4264 = vsel %vm2462, %v4224, %v3464
  %v4265 = vsel %vm2462, %v4225, %v3466
  %v4266 = vsel %vm2462, %v4226, %v3468
  %v4267 = vsel %vm2462, %v4227, %v3470
  %v4268 = vsel %vm2462, %v4228, %v3472
  %v4269 = vsel %vm2462, %v4229, %v3474
  %v4270 = vsel %vm2462, %v4230, %v3476
  %v4271 = vsel %vm2462, %v4231, %v3478
  %v4272 = vsel %vm2462, %v4232, %v3480
  %v4273 = vsel %vm2462, %v4233, %v3482
  %v4274 = vsel %vm2462, %v4234, %v3484
  %v4275 = vsel %vm2462, %v4235, %v3486
  %v4276 = vsel %vm2462, %v4236, %v3488
  %v4277 = vsel %vm2462, %v4237, %v3490
  %v4278 = vsel %vm2462, %v4238, %v3492
  %v4279 = vsel %vm2462, %v4239, %v3494
  %v4280 = vsel %vm2462, %v4240, %v3496
  %v4281 = vsel %vm2462, %v4241, %v3498
  %v4282 = vsel %vm2462, %v4242, %v3500
  %v4283 = vsel %vm2462, %v4243, %v3502
  %v4284 = vsel %vm2462, %v4244, %v3504
  %v4285 = vsel %vm2462, %v4245, %v3506
  %v4286 = vsel %vm2462, %v4246, %v3508
  %v4287 = vsel %vm2462, %v4247, %v3510
  %v4288 = vsel %vm2462, %v4248, %v3512
  %v4289 = vsel %vm2462, %v4249, %v3514
  %v4290 = vsel %vm2462, %v4250, %v3516
  %v4291 = vsel %vm2462, %v4251, %v3518
  %v4292 = vsel %vm2462, %v4252, %v3520
  %v4293 = vsel %vm2462, %v4253, %v3522
  %v4294 = vsel %vm2462, %v4254, %v3524
  %v4295 = vsel %vm2592, %v4255, %v3567
  %v4296 = vsel %vm2592, %v4256, %v3569
  %v4297 = vsel %vm2592, %v4257, %v3571
  %v4298 = vsel %vm2592, %v4258, %v3573
  %v4299 = vsel %vm2592, %v4259, %v3575
  %v4300 = vsel %vm2592, %v4260, %v3577
  %v4301 = vsel %vm2592, %v4261, %v3579
  %v4302 = vsel %vm2592, %v4262, %v3581
  %v4303 = vsel %vm2592, %v4263, %v3583
  %v4304 = vsel %vm2592, %v4264, %v3585
  %v4305 = vsel %vm2592, %v4265, %v3587
  %v4306 = vsel %vm2592, %v4266, %v3589
  %v4307 = vsel %vm2592, %v4267, %v3591
  %v4308 = vsel %vm2592, %v4268, %v3593
  %v4309 = vsel %vm2592, %v4269, %v3595
  %v4310 = vsel %vm2592, %v4270, %v3597
  %v4311 = vsel %vm2592, %v4271, %v3599
  %v4312 = vsel %vm2592, %v4272, %v3601
  %v4313 = vsel %vm2592, %v4273, %v3603
  %v4314 = vsel %vm2592, %v4274, %v3605
  %v4315 = vsel %vm2592, %v4275, %v3607
  %v4316 = vsel %vm2592, %v4276, %v3609
  %v4317 = vsel %vm2592, %v4277, %v3611
  %v4318 = vsel %vm2592, %v4278, %v3613
  %v4319 = vsel %vm2592, %v4279, %v3615
  %v4320 = vsel %vm2592, %v4280, %v3617
  %v4321 = vsel %vm2592, %v4281, %v3619
  %v4322 = vsel %vm2592, %v4282, %v3621
  %v4323 = vsel %vm2592, %v4283, %v3623
  %v4324 = vsel %vm2592, %v4284, %v3625
  %v4325 = vsel %vm2592, %v4285, %v3627
  %v4326 = vsel %vm2592, %v4286, %v3629
  %v4327 = vsel %vm2592, %v4287, %v3631
  %v4328 = vsel %vm2592, %v4288, %v3633
  %v4329 = vsel %vm2592, %v4289, %v3635
  %v4330 = vsel %vm2592, %v4290, %v3637
  %v4331 = vsel %vm2592, %v4291, %v3639
  %v4332 = vsel %vm2592, %v4292, %v3641
  %v4333 = vsel %vm2592, %v4293, %v3643
  %v4334 = vsel %vm2592, %v4294, %v3645
  %vm4335 = vcmask 326656
  %v4336 = vsel %vm4335, %v4295, %v3688
  %v4337 = vsel %vm4335, %v4296, %v3690
  %v4338 = vsel %vm4335, %v4297, %v3692
  %v4339 = vsel %vm4335, %v4298, %v3694
  %v4340 = vsel %vm4335, %v4299, %v3696
  %v4341 = vsel %vm4335, %v4300, %v3698
  %v4342 = vsel %vm4335, %v4301, %v3700
  %v4343 = vsel %vm4335, %v4302, %v3702
  %v4344 = vsel %vm4335, %v4303, %v3704
  %v4345 = vsel %vm4335, %v4304, %v3706
  %v4346 = vsel %vm4335, %v4305, %v3708
  %v4347 = vsel %vm4335, %v4306, %v3710
  %v4348 = vsel %vm4335, %v4307, %v3712
  %v4349 = vsel %vm4335, %v4308, %v3714
  %v4350 = vsel %vm4335, %v4309, %v3716
  %v4351 = vsel %vm4335, %v4310, %v3718
  %v4352 = vsel %vm4335, %v4311, %v3720
  %v4353 = vsel %vm4335, %v4312, %v3722
  %v4354 = vsel %vm4335, %v4313, %v3724
  %v4355 = vsel %vm4335, %v4314, %v3726
  %v4356 = vsel %vm4335, %v4315, %v3728
  %v4357 = vsel %vm4335, %v4316, %v3730
  %v4358 = vsel %vm4335, %v4317, %v3732
  %v4359 = vsel %vm4335, %v4318, %v3734
  %v4360 = vsel %vm4335, %v4319, %v3736
  %v4361 = vsel %vm4335, %v4320, %v3738
  %v4362 = vsel %vm4335, %v4321, %v3740
  %v4363 = vsel %vm4335, %v4322, %v3742
  %v4364 = vsel %vm4335, %v4323, %v3744
  %v4365 = vsel %vm4335, %v4324, %v3746
  %v4366 = vsel %vm4335, %v4325, %v3748
  %v4367 = vsel %vm4335, %v4326, %v3750
  %v4368 = vsel %vm4335, %v4327, %v3752
  %v4369 = vsel %vm4335, %v4328, %v3754
  %v4370 = vsel %vm4335, %v4329, %v3756
  %v4371 = vsel %vm4335, %v4330, %v3758
  %v4372 = vsel %vm4335, %v4331, %v3760
  %v4373 = vsel %vm4335, %v4332, %v3762
  %v4374 = vsel %vm4335, %v4333, %v3764
  %v4375 = vsel %vm4335, %v4334, %v3766
  %vm4376 = vcmask 392192
  %v4377 = vsel %vm4376, %v4336, %v3814
  %v4378 = vsel %vm4376, %v4337, %v3816
  %v4379 = vsel %vm4376, %v4338, %v3818
  %v4380 = vsel %vm4376, %v4339, %v3820
  %v4381 = vsel %vm4376, %v4340, %v3822
  %v4382 = vsel %vm4376, %v4341, %v3824
  %v4383 = vsel %vm4376, %v4342, %v3826
  %v4384 = vsel %vm4376, %v4343, %v3828
  %v4385 = vsel %vm4376, %v4344, %v3830
  %v4386 = vsel %vm4376, %v4345, %v3832
  %v4387 = vsel %vm4376, %v4346, %v3834
  %v4388 = vsel %vm4376, %v4347, %v3836
  %v4389 = vsel %vm4376, %v4348, %v3838
  %v4390 = vsel %vm4376, %v4349, %v3840
  %v4391 = vsel %vm4376, %v4350, %v3842
  %v4392 = vsel %vm4376, %v4351, %v3844
  %v4393 = vsel %vm4376, %v4352, %v3846
  %v4394 = vsel %vm4376, %v4353, %v3848
  %v4395 = vsel %vm4376, %v4354, %v3850
  %v4396 = vsel %vm4376, %v4355, %v3852
  %v4397 = vsel %vm4376, %v4356, %v3854
  %v4398 = vsel %vm4376, %v4357, %v3856
  %v4399 = vsel %vm4376, %v4358, %v3858
  %v4400 = vsel %vm4376, %v4359, %v3860
  %v4401 = vsel %vm4376, %v4360, %v3862
  %v4402 = vsel %vm4376, %v4361, %v3864
  %v4403 = vsel %vm4376, %v4362, %v3866
  %v4404 = vsel %vm4376, %v4363, %v3868
  %v4405 = vsel %vm4376, %v4364, %v3870
  %v4406 = vsel %vm4376, %v4365, %v3872
  %v4407 = vsel %vm4376, %v4366, %v3874
  %v4408 = vsel %vm4376, %v4367, %v3876
  %v4409 = vsel %vm4376, %v4368, %v3878
  %v4410 = vsel %vm4376, %v4369, %v3880
  %v4411 = vsel %vm4376, %v4370, %v3882
  %v4412 = vsel %vm4376, %v4371, %v3884
  %v4413 = vsel %vm4376, %v4372, %v3886
  %v4414 = vsel %vm4376, %v4373, %v3888
  %v4415 = vsel %vm4376, %v4374, %v3890
  %v4416 = vsel %vm4376, %v4375, %v3892
  %vm4417 = vcmask 457728
  %v4418 = vsel %vm4417, %v4377, %v3935
  %v4419 = vsel %vm4417, %v4378, %v3937
  %v4420 = vsel %vm4417, %v4379, %v3939
  %v4421 = vsel %vm4417, %v4380, %v3941
  %v4422 = vsel %vm4417, %v4381, %v3943
  %v4423 = vsel %vm4417, %v4382, %v3945
  %v4424 = vsel %vm4417, %v4383, %v3947
  %v4425 = vsel %vm4417, %v4384, %v3949
  %v4426 = vsel %vm4417, %v4385, %v3951
  %v4427 = vsel %vm4417, %v4386, %v3953
  %v4428 = vsel %vm4417, %v4387, %v3955
  %v4429 = vsel %vm4417, %v4388, %v3957
  %v4430 = vsel %vm4417, %v4389, %v3959
  %v4431 = vsel %vm4417, %v4390, %v3961
  %v4432 = vsel %vm4417, %v4391, %v3963
  %v4433 = vsel %vm4417, %v4392, %v3965
  %v4434 = vsel %vm4417, %v4393, %v3967
  %v4435 = vsel %vm4417, %v4394, %v3969
  %v4436 = vsel %vm4417, %v4395, %v3971
  %v4437 = vsel %vm4417, %v4396, %v3973
  %v4438 = vsel %vm4417, %v4397, %v3975
  %v4439 = vsel %vm4417, %v4398, %v3977
  %v4440 = vsel %vm4417, %v4399, %v3979
  %v4441 = vsel %vm4417, %v4400, %v3981
  %v4442 = vsel %vm4417, %v4401, %v3983
  %v4443 = vsel %vm4417, %v4402, %v3985
  %v4444 = vsel %vm4417, %v4403, %v3987
  %v4445 = vsel %vm4417, %v4404, %v3989
  %v4446 = vsel %vm4417, %v4405, %v3991
  %v4447 = vsel %vm4417, %v4406, %v3993
  %v4448 = vsel %vm4417, %v4407, %v3995
  %v4449 = vsel %vm4417, %v4408, %v3997
  %v4450 = vsel %vm4417, %v4409, %v3999
  %v4451 = vsel %vm4417, %v4410, %v4001
  %v4452 = vsel %vm4417, %v4411, %v4003
  %v4453 = vsel %vm4417, %v4412, %v4005
  %v4454 = vsel %vm4417, %v4413, %v4007
  %v4455 = vsel %vm4417, %v4414, %v4009
  %v4456 = vsel %vm4417, %v4415, %v4011
  %v4457 = vsel %vm4417, %v4416, %v4013
  %vm4458 = vcmask 523264
  %v4459 = vsel %vm4458, %v4418, %v4056
  %v4460 = vsel %vm4458, %v4419, %v4058
  %v4461 = vsel %vm4458, %v4420, %v4060
  %v4462 = vsel %vm4458, %v4421, %v4062
  %v4463 = vsel %vm4458, %v4422, %v4064
  %v4464 = vsel %vm4458, %v4423, %v4066
  %v4465 = vsel %vm4458, %v4424, %v4068
  %v4466 = vsel %vm4458, %v4425, %v4070
  %v4467 = vsel %vm4458, %v4426, %v4072
  %v4468 = vsel %vm4458, %v4427, %v4074
  %v4469 = vsel %vm4458, %v4428, %v4076
  %v4470 = vsel %vm4458, %v4429, %v4078
  %v4471 = vsel %vm4458, %v4430, %v4080
  %v4472 = vsel %vm4458, %v4431, %v4082
  %v4473 = vsel %vm4458, %v4432, %v4084
  %v4474 = vsel %vm4458, %v4433, %v4086
  %v4475 = vsel %vm4458, %v4434, %v4088
  %v4476 = vsel %vm4458, %v4435, %v4090
  %v4477 = vsel %vm4458, %v4436, %v4092
  %v4478 = vsel %vm4458, %v4437, %v4094
  %v4479 = vsel %vm4458, %v4438, %v4096
  %v4480 = vsel %vm4458, %v4439, %v4098
  %v4481 = vsel %vm4458, %v4440, %v4100
  %v4482 = vsel %vm4458, %v4441, %v4102
  %v4483 = vsel %vm4458, %v4442, %v4104
  %v4484 = vsel %vm4458, %v4443, %v4106
  %v4485 = vsel %vm4458, %v4444, %v4108
  %v4486 = vsel %vm4458, %v4445, %v4110
  %v4487 = vsel %vm4458, %v4446, %v4112
  %v4488 = vsel %vm4458, %v4447, %v4114
  %v4489 = vsel %vm4458, %v4448, %v4116
  %v4490 = vsel %vm4458, %v4449, %v4118
  %v4491 = vsel %vm4458, %v4450, %v4120
  %v4492 = vsel %vm4458, %v4451, %v4122
  %v4493 = vsel %vm4458, %v4452, %v4124
  %v4494 = vsel %vm4458, %v4453, %v4126
  %v4495 = vsel %vm4458, %v4454, %v4128
  %v4496 = vsel %vm4458, %v4455, %v4130
  %v4497 = vsel %vm4458, %v4456, %v4132
  %v4498 = vsel %vm4458, %v4457, %v4134
  %v4499 = vpack.c.bf16 %v4460, %v4459
  %v4500 = vpack.c.bf16 %v4462, %v4461
  %v4501 = vpack.c.bf16 %v4464, %v4463
  %v4502 = vpack.c.bf16 %v4466, %v4465
  %v4503 = vpack.c.bf16 %v4468, %v4467
  %v4504 = vpack.c.bf16 %v4470, %v4469
  %v4505 = vpack.c.bf16 %v4472, %v4471
  %v4506 = vpack.c.bf16 %v4474, %v4473
  %v4507 = vpack.c.bf16 %v4476, %v4475
  %v4508 = vpack.c.bf16 %v4478, %v4477
  %v4509 = vpack.c.bf16 %v4480, %v4479
  %v4510 = vpack.c.bf16 %v4482, %v4481
  %v4511 = vpack.c.bf16 %v4484, %v4483
  %v4512 = vpack.c.bf16 %v4486, %v4485
  %v4513 = vpack.c.bf16 %v4488, %v4487
  %v4514 = vpack.c.bf16 %v4490, %v4489
  %v4515 = vpack.c.bf16 %v4492, %v4491
  %v4516 = vpack.c.bf16 %v4494, %v4493
  %v4517 = vpack.c.bf16 %v4496, %v4495
  %v4518 = vpack.c.bf16 %v4498, %v4497
  %v4519 = vld [vmem:[%s3] sm:$0xf]
  %v4520 = vld [vmem:[%s3 + $0x4] sm:$0xf]
  %v4521 = vld [vmem:[%s3 + $0x8] sm:$0xf]
  %v4522 = vld [vmem:[%s3 + $0xc] sm:$0xf]
  %v4523 = vld [vmem:[%s3 + $0x10] sm:$0xf]
  %v4524 = vld [vmem:[%s3 + $0x14] sm:$0xf]
  %v4525 = vld [vmem:[%s3 + $0x18] sm:$0xf]
  %v4526 = vld [vmem:[%s3 + $0x1c] sm:$0xf]
  %v4527 = vld [vmem:[%s3 + $0x20] sm:$0xf]
  %v4528 = vld [vmem:[%s4] sm:$0x1]
  %v4530 = vlaneseq
  %v4531 = vshrl.u32 %v4530, 7
  %v4532 = vsub.s32 0, %v4531
  %v4533 = vrot.slane %v4528, %v4532
  %v4544 = vunpack.c.l.b16 %v4519
  %v4545 = vunpack.c.l.b16 %v4520
  %v4546 = vunpack.c.l.b16 %v4521
  %v4547 = vunpack.c.l.b16 %v4522
  %v4548 = vunpack.c.l.b16 %v4523
  %v4549 = vunpack.c.l.b16 %v4524
  %v4550 = vunpack.c.l.b16 %v4525
  %v4551 = vunpack.c.l.b16 %v4526
  %v4552 = vunpack.c.l.b16 %v4527
  %v4553 = vpack.c.b16 %v4545, %v4544
  %v4554 = vpack.c.b16 %v4547, %v4546
  %v4555 = vpack.c.b16 %v4549, %v4548
  %v4556 = vpack.c.b16 %v4551, %v4550
  %v4557 = vpack.c.b16 %v4552, %v4552
  %vm4562 = vcmask 588800
  %v4564 = vsel %vm4562, %v4499, 0
  %v4567 = vsel %vm4562, %v4500, 0
  %v4570 = vsel %vm4562, %v4501, 0
  %v4573 = vsel %vm4562, %v4502, 0
  %v4576 = vsel %vm4562, %v4503, 0
  %v4579 = vsel %vm4562, %v4504, 0
  %v4582 = vsel %vm4562, %v4505, 0
  %v4585 = vsel %vm4562, %v4506, 0
  %v4588 = vsel %vm4562, %v4507, 0
  %v4591 = vsel %vm4562, %v4508, 0
  %v4594 = vsel %vm4562, %v4509, 0
  %v4597 = vsel %vm4562, %v4510, 0
  %v4600 = vsel %vm4562, %v4511, 0
  %v4603 = vsel %vm4562, %v4512, 0
  %v4606 = vsel %vm4562, %v4513, 0
  %v4609 = vsel %vm4562, %v4514, 0
  %v4612 = vsel %vm4562, %v4515, 0
  %v4615 = vsel %vm4562, %v4516, 0
  %v4618 = vsel %vm4562, %v4517, 0
  %v4621 = vsel %vm4562, %v4518, 0
  %vm4623 = vcmask 1043456
  %v4625 = vsel %vm4623, %v4557, 0
  %4627 = vmatprep.subr.bf16.mxu0 0
  %4628 = vmatpush1.bf16.msra.mxu0 0
  %4629 = vmatprep.subr.bf16.mxu0 0
  %4630 = vmatpush1.bf16.msra.mxu0 0
  %4631 = vmatprep.subr.bf16.mxu0 0
  %4632 = vmatpush1.bf16.msra.mxu0 0
  %4633 = vmatprep.subr.bf16.mxu0 0
  %4634 = vmatpush1.bf16.msra.mxu0 %v4625
  %4635 = vmatprep.subr.bf16.mxu0 0
  %4636 = vmatpush1.bf16.msra.mxu0 %v4556
  %4637 = vmatprep.subr.bf16.mxu0 0
  %4638 = vmatpush1.bf16.msra.mxu0 %v4555
  %4639 = vmatprep.subr.bf16.mxu0 0
  %4640 = vmatpush1.bf16.msra.mxu0 %v4554
  %4641 = vmatprep.subr.bf16.mxu0 0
  %4642 = vmatpush1.bf16.msra.mxu0 %v4553
  %4643 = vmatprep.subr.bf16.mxu0 0
  %4644 = vmatpush2.bf16.msra.mxu0 0
  %4645 = vmatprep.subr.bf16.mxu0 0
  %4646 = vmatpush2.bf16.msra.mxu0 0
  %4647 = vmatprep.subr.bf16.mxu0 0
  %4648 = vmatpush2.bf16.msra.mxu0 0
  %4649 = vmatprep.subr.bf16.mxu0 0
  %4650 = vmatpush2.bf16.msra.mxu0 0
  %4651 = vmatprep.subr.bf16.mxu0 0
  %4652 = vmatpush2.bf16.msra.mxu0 0
  %4653 = vmatprep.subr.bf16.mxu0 0
  %4654 = vmatpush2.bf16.msra.mxu0 0
  %4655 = vmatprep.subr.bf16.mxu0 0
  %4656 = vmatpush2.bf16.msra.mxu0 0
  %4657 = vmatprep.subr.bf16.mxu0 0
  %4658 = vmatpush2.bf16.msra.mxu0 0
  %4659 = vmatprep.mubr.bf16.mxu0 0
  %4660 = vmatmul.mubr.bf16.gmra.mxu0 %v4564
  %v4661 = vpop.f32.mrf.mxu0
  %v4662 = vadd.f32 %v4533, %v4661
  %v4663 = vpop.f32.mrf.mxu0
  %v4664 = vpop.f32.mrf.mxu0
  %v4665 = vadd.f32 %v4533, %v4664
  %v4666 = vpop.f32.mrf.mxu0
  %4667 = vmatprep.mubr.bf16.mxu0 0
  %4668 = vmatmul.mubr.bf16.gmra.mxu0 %v4567
  %v4669 = vpop.f32.mrf.mxu0
  %v4670 = vadd.f32 %v4533, %v4669
  %v4671 = vpop.f32.mrf.mxu0
  %v4672 = vpop.f32.mrf.mxu0
  %v4673 = vadd.f32 %v4533, %v4672
  %v4674 = vpop.f32.mrf.mxu0
  %4675 = vmatprep.mubr.bf16.mxu0 0
  %4676 = vmatmul.mubr.bf16.gmra.mxu0 %v4570
  %v4677 = vpop.f32.mrf.mxu0
  %v4678 = vadd.f32 %v4533, %v4677
  %v4679 = vpop.f32.mrf.mxu0
  %v4680 = vpop.f32.mrf.mxu0
  %v4681 = vpop.f32.mrf.mxu0
  %4682 = vmatprep.mubr.bf16.mxu0 0
  %4683 = vmatmul.mubr.bf16.gmra.mxu0 %v4573
  %v4684 = vpop.f32.mrf.mxu0
  %v4685 = vpop.f32.mrf.mxu0
  %v4686 = vpop.f32.mrf.mxu0
  %v4687 = vpop.f32.mrf.mxu0
  %4688 = vmatprep.mubr.bf16.mxu0 0
  %4689 = vmatmul.mubr.bf16.gmra.mxu0 %v4576
  %v4690 = vpop.f32.mrf.mxu0
  %v4691 = vadd.f32 %v4533, %v4690
  %v4692 = vpop.f32.mrf.mxu0
  %v4693 = vpop.f32.mrf.mxu0
  %v4694 = vadd.f32 %v4533, %v4693
  %v4695 = vpop.f32.mrf.mxu0
  %4696 = vmatprep.mubr.bf16.mxu0 0
  %4697 = vmatmul.mubr.bf16.gmra.mxu0 %v4579
  %v4698 = vpop.f32.mrf.mxu0
  %v4699 = vadd.f32 %v4533, %v4698
  %v4700 = vpop.f32.mrf.mxu0
  %v4701 = vpop.f32.mrf.mxu0
  %v4702 = vadd.f32 %v4533, %v4701
  %v4703 = vpop.f32.mrf.mxu0
  %4704 = vmatprep.mubr.bf16.mxu0 0
  %4705 = vmatmul.mubr.bf16.gmra.mxu0 %v4582
  %v4706 = vpop.f32.mrf.mxu0
  %v4707 = vadd.f32 %v4533, %v4706
  %v4708 = vpop.f32.mrf.mxu0
  %v4709 = vpop.f32.mrf.mxu0
  %v4710 = vpop.f32.mrf.mxu0
  %4711 = vmatprep.mubr.bf16.mxu0 0
  %4712 = vmatmul.mubr.bf16.gmra.mxu0 %v4585
  %v4713 = vpop.f32.mrf.mxu0
  %v4714 = vpop.f32.mrf.mxu0
  %v4715 = vpop.f32.mrf.mxu0
  %v4716 = vpop.f32.mrf.mxu0
  %4717 = vmatprep.mubr.bf16.mxu0 0
  %4718 = vmatmul.mubr.bf16.gmra.mxu0 %v4588
  %v4719 = vpop.f32.mrf.mxu0
  %v4720 = vadd.f32 %v4533, %v4719
  %v4721 = vpop.f32.mrf.mxu0
  %v4722 = vpop.f32.mrf.mxu0
  %v4723 = vadd.f32 %v4533, %v4722
  %v4724 = vpop.f32.mrf.mxu0
  %4725 = vmatprep.mubr.bf16.mxu0 0
  %4726 = vmatmul.mubr.bf16.gmra.mxu0 %v4591
  %v4727 = vpop.f32.mrf.mxu0
  %v4728 = vadd.f32 %v4533, %v4727
  %v4729 = vpop.f32.mrf.mxu0
  %v4730 = vpop.f32.mrf.mxu0
  %v4731 = vadd.f32 %v4533, %v4730
  %v4732 = vpop.f32.mrf.mxu0
  %4733 = vmatprep.mubr.bf16.mxu0 0
  %4734 = vmatmul.mubr.bf16.gmra.mxu0 %v4594
  %v4735 = vpop.f32.mrf.mxu0
  %v4736 = vadd.f32 %v4533, %v4735
  %v4737 = vpop.f32.mrf.mxu0
  %v4738 = vpop.f32.mrf.mxu0
  %v4739 = vpop.f32.mrf.mxu0
  %4740 = vmatprep.mubr.bf16.mxu0 0
  %4741 = vmatmul.mubr.bf16.gmra.mxu0 %v4597
  %v4742 = vpop.f32.mrf.mxu0
  %v4743 = vpop.f32.mrf.mxu0
  %v4744 = vpop.f32.mrf.mxu0
  %v4745 = vpop.f32.mrf.mxu0
  %4746 = vmatprep.mubr.bf16.mxu0 0
  %4747 = vmatmul.mubr.bf16.gmra.mxu0 %v4600
  %v4748 = vpop.f32.mrf.mxu0
  %v4749 = vadd.f32 %v4533, %v4748
  %v4750 = vpop.f32.mrf.mxu0
  %v4751 = vpop.f32.mrf.mxu0
  %v4752 = vadd.f32 %v4533, %v4751
  %v4753 = vpop.f32.mrf.mxu0
  %4754 = vmatprep.mubr.bf16.mxu0 0
  %4755 = vmatmul.mubr.bf16.gmra.mxu0 %v4603
  %v4756 = vpop.f32.mrf.mxu0
  %v4757 = vadd.f32 %v4533, %v4756
  %v4758 = vpop.f32.mrf.mxu0
  %v4759 = vpop.f32.mrf.mxu0
  %v4760 = vadd.f32 %v4533, %v4759
  %v4761 = vpop.f32.mrf.mxu0
  %4762 = vmatprep.mubr.bf16.mxu0 0
  %4763 = vmatmul.mubr.bf16.gmra.mxu0 %v4606
  %v4764 = vpop.f32.mrf.mxu0
  %v4765 = vadd.f32 %v4533, %v4764
  %v4766 = vpop.f32.mrf.mxu0
  %v4767 = vpop.f32.mrf.mxu0
  %v4768 = vpop.f32.mrf.mxu0
  %4769 = vmatprep.mubr.bf16.mxu0 0
  %4770 = vmatmul.mubr.bf16.gmra.mxu0 %v4609
  %v4771 = vpop.f32.mrf.mxu0
  %v4772 = vpop.f32.mrf.mxu0
  %v4773 = vpop.f32.mrf.mxu0
  %v4774 = vpop.f32.mrf.mxu0
  %4775 = vmatprep.mubr.bf16.mxu0 0
  %4776 = vmatmul.mubr.bf16.gmra.mxu0 %v4612
  %v4777 = vpop.f32.mrf.mxu0
  %v4778 = vadd.f32 %v4533, %v4777
  %v4779 = vpop.f32.mrf.mxu0
  %v4780 = vpop.f32.mrf.mxu0
  %v4781 = vadd.f32 %v4533, %v4780
  %v4782 = vpop.f32.mrf.mxu0
  %4783 = vmatprep.mubr.bf16.mxu0 0
  %4784 = vmatmul.mubr.bf16.gmra.mxu0 %v4615
  %v4785 = vpop.f32.mrf.mxu0
  %v4786 = vadd.f32 %v4533, %v4785
  %v4787 = vpop.f32.mrf.mxu0
  %v4788 = vpop.f32.mrf.mxu0
  %v4789 = vadd.f32 %v4533, %v4788
  %v4790 = vpop.f32.mrf.mxu0
  %4791 = vmatprep.mubr.bf16.mxu0 0
  %4792 = vmatmul.mubr.bf16.gmra.mxu0 %v4618
  %v4793 = vpop.f32.mrf.mxu0
  %v4794 = vadd.f32 %v4533, %v4793
  %v4795 = vpop.f32.mrf.mxu0
  %v4796 = vpop.f32.mrf.mxu0
  %v4797 = vpop.f32.mrf.mxu0
  %4798 = vmatprep.mubr.bf16.mxu0 0
  %4799 = vmatmul.mubr.bf16.gmra.mxu0 %v4621
  %v4800 = vpop.f32.mrf.mxu0
  %v4801 = vpop.f32.mrf.mxu0
  %v4802 = vpop.f32.mrf.mxu0
  %v4803 = vpop.f32.mrf.mxu0
  %4804 = vdwg.mxu0
  %v4805 = vmax.f32 %v4662, 0.0
  %v4806 = vmax.f32 %v4665, 0.0
  %v4807 = vmax.f32 %v4670, 0.0
  %v4808 = vmax.f32 %v4673, 0.0
  %v4809 = vmax.f32 %v4678, 0.0
  %v4810 = vmax.f32 %v4691, 0.0
  %v4811 = vmax.f32 %v4694, 0.0
  %v4812 = vmax.f32 %v4699, 0.0
  %v4813 = vmax.f32 %v4702, 0.0
  %v4814 = vmax.f32 %v4707, 0.0
  %v4815 = vmax.f32 %v4720, 0.0
  %v4816 = vmax.f32 %v4723, 0.0
  %v4817 = vmax.f32 %v4728, 0.0
  %v4818 = vmax.f32 %v4731, 0.0
  %v4819 = vmax.f32 %v4736, 0.0
  %v4820 = vmax.f32 %v4749, 0.0
  %v4821 = vmax.f32 %v4752, 0.0
  %v4822 = vmax.f32 %v4757, 0.0
  %v4823 = vmax.f32 %v4760, 0.0
  %v4824 = vmax.f32 %v4765, 0.0
  %v4825 = vmax.f32 %v4778, 0.0
  %v4826 = vmax.f32 %v4781, 0.0
  %v4827 = vmax.f32 %v4786, 0.0
  %v4828 = vmax.f32 %v4789, 0.0
  %v4829 = vmax.f32 %v4794, 0.0
  %4831 = vrot.lane.b32.xlu0 %v4806, 8
  %v4832 = vpop.permute.xlu0 %4831
  %4835 = vrot.lane.b32.xlu0 %v4807, 16
  %v4836 = vpop.permute.xlu0 %4835
  %4839 = vrot.lane.b32.xlu0 %v4808, 24
  %v4840 = vpop.permute.xlu0 %4839
  %4843 = vrot.lane.b32.xlu0 %v4809, 32
  %v4844 = vpop.permute.xlu0 %4843
  %4847 = vrot.lane.b32.xlu0 %v4810, 40
  %v4848 = vpop.permute.xlu0 %4847
  %4851 = vrot.lane.b32.xlu0 %v4811, 48
  %v4852 = vpop.permute.xlu0 %4851
  %4855 = vrot.lane.b32.xlu0 %v4812, 56
  %v4856 = vpop.permute.xlu0 %4855
  %4859 = vrot.lane.b32.xlu0 %v4813, 64
  %v4860 = vpop.permute.xlu0 %4859
  %4863 = vrot.lane.b32.xlu0 %v4814, 72
  %v4864 = vpop.permute.xlu0 %4863
  %4867 = vrot.lane.b32.xlu0 %v4815, 80
  %v4868 = vpop.permute.xlu0 %4867
  %4871 = vrot.lane.b32.xlu0 %v4816, 88
  %v4872 = vpop.permute.xlu0 %4871
  %4875 = vrot.lane.b32.xlu0 %v4817, 96
  %v4876 = vpop.permute.xlu0 %4875
  %4879 = vrot.lane.b32.xlu0 %v4818, 104
  %v4880 = vpop.permute.xlu0 %4879
  %4883 = vrot.lane.b32.xlu0 %v4819, 112
  %v4884 = vpop.permute.xlu0 %4883
  %4887 = vrot.lane.b32.xlu0 %v4820, 120
  %v4888 = vpop.permute.xlu0 %4887
  %v4890 = vsel %vm2202, %v4805, %v4832
  %v4891 = vsel %vm2332, %v4890, %v4836
  %v4892 = vsel %vm2462, %v4891, %v4840
  %v4893 = vsel %vm2592, %v4892, %v4844
  %v4894 = vsel %vm4335, %v4893, %v4848
  %v4895 = vsel %vm4376, %v4894, %v4852
  %v4896 = vsel %vm4417, %v4895, %v4856
  %v4897 = vsel %vm4458, %v4896, %v4860
  %v4898 = vsel %vm4562, %v4897, %v4864
  %vm4899 = vcmask 654336
  %v4900 = vsel %vm4899, %v4898, %v4868
  %vm4901 = vcmask 719872
  %v4902 = vsel %vm4901, %v4900, %v4872
  %vm4903 = vcmask 785408
  %v4904 = vsel %vm4903, %v4902, %v4876
  %vm4905 = vcmask 850944
  %v4906 = vsel %vm4905, %v4904, %v4880
  %vm4907 = vcmask 916480
  %v4908 = vsel %vm4907, %v4906, %v4884
  %vm4909 = vcmask 982016
  %v4910 = vsel %vm4909, %v4908, %v4888
  %4912 = vrot.lane.b32.xlu0 %v4822, 8
  %v4913 = vpop.permute.xlu0 %4912
  %4916 = vrot.lane.b32.xlu0 %v4823, 16
  %v4917 = vpop.permute.xlu0 %4916
  %4920 = vrot.lane.b32.xlu0 %v4824, 24
  %v4921 = vpop.permute.xlu0 %4920
  %4924 = vrot.lane.b32.xlu0 %v4825, 32
  %v4925 = vpop.permute.xlu0 %4924
  %4928 = vrot.lane.b32.xlu0 %v4826, 40
  %v4929 = vpop.permute.xlu0 %4928
  %4932 = vrot.lane.b32.xlu0 %v4827, 48
  %v4933 = vpop.permute.xlu0 %4932
  %4936 = vrot.lane.b32.xlu0 %v4828, 56
  %v4937 = vpop.permute.xlu0 %4936
  %4940 = vrot.lane.b32.xlu0 %v4829, 64
  %v4941 = vpop.permute.xlu0 %4940
  %v4943 = vsel %vm2202, %v4821, %v4913
  %v4944 = vsel %vm2332, %v4943, %v4917
  %v4945 = vsel %vm2462, %v4944, %v4921
  %v4946 = vsel %vm2592, %v4945, %v4925
  %v4947 = vsel %vm4335, %v4946, %v4929
  %v4948 = vsel %vm4376, %v4947, %v4933
  %v4949 = vsel %vm4417, %v4948, %v4937
  %v4950 = vsel %vm4458, %v4949, %v4941
  %v4951 = vpack.c.bf16 %v4910, %v4910
  %v4952 = vpack.c.bf16 %v4950, %v4950
  %v4953 = vld [vmem:[%s5] sm:$0xf]
  %v4954 = vld [vmem:[%s5 + $0x4] sm:$0xf]
  %v4955 = vld [vmem:[%s5 + $0x8] sm:$0xf]
  %v4956 = vld [vmem:[%s5 + $0xc] sm:$0xf]
  %v4957 = vld [vmem:[%s5 + $0x10] sm:$0xf]
  %v4958 = vld [vmem:[%s5 + $0x14] sm:$0xf]
  %v4959 = vld [vmem:[%s5 + $0x18] sm:$0xf]
  %v4960 = vld [vmem:[%s5 + $0x1c] sm:$0xf]
  %v4961 = vld [vmem:[%s5 + $0x20] sm:$0xf]
  %v4962 = vld [vmem:[%s5 + $0x24] sm:$0xf]
  %v4963 = vld [vmem:[%s5 + $0x28] sm:$0xf]
  %v4964 = vld [vmem:[%s5 + $0x2c] sm:$0xf]
  %v4965 = vld [vmem:[%s5 + $0x30] sm:$0xf]
  %v4966 = vld [vmem:[%s5 + $0x34] sm:$0xf]
  %v4967 = vld [vmem:[%s5 + $0x38] sm:$0xf]
  %v4968 = vld [vmem:[%s5 + $0x3c] sm:$0xf]
  %v4969 = vld [vmem:[%s5 + $0x40] sm:$0xf]
  %v4970 = vld [vmem:[%s5 + $0x44] sm:$0xf]
  %v4971 = vld [vmem:[%s5 + $0x48] sm:$0xf]
  %v4972 = vld [vmem:[%s5 + $0x4c] sm:$0xf]
  %v4973 = vld [vmem:[%s5 + $0x50] sm:$0xf]
  %v4974 = vld [vmem:[%s5 + $0x54] sm:$0xf]
  %v4975 = vld [vmem:[%s5 + $0x58] sm:$0xf]
  %v4976 = vld [vmem:[%s5 + $0x5c] sm:$0xf]
  %v4977 = vld [vmem:[%s5 + $0x60] sm:$0xf]
  %v4978 = vld [vmem:[%s6] sm:$0x1]
  %v4980 = vlaneseq
  %v4981 = vshrl.u32 %v4980, 7
  %v4982 = vsub.s32 0, %v4981
  %v4983 = vrot.slane %v4978, %v4982
  %v5010 = vunpack.c.l.b16 %v4953
  %v5011 = vunpack.c.l.b16 %v4954
  %v5012 = vunpack.c.l.b16 %v4955
  %v5013 = vunpack.c.l.b16 %v4956
  %v5014 = vunpack.c.l.b16 %v4957
  %v5015 = vunpack.c.l.b16 %v4958
  %v5016 = vunpack.c.l.b16 %v4959
  %v5017 = vunpack.c.l.b16 %v4960
  %v5018 = vunpack.c.l.b16 %v4961
  %v5019 = vunpack.c.l.b16 %v4962
  %v5020 = vunpack.c.l.b16 %v4963
  %v5021 = vunpack.c.l.b16 %v4964
  %v5022 = vunpack.c.l.b16 %v4965
  %v5023 = vunpack.c.l.b16 %v4966
  %v5024 = vunpack.c.l.b16 %v4967
  %v5025 = vunpack.c.l.b16 %v4968
  %v5026 = vunpack.c.l.b16 %v4969
  %v5027 = vunpack.c.l.b16 %v4970
  %v5028 = vunpack.c.l.b16 %v4971
  %v5029 = vunpack.c.l.b16 %v4972
  %v5030 = vunpack.c.l.b16 %v4973
  %v5031 = vunpack.c.l.b16 %v4974
  %v5032 = vunpack.c.l.b16 %v4975
  %v5033 = vunpack.c.l.b16 %v4976
  %v5034 = vunpack.c.l.b16 %v4977
  %v5035 = vpack.c.b16 %v5011, %v5010
  %v5036 = vpack.c.b16 %v5013, %v5012
  %v5037 = vpack.c.b16 %v5015, %v5014
  %v5038 = vpack.c.b16 %v5017, %v5016
  %v5039 = vpack.c.b16 %v5019, %v5018
  %v5040 = vpack.c.b16 %v5021, %v5020
  %v5041 = vpack.c.b16 %v5023, %v5022
  %v5042 = vpack.c.b16 %v5025, %v5024
  %v5043 = vpack.c.b16 %v5027, %v5026
  %v5044 = vpack.c.b16 %v5029, %v5028
  %v5045 = vpack.c.b16 %v5031, %v5030
  %v5046 = vpack.c.b16 %v5033, %v5032
  %v5047 = vpack.c.b16 %v5034, %v5034
  %v5061 = vsel %vm4562, %v4952, 0
  %v5064 = vsel %vm4623, %v5047, 0
  %5066 = vmatprep.subr.bf16.mxu0 0
  %5067 = vmatpush1.bf16.msra.mxu0 %v5042
  %5068 = vmatprep.subr.bf16.mxu0 0
  %5069 = vmatpush1.bf16.msra.mxu0 %v5041
  %5070 = vmatprep.subr.bf16.mxu0 0
  %5071 = vmatpush1.bf16.msra.mxu0 %v5040
  %5072 = vmatprep.subr.bf16.mxu0 0
  %5073 = vmatpush1.bf16.msra.mxu0 %v5039
  %5074 = vmatprep.subr.bf16.mxu0 0
  %5075 = vmatpush1.bf16.msra.mxu0 %v5038
  %5076 = vmatprep.subr.bf16.mxu0 0
  %5077 = vmatpush1.bf16.msra.mxu0 %v5037
  %5078 = vmatprep.subr.bf16.mxu0 0
  %5079 = vmatpush1.bf16.msra.mxu0 %v5036
  %5080 = vmatprep.subr.bf16.mxu0 0
  %5081 = vmatpush1.bf16.msra.mxu0 %v5035
  %5082 = vmatprep.subr.bf16.mxu0 0
  %5083 = vmatpush2.bf16.msra.mxu0 0
  %5084 = vmatprep.subr.bf16.mxu0 0
  %5085 = vmatpush2.bf16.msra.mxu0 0
  %5086 = vmatprep.subr.bf16.mxu0 0
  %5087 = vmatpush2.bf16.msra.mxu0 0
  %5088 = vmatprep.subr.bf16.mxu0 0
  %5089 = vmatpush2.bf16.msra.mxu0 %v5064
  %5090 = vmatprep.subr.bf16.mxu0 0
  %5091 = vmatpush2.bf16.msra.mxu0 %v5046
  %5092 = vmatprep.subr.bf16.mxu0 0
  %5093 = vmatpush2.bf16.msra.mxu0 %v5045
  %5094 = vmatprep.subr.bf16.mxu0 0
  %5095 = vmatpush2.bf16.msra.mxu0 %v5044
  %5096 = vmatprep.subr.bf16.mxu0 0
  %5097 = vmatpush2.bf16.msra.mxu0 %v5043
  %5098 = vmatprep.mubr.bf16.mxu0 %v5061
  %5099 = vmatmul.mubr.bf16.gmra.mxu0 %v4951
  %v5100 = vpop.f32.mrf.mxu0
  %v5101 = vadd.f32 %v4983, %v5100
  %v5102 = vpop.f32.mrf.mxu0
  %v5103 = vpop.f32.mrf.mxu0
  %v5104 = vpop.f32.mrf.mxu0
  %5105 = vdwg.mxu0
  %v5106 = vsel %vm2592, %v5101, 0.0
  %5107 = vadd.xlane.f32.xlu0 %v5106
  %v5108 = vpop.xlane.xlu0 %5107
  %v5109 = vrcp.pop 32.0
  %v5110 = vmul.f32 %v5108, %v5109
  %v5111 = vsub.f32 %v5101, %v5110
  %v5112 = vmul.f32 %v5111, %v5111
  %v5113 = vsel %vm2592, %v5112, 0.0
  %5114 = vadd.xlane.f32.xlu0 %v5113
  %v5115 = vpop.xlane.xlu0 %5114
  %v5116 = vmul.f32 %v5115, %v5109
  %v5117 = vadd.f32 %v5116, 1e-05
  %v5118 = vrsqrt.pop %v5117
  %v5119 = vmul.f32 %v5111, %v5118
  %v5120 = vld [vmem:[%s7] sm:$0x1]
  %v5122 = vlaneseq
  %v5123 = vshrl.u32 %v5122, 7
  %v5124 = vsub.s32 0, %v5123
  %v5125 = vrot.slane %v5120, %v5124
  %v5127 = vmul.f32 %v5119, %v5125
  %v5128 = vld [vmem:[%s8] sm:$0x1]
  %v5130 = vlaneseq
  %v5131 = vshrl.u32 %v5130, 7
  %v5132 = vsub.s32 0, %v5131
  %v5133 = vrot.slane %v5128, %v5132
  %v5135 = vadd.f32 %v5127, %v5133
  %v5136 = vtanh.pop %v5135
  %v5137 = vpack.c.bf16 %v5136, %v5136
  %v5138 = vld [vmem:[%s9] sm:$0xff]
  %v5139 = vld [vmem:[%s9 + $0x8] sm:$0xff]
  %v5140 = vld [vmem:[%s9 + $0x10] sm:$0xff]
  %v5141 = vld [vmem:[%s9 + $0x18] sm:$0xff]
  %v5142 = vld [vmem:[%s10] sm:$0x3]
  %v5144 = vlaneseq
  %v5145 = vshrl.u32 %v5144, 7
  %v5146 = vsub.s32 0, %v5145
  %v5147 = vrot.slane %v5142, %v5146
  %v5148 = vlaneseq
  %v5149 = vshrl.u32 %v5148, 7
  %v5150 = vsub.s32 1, %v5149
  %v5151 = vrot.slane %v5142, %v5150
  %v5158 = vunpack.c.l.b16 %v5138
  %v5159 = vunpack.c.h.b16 %v5138
  %v5160 = vunpack.c.l.b16 %v5139
  %v5161 = vunpack.c.h.b16 %v5139
  %v5162 = vunpack.c.l.b16 %v5140
  %v5163 = vunpack.c.h.b16 %v5140
  %v5164 = vunpack.c.l.b16 %v5141
  %v5165 = vunpack.c.h.b16 %v5141
  %v5166 = vpack.c.b16 %v5160, %v5158
  %v5167 = vpack.c.b16 %v5161, %v5159
  %v5168 = vpack.c.b16 %v5164, %v5162
  %v5169 = vpack.c.b16 %v5165, %v5163
  %v5175 = vsel %vm2592, %v5137, 0
  %5177 = vmatprep.subr.bf16.mxu0 0
  %5178 = vmatpush1.bf16.msra.mxu0 0
  %5179 = vmatprep.subr.bf16.mxu0 0
  %5180 = vmatpush1.bf16.msra.mxu0 0
  %5181 = vmatprep.subr.bf16.mxu0 0
  %5182 = vmatpush1.bf16.msra.mxu0 0
  %5183 = vmatprep.subr.bf16.mxu0 0
  %5184 = vmatpush1.bf16.msra.mxu0 0
  %5185 = vmatprep.subr.bf16.mxu0 0
  %5186 = vmatpush1.bf16.msra.mxu0 0
  %5187 = vmatprep.subr.bf16.mxu0 0
  %5188 = vmatpush1.bf16.msra.mxu0 0
  %5189 = vmatprep.subr.bf16.mxu0 %v5169
  %5190 = vmatpush1.bf16.msra.mxu0 %v5168
  %5191 = vmatprep.subr.bf16.mxu0 %v5167
  %5192 = vmatpush1.bf16.msra.mxu0 %v5166
  %5193 = vmatprep.subr.bf16.mxu0 0
  %5194 = vmatpush2.bf16.msra.mxu0 0
  %5195 = vmatprep.subr.bf16.mxu0 0
  %5196 = vmatpush2.bf16.msra.mxu0 0
  %5197 = vmatprep.subr.bf16.mxu0 0
  %5198 = vmatpush2.bf16.msra.mxu0 0
  %5199 = vmatprep.subr.bf16.mxu0 0
  %5200 = vmatpush2.bf16.msra.mxu0 0
  %5201 = vmatprep.subr.bf16.mxu0 0
  %5202 = vmatpush2.bf16.msra.mxu0 0
  %5203 = vmatprep.subr.bf16.mxu0 0
  %5204 = vmatpush2.bf16.msra.mxu0 0
  %5205 = vmatprep.subr.bf16.mxu0 0
  %5206 = vmatpush2.bf16.msra.mxu0 0
  %5207 = vmatprep.subr.bf16.mxu0 0
  %5208 = vmatpush2.bf16.msra.mxu0 0
  %5209 = vmatprep.mubr.bf16.mxu0 0
  %5210 = vmatmul.mubr.bf16.gmra.mxu0 %v5175
  %v5211 = vpop.f32.mrf.mxu0
  %v5212 = vadd.f32 %v5147, %v5211
  %v5213 = vpop.f32.mrf.mxu0
  %v5214 = vadd.f32 %v5151, %v5213
  %v5215 = vpop.f32.mrf.mxu0
  %v5216 = vpop.f32.mrf.mxu0
  %5217 = vdwg.mxu0
  %v5218 = vlaneseq
  %v5219 = vshrl.u32 %v5218, 7
  %vm5220 = vcmp.lt.s32.totalorder %v5219, 2
  %v5221 = vsel %vm5220, 1, 0
  %v5222 = vcvt.s32.f32 %v5221
  %v5223 = vmul.f32 %v5212, %v5222
  %v5224 = vmul.f32 %v5214, %v5222
  %v5225 = vrot.slane %v5223, 4
  %v5226 = vadd.f32 %v5223, %v5225
  %v5227 = vrot.slane %v5226, 2
  %v5228 = vadd.f32 %v5226, %v5227
  %v5229 = vrot.slane %v5228, 1
  %v5230 = vadd.f32 %v5228, %v5229
  %v5231 = vrot.slane %v5224, 4
  %v5232 = vadd.f32 %v5224, %v5231
  %v5233 = vrot.slane %v5232, 2
  %v5234 = vadd.f32 %v5232, %v5233
  %v5235 = vrot.slane %v5234, 1
  %v5236 = vadd.f32 %v5234, %v5235
  %v5237 = vmul.f32 %v5230, 0.5
  %v5238 = vmul.f32 %v5236, 0.5
  %v5239 = vsub.f32 %v5212, %v5237
  %v5240 = vsub.f32 %v5214, %v5238
  %v5241 = vmul.f32 %v5239, %v5222
  %v5242 = vmul.f32 %v5240, %v5222
  %v5243 = vmul.f32 %v5241, %v5241
  %v5244 = vmul.f32 %v5242, %v5242
  %v5245 = vrot.slane %v5243, 4
  %v5246 = vadd.f32 %v5243, %v5245
  %v5247 = vrot.slane %v5246, 2
  %v5248 = vadd.f32 %v5246, %v5247
  %v5249 = vrot.slane %v5248, 1
  %v5250 = vadd.f32 %v5248, %v5249
  %v5251 = vrot.slane %v5244, 4
  %v5252 = vadd.f32 %v5244, %v5251
  %v5253 = vrot.slane %v5252, 2
  %v5254 = vadd.f32 %v5252, %v5253
  %v5255 = vrot.slane %v5254, 1
  %v5256 = vadd.f32 %v5254, %v5255
  %v5257 = vmul.f32 %v5250, 0.5
  %v5258 = vmul.f32 %v5256, 0.5
  %v5259 = vadd.f32 %v5257, 1e-05
  %v5260 = vadd.f32 %v5258, 1e-05
  %v5261 = vrsqrt.pop %v5259
  %v5262 = vrsqrt.pop %v5260
  %v5263 = vmul.f32 %v5239, %v5261
  %v5264 = vmul.f32 %v5240, %v5262
  %v5265 = vld [vmem:[%s11] sm:$0x3]
  %v5267 = vlaneseq
  %v5268 = vshrl.u32 %v5267, 7
  %v5269 = vsub.s32 0, %v5268
  %v5270 = vrot.slane %v5265, %v5269
  %v5271 = vlaneseq
  %v5272 = vshrl.u32 %v5271, 7
  %v5273 = vsub.s32 1, %v5272
  %v5274 = vrot.slane %v5265, %v5273
  %v5277 = vmul.f32 %v5263, %v5270
  %v5278 = vmul.f32 %v5264, %v5274
  %v5279 = vld [vmem:[%s12] sm:$0x3]
  %v5281 = vlaneseq
  %v5282 = vshrl.u32 %v5281, 7
  %v5283 = vsub.s32 0, %v5282
  %v5284 = vrot.slane %v5279, %v5283
  %v5285 = vlaneseq
  %v5286 = vshrl.u32 %v5285, 7
  %v5287 = vsub.s32 1, %v5286
  %v5288 = vrot.slane %v5279, %v5287
  %v5291 = vadd.f32 %v5277, %v5284
  %v5292 = vadd.f32 %v5278, %v5288
  %v5293 = vmax.f32 %v5291, 0.0
  %v5294 = vmax.f32 %v5292, 0.0
  %v5295 = vpack.c.bf16 %v5293, %v5293
  %v5296 = vpack.c.bf16 %v5294, %v5294
  %v5297 = vld [vmem:[%s13] sm:$0xf]
  %v5298 = vld [vmem:[%s13 + $0x4] sm:$0xf]
  %v5299 = vld [vmem:[%s13 + $0x8] sm:$0xf]
  %v5300 = vld [vmem:[%s13 + $0xc] sm:$0xf]
  %v5301 = vld [vmem:[%s13 + $0x10] sm:$0xf]
  %v5302 = vld [vmem:[%s13 + $0x14] sm:$0xf]
  %v5303 = vld [vmem:[%s13 + $0x18] sm:$0xf]
  %v5304 = vld [vmem:[%s13 + $0x1c] sm:$0xf]
  %v5305 = vld [vmem:[%s13 + $0x20] sm:$0xf]
  %v5306 = vld [vmem:[%s13 + $0x24] sm:$0xf]
  %v5307 = vld [vmem:[%s13 + $0x28] sm:$0xf]
  %v5308 = vld [vmem:[%s13 + $0x2c] sm:$0xf]
  %v5309 = vld [vmem:[%s13 + $0x30] sm:$0xf]
  %v5310 = vld [vmem:[%s13 + $0x34] sm:$0xf]
  %v5311 = vld [vmem:[%s13 + $0x38] sm:$0xf]
  %v5312 = vld [vmem:[%s13 + $0x3c] sm:$0xf]
  %v5313 = vld [vmem:[%s13 + $0x40] sm:$0xf]
  %v5314 = vld [vmem:[%s13 + $0x44] sm:$0xf]
  %v5315 = vld [vmem:[%s13 + $0x48] sm:$0xf]
  %v5316 = vld [vmem:[%s13 + $0x4c] sm:$0xf]
  %v5317 = vld [vmem:[%s13 + $0x50] sm:$0xf]
  %v5318 = vld [vmem:[%s13 + $0x54] sm:$0xf]
  %v5319 = vld [vmem:[%s13 + $0x58] sm:$0xf]
  %v5320 = vld [vmem:[%s13 + $0x5c] sm:$0xf]
  %v5321 = vld [vmem:[%s13 + $0x60] sm:$0xf]
  %v5322 = vld [vmem:[%s13 + $0x64] sm:$0xf]
  %v5323 = vld [vmem:[%s13 + $0x68] sm:$0xf]
  %v5324 = vld [vmem:[%s13 + $0x6c] sm:$0xf]
  %v5325 = vld [vmem:[%s13 + $0x70] sm:$0xf]
  %v5326 = vld [vmem:[%s13 + $0x74] sm:$0xf]
  %v5327 = vld [vmem:[%s13 + $0x78] sm:$0xf]
  %v5328 = vld [vmem:[%s13 + $0x7c] sm:$0xf]
  %v5329 = vld [vmem:[%s14] sm:$0x1]
  %v5331 = vlaneseq
  %v5332 = vshrl.u32 %v5331, 7
  %v5333 = vsub.s32 0, %v5332
  %v5334 = vrot.slane %v5329, %v5333
  %v5368 = vunpack.c.l.b16 %v5297
  %v5369 = vunpack.c.l.b16 %v5298
  %v5370 = vunpack.c.l.b16 %v5299
  %v5371 = vunpack.c.l.b16 %v5300
  %v5372 = vunpack.c.l.b16 %v5301
  %v5373 = vunpack.c.l.b16 %v5302
  %v5374 = vunpack.c.l.b16 %v5303
  %v5375 = vunpack.c.l.b16 %v5304
  %v5376 = vunpack.c.l.b16 %v5305
  %v5377 = vunpack.c.l.b16 %v5306
  %v5378 = vunpack.c.l.b16 %v5307
  %v5379 = vunpack.c.l.b16 %v5308
  %v5380 = vunpack.c.l.b16 %v5309
  %v5381 = vunpack.c.l.b16 %v5310
  %v5382 = vunpack.c.l.b16 %v5311
  %v5383 = vunpack.c.l.b16 %v5312
  %v5384 = vunpack.c.l.b16 %v5313
  %v5385 = vunpack.c.l.b16 %v5314
  %v5386 = vunpack.c.l.b16 %v5315
  %v5387 = vunpack.c.l.b16 %v5316
  %v5388 = vunpack.c.l.b16 %v5317
  %v5389 = vunpack.c.l.b16 %v5318
  %v5390 = vunpack.c.l.b16 %v5319
  %v5391 = vunpack.c.l.b16 %v5320
  %v5392 = vunpack.c.l.b16 %v5321
  %v5393 = vunpack.c.l.b16 %v5322
  %v5394 = vunpack.c.l.b16 %v5323
  %v5395 = vunpack.c.l.b16 %v5324
  %v5396 = vunpack.c.l.b16 %v5325
  %v5397 = vunpack.c.l.b16 %v5326
  %v5398 = vunpack.c.l.b16 %v5327
  %v5399 = vunpack.c.l.b16 %v5328
  %v5400 = vpack.c.b16 %v5369, %v5368
  %v5401 = vpack.c.b16 %v5371, %v5370
  %v5402 = vpack.c.b16 %v5373, %v5372
  %v5403 = vpack.c.b16 %v5375, %v5374
  %v5404 = vpack.c.b16 %v5377, %v5376
  %v5405 = vpack.c.b16 %v5379, %v5378
  %v5406 = vpack.c.b16 %v5381, %v5380
  %v5407 = vpack.c.b16 %v5383, %v5382
  %v5408 = vpack.c.b16 %v5385, %v5384
  %v5409 = vpack.c.b16 %v5387, %v5386
  %v5410 = vpack.c.b16 %v5389, %v5388
  %v5411 = vpack.c.b16 %v5391, %v5390
  %v5412 = vpack.c.b16 %v5393, %v5392
  %v5413 = vpack.c.b16 %v5395, %v5394
  %v5414 = vpack.c.b16 %v5397, %v5396
  %v5415 = vpack.c.b16 %v5399, %v5398
  %5432 = vmatprep.subr.bf16.mxu0 0
  %5433 = vmatpush1.bf16.msra.mxu0 %v5407
  %5434 = vmatprep.subr.bf16.mxu0 0
  %5435 = vmatpush1.bf16.msra.mxu0 %v5406
  %5436 = vmatprep.subr.bf16.mxu0 0
  %5437 = vmatpush1.bf16.msra.mxu0 %v5405
  %5438 = vmatprep.subr.bf16.mxu0 0
  %5439 = vmatpush1.bf16.msra.mxu0 %v5404
  %5440 = vmatprep.subr.bf16.mxu0 0
  %5441 = vmatpush1.bf16.msra.mxu0 %v5403
  %5442 = vmatprep.subr.bf16.mxu0 0
  %5443 = vmatpush1.bf16.msra.mxu0 %v5402
  %5444 = vmatprep.subr.bf16.mxu0 0
  %5445 = vmatpush1.bf16.msra.mxu0 %v5401
  %5446 = vmatprep.subr.bf16.mxu0 0
  %5447 = vmatpush1.bf16.msra.mxu0 %v5400
  %5448 = vmatprep.subr.bf16.mxu0 0
  %5449 = vmatpush2.bf16.msra.mxu0 %v5415
  %5450 = vmatprep.subr.bf16.mxu0 0
  %5451 = vmatpush2.bf16.msra.mxu0 %v5414
  %5452 = vmatprep.subr.bf16.mxu0 0
  %5453 = vmatpush2.bf16.msra.mxu0 %v5413
  %5454 = vmatprep.subr.bf16.mxu0 0
  %5455 = vmatpush2.bf16.msra.mxu0 %v5412
  %5456 = vmatprep.subr.bf16.mxu0 0
  %5457 = vmatpush2.bf16.msra.mxu0 %v5411
  %5458 = vmatprep.subr.bf16.mxu0 0
  %5459 = vmatpush2.bf16.msra.mxu0 %v5410
  %5460 = vmatprep.subr.bf16.mxu0 0
  %5461 = vmatpush2.bf16.msra.mxu0 %v5409
  %5462 = vmatprep.subr.bf16.mxu0 0
  %5463 = vmatpush2.bf16.msra.mxu0 %v5408
  %5464 = vmatprep.mubr.bf16.mxu0 %v5296
  %5465 = vmatmul.mubr.bf16.gmra.mxu0 %v5295
  %v5466 = vpop.f32.mrf.mxu0
  %v5467 = vadd.f32 %v5334, %v5466
  %v5468 = vpop.f32.mrf.mxu0
  %v5469 = vpop.f32.mrf.mxu0
  %v5470 = vpop.f32.mrf.mxu0
  %5471 = vdwg.mxu0
  %5472 = vst [vmem:[%s15] sm:$0xff] %v5467
  // Predicated region
  $region62: #{curl_forward.1} parent=0 // pred_check
    _
  $region63: #{curl_forward.1} parent=0 // pred_check_branch
    %5474 = sbr.rel (0) target = $region65
  $region64: #{curl_forward.1} parent=0 // pred_region
    _
  $region65: #{curl_forward.1} parent=0 // pred_fallthru
    _
  // Predicated region
  $region66: #{curl_forward.1} parent=0 // pred_check
    _
  $region67: #{curl_forward.1} parent=0 // pred_check_branch
    %5476 = sbr.rel (0) target = $region69
  $region68: #{curl_forward.1} parent=0 // pred_region
    _
  $region69: #{curl_forward.1} parent=0 // pred_fallthru
    _

</llo_original>
